<compile_context>
chip_gen: v6e
topology: v6e:2x2x1
jax: 0.10.0
libtpu: 0.0.40
codegen_flags: <defaults>
</compile_context>

<pallas_src>
import functools

import jax
import jax.numpy as jnp
from jax.experimental import pallas as pl
from jax.experimental.pallas import tpu as pltpu


def _tile_bytes(shape, dtype):
    """Approximate VMEM bytes of a block after (8, 128) tile padding."""
    itemsize = jnp.dtype(dtype).itemsize
    if len(shape) == 1:
        lead, sub, lane = 1, 1, shape[0]
    else:
        lead = 1
        for d in shape[:-2]:
            lead *= d
        sub, lane = shape[-2], shape[-1]
    return lead * (-(-sub // 8) * 8) * (-(-lane // 128) * 128) * itemsize


def _rcab_kernel(xpad_ref, mask_ref, w1_ref, b1_ref, w2_ref, b2_ref,
                 wd1_ref, bd1_ref, wd2_ref, bd2_ref,
                 o_ref, acc_ref, h1pad_ref, *, H, W, K):
    """One batch element per grid step.  Layout: (C, flattened padded spatial)."""
    P = K // 2
    Wp = W + 2 * P
    S = H * Wp                     # extended output frame (keeps the W-pad columns)
    halo = P + P * Wp              # guard lanes + top/bottom pad rows (each side)
    C = o_ref.shape[0]

    mask = mask_ref[...]           # (1, S): 1.0 on true-image columns, 0.0 on W-pads

    def conv_into_acc(src_ref, w_ref):
        # sum over K*K taps of  w[kh,kw] (C,C) @ contiguous lane-slice patch (C,S)
        for t in range(K * K):
            kh, kw = divmod(t, K)
            off = kh * Wp + kw
            patch = src_ref[:, off:off + S]
            contrib = jnp.dot(w_ref[t], patch, preferred_element_type=jnp.float32)
            if t == 0:
                acc_ref[...] = contrib
            else:
                acc_ref[...] += contrib

    # ---- conv1 + bias + ReLU ------------------------------------------------
    conv_into_acc(xpad_ref, w1_ref)
    h1 = jnp.maximum(acc_ref[...] + b1_ref[...], 0.0)          # (C, S) f32

    # ---- stage padded h1 for conv2 -------------------------------------------
    # Tiny halo strips must read as zero padding; the interior pad columns are
    # re-zeroed through the mask in the value we store.
    zero_halo = jnp.zeros((C, halo), h1pad_ref.dtype)
    h1pad_ref[:, :halo] = zero_halo
    h1pad_ref[:, halo + S:] = zero_halo
    h1pad_ref[:, halo:halo + S] = (h1 * mask).astype(h1pad_ref.dtype)

    # ---- conv2 + bias ---------------------------------------------------------
    conv_into_acc(h1pad_ref, w2_ref)
    h2 = acc_ref[...] + b2_ref[...]                             # (C, S) f32

    # ---- channel attention (CALayer) -----------------------------------------
    pooled = jnp.sum(h2 * mask, axis=1, keepdims=True) / float(H * W)      # (C, 1)
    y1 = jnp.maximum(jnp.dot(wd1_ref[...], pooled,
                             preferred_element_type=jnp.float32) + bd1_ref[...], 0.0)
    scale = jax.nn.sigmoid(jnp.dot(wd2_ref[...], y1,
                                   preferred_element_type=jnp.float32) + bd2_ref[...])

    # ---- scale + residual, single lane-dense store ----------------------------
    x_res = xpad_ref[:, halo:halo + S].astype(jnp.float32)
    o_ref[...] = (h2 * scale + x_res).astype(o_ref.dtype)


def rcab_pallas(x, params, kernel_size=3, compute_dtype=jnp.float32):
    """x: (N, C, H, W) float32 (NCHW, like PyTorch). Returns (N, C, H, W)."""
    N, C, H, W = x.shape
    K = kernel_size
    P = K // 2
    Hp, Wp = H + 2 * P, W + 2 * P
    S = H * Wp
    Sp = Hp * Wp + 2 * P
    R = params['wd1'].shape[0]
    cdt = compute_dtype            # use jnp.bfloat16 on v6e/v7x; f32 accumulation kept

    # glue: "same" spatial pad, flatten (Hp, Wp) into the lane dim, add P guard lanes
    # so every conv tap is one contiguous lane slice of length H*Wp.
    xpad = jnp.pad(x, ((0, 0), (0, 0), (P, P), (P, P))).reshape(N, C, Hp * Wp)
    xpad = jnp.pad(xpad, ((0, 0), (0, 0), (P, P))).astype(cdt)             # (N, C, Sp)

    # valid-column mask of the extended (H, Wp) frame (1.0 on real pixels).
    col = jnp.arange(Wp)
    mask = jnp.tile(((col >= P) & (col < P + W)).astype(jnp.float32), H)[None, :]

    # conv weights OIHW -> per-tap matrices (K*K, C_out, C_in); biases as columns.
    w1 = jnp.transpose(params['w1'], (2, 3, 0, 1)).reshape(K * K, C, C).astype(cdt)
    w2 = jnp.transpose(params['w2'], (2, 3, 0, 1)).reshape(K * K, C, C).astype(cdt)
    b1 = params['b1'].reshape(C, 1).astype(jnp.float32)
    b2 = params['b2'].reshape(C, 1).astype(jnp.float32)
    wd1 = params['wd1'].astype(jnp.float32)                    # (R, C)
    bd1 = params['bd1'].reshape(R, 1).astype(jnp.float32)
    wd2 = params['wd2'].astype(jnp.float32)                    # (C, R)
    bd2 = params['bd2'].reshape(C, 1).astype(jnp.float32)

    def const(shape):
        return pl.BlockSpec(shape, lambda *_: (0,) * len(shape))

    # explicit scoped-VMEM budget from the double-buffered working set (+ headroom)
    ws = (2 * _tile_bytes((C, Sp), cdt)                 # input block (double-buffered)
          + 2 * _tile_bytes((C, S), x.dtype)            # output block (double-buffered)
          + 2 * (_tile_bytes((1, S), jnp.float32)
                 + 2 * _tile_bytes((K * K, C, C), cdt)
                 + 4 * _tile_bytes((C, 1), jnp.float32)
                 + _tile_bytes((R, C), jnp.float32)
                 + _tile_bytes((R, 1), jnp.float32)
                 + _tile_bytes((C, R), jnp.float32))
          + _tile_bytes((C, S), jnp.float32)            # conv accumulator scratch
          + _tile_bytes((C, Sp), cdt))                  # padded h1 staging scratch
    vmem_limit = int(min(max(4 * ws, 16 << 20), 64 << 20))

    kernel = functools.partial(_rcab_kernel, H=H, W=W, K=K)
    out_ext = pl.pallas_call(
        kernel,
        out_shape=jax.ShapeDtypeStruct((N, C, S), x.dtype),
        grid_spec=pltpu.PrefetchScalarGridSpec(
            num_scalar_prefetch=0,
            grid=(N,),
            in_specs=[
                pl.BlockSpec((None, C, Sp), lambda n: (n, 0, 0)),   # xpad (per image)
                const((1, S)),          # valid-column mask
                const((K * K, C, C)),   # w1 taps
                const((C, 1)),          # b1
                const((K * K, C, C)),   # w2 taps
                const((C, 1)),          # b2
                const((R, C)),          # wd1
                const((R, 1)),          # bd1
                const((C, R)),          # wd2
                const((C, 1)),          # bd2
            ],
            out_specs=pl.BlockSpec((None, C, S), lambda n: (n, 0, 0)),
            scratch_shapes=[pltpu.VMEM((C, S), jnp.float32),    # conv accumulator
                            pltpu.VMEM((C, Sp), cdt)],          # padded h1 staging
        ),
        compiler_params=pltpu.CompilerParams(
            dimension_semantics=("parallel",),
            vmem_limit_bytes=vmem_limit),
    )(xpad, mask, w1, b1, w2, b2, wd1, bd1, wd2, bd2)

    # glue: drop the W-pad columns of the extended frame -> (N, C, H, W)
    return out_ext.reshape(N, C, H, Wp)[:, :, :, P:P + W]


# ------------------------------- pure-JAX reference -------------------------------
def rcab_ref(x, params):
    dn = ('NCHW', 'OIHW', 'NCHW')
    h = jax.lax.conv_general_dilated(x, params['w1'], (1, 1), 'SAME',
                                     dimension_numbers=dn) + params['b1'][None, :, None, None]
    h = jnp.maximum(h, 0.0)
    h = jax.lax.conv_general_dilated(h, params['w2'], (1, 1), 'SAME',
                                     dimension_numbers=dn) + params['b2'][None, :, None, None]
    pooled = jnp.mean(h, axis=(2, 3))                                   # (N, C)
    y = jnp.maximum(pooled @ params['wd1'].T + params['bd1'], 0.0)      # (N, R)
    y = jax.nn.sigmoid(y @ params['wd2'].T + params['bd2'])             # (N, C)
    return h * y[:, :, None, None] + x


if __name__ == "__main__":
    N, C, H, W = 2, 4, 16, 16       # n_feat = 4
    R = 2                           # reduced_channel
    K = 3                           # kernel_size

    key = jax.random.PRNGKey(0)
    ks = jax.random.split(key, 9)
    params = {
        'w1':  jax.random.normal(ks[0], (C, C, K, K), jnp.float32) * 0.1,   # OIHW
        'b1':  jax.random.normal(ks[1], (C,), jnp.float32) * 0.1,
        'w2':  jax.random.normal(ks[2], (C, C, K, K), jnp.float32) * 0.1,   # OIHW
        'b2':  jax.random.normal(ks[3], (C,), jnp.float32) * 0.1,
        'wd1': jax.random.normal(ks[4], (R, C), jnp.float32) * 0.1,
        'bd1': jax.random.normal(ks[5], (R,), jnp.float32) * 0.1,
        'wd2': jax.random.normal(ks[6], (C, R), jnp.float32) * 0.1,
        'bd2': jax.random.normal(ks[7], (C,), jnp.float32) * 0.1,
    }
    x = jax.random.normal(ks[8], (N, C, H, W), jnp.float32)

    out = jax.block_until_ready(rcab_pallas(x, params, kernel_size=K))
    ref = jax.block_until_ready(rcab_ref(x, params))

    assert out.shape == (N, C, H, W)
    err = jnp.max(jnp.abs(out - ref))
    assert jnp.allclose(out, ref, atol=1e-4, rtol=1e-4), f"max err {err}"
    print("KERNEL_OK")
</pallas_src>

<mosaic_0001>
module attributes {stable_mosaic.version = 11 : i64} {
  func.func @_rcab_kernel(%arg0: i32, %arg1: memref<1x4x326xf32, #tpu.memory_space<vmem>>, %arg2: memref<1x288xf32, #tpu.memory_space<vmem>>, %arg3: memref<9x4x4xf32, #tpu.memory_space<vmem>>, %arg4: memref<4x1xf32, #tpu.memory_space<vmem>>, %arg5: memref<9x4x4xf32, #tpu.memory_space<vmem>>, %arg6: memref<4x1xf32, #tpu.memory_space<vmem>>, %arg7: memref<2x4xf32, #tpu.memory_space<vmem>>, %arg8: memref<2x1xf32, #tpu.memory_space<vmem>>, %arg9: memref<4x2xf32, #tpu.memory_space<vmem>>, %arg10: memref<4x1xf32, #tpu.memory_space<vmem>>, %arg11: memref<1x4x288xf32, #tpu.memory_space<vmem>>, %arg12: memref<4x288xf32, #tpu.memory_space<vmem>>, %arg13: memref<4x326xf32, #tpu.memory_space<vmem>>) attributes {dimension_semantics = [#tpu.dimension_semantics<parallel>], iteration_bounds = array<i64: 2>, scalar_prefetch = 0 : i64, scratch_operands = 2 : i64, tpu.core_type = #tpu.core_type<tc>, window_params = [{transform_indices = @transform_0, window_bounds = array<i64: 1, 4, 326>}, {pipeline_mode = #tpu.pipeline_mode<synchronous>, transform_indices = @transform_1, window_bounds = array<i64: 1, 288>}, {pipeline_mode = #tpu.pipeline_mode<synchronous>, transform_indices = @transform_2, window_bounds = array<i64: 9, 4, 4>}, {pipeline_mode = #tpu.pipeline_mode<synchronous>, transform_indices = @transform_3, window_bounds = array<i64: 4, 1>}, {pipeline_mode = #tpu.pipeline_mode<synchronous>, transform_indices = @transform_4, window_bounds = array<i64: 9, 4, 4>}, {pipeline_mode = #tpu.pipeline_mode<synchronous>, transform_indices = @transform_5, window_bounds = array<i64: 4, 1>}, {pipeline_mode = #tpu.pipeline_mode<synchronous>, transform_indices = @transform_6, window_bounds = array<i64: 2, 4>}, {pipeline_mode = #tpu.pipeline_mode<synchronous>, transform_indices = @transform_7, window_bounds = array<i64: 2, 1>}, {pipeline_mode = #tpu.pipeline_mode<synchronous>, transform_indices = @transform_8, window_bounds = array<i64: 4, 2>}, {pipeline_mode = #tpu.pipeline_mode<synchronous>, transform_indices = @transform_9, window_bounds = array<i64: 4, 1>}, {transform_indices = @transform_10, window_bounds = array<i64: 1, 4, 288>}]} {
    %c0 = arith.constant 0 : index
    %c0_0 = arith.constant 0 : index
    %0 = vector.load %arg2[%c0, %c0_0] : memref<1x288xf32, #tpu.memory_space<vmem>>, vector<1x288xf32>
    %c0_1 = arith.constant 0 : index
    %c0_2 = arith.constant 0 : index
    %c0_3 = arith.constant 0 : index
    %1 = vector.load %arg1[%c0_1, %c0_2, %c0_3] : memref<1x4x326xf32, #tpu.memory_space<vmem>>, vector<1x4x288xf32>
    %2 = vector.shape_cast %1 : vector<1x4x288xf32> to vector<4x288xf32>
    %c0_4 = arith.constant 0 : index
    %c0_5 = arith.constant 0 : index
    %c0_6 = arith.constant 0 : index
    %3 = vector.load %arg3[%c0_4, %c0_5, %c0_6] : memref<9x4x4xf32, #tpu.memory_space<vmem>>, vector<1x4x4xf32>
    %4 = vector.shape_cast %3 : vector<1x4x4xf32> to vector<4x4xf32>
    %cst = arith.constant dense<0.000000e+00> : vector<4x288xf32>
    %5 = tpu.matmul %4, %2, %cst {dimension_numbers = #tpu.dot_dimension_numbers<[1], [0], [0], [1], [0, 0, 1, 1], [], []>} : vector<4x4xf32>, vector<4x288xf32>, vector<4x288xf32> -> vector<4x288xf32>
    %c0_7 = arith.constant 0 : index
    %c0_8 = arith.constant 0 : index
    %6 = vector.load %arg12[%c0_7, %c0_8] : memref<4x288xf32, #tpu.memory_space<vmem>>, vector<4x288xf32>
    tpu.vector_store %arg12[%c0_7, %c0_8], %5 {strides = array<i32>} : memref<4x288xf32, #tpu.memory_space<vmem>>, vector<4x288xf32>,
    %c0_9 = arith.constant 0 : index
    %c0_10 = arith.constant 0 : index
    %c1 = arith.constant 1 : index
    %7 = vector.load %arg1[%c0_9, %c0_10, %c1] : memref<1x4x326xf32, #tpu.memory_space<vmem>>, vector<1x4x288xf32>
    %8 = vector.shape_cast %7 : vector<1x4x288xf32> to vector<4x288xf32>
    %c1_11 = arith.constant 1 : index
    %c0_12 = arith.constant 0 : index
    %c0_13 = arith.constant 0 : index
    %9 = vector.load %arg3[%c1_11, %c0_12, %c0_13] : memref<9x4x4xf32, #tpu.memory_space<vmem>>, vector<1x4x4xf32>
    %10 = vector.shape_cast %9 : vector<1x4x4xf32> to vector<4x4xf32>
    %cst_14 = arith.constant dense<0.000000e+00> : vector<4x288xf32>
    %11 = tpu.matmul %10, %8, %cst_14 {dimension_numbers = #tpu.dot_dimension_numbers<[1], [0], [0], [1], [0, 0, 1, 1], [], []>} : vector<4x4xf32>, vector<4x288xf32>, vector<4x288xf32> -> vector<4x288xf32>
    %c0_15 = arith.constant 0 : index
    %c0_16 = arith.constant 0 : index
    %12 = vector.load %arg12[%c0_15, %c0_16] : memref<4x288xf32, #tpu.memory_space<vmem>>, vector<4x288xf32>
    %13 = arith.addf %12, %11 : vector<4x288xf32>
    %c0_17 = arith.constant 0 : index
    %c0_18 = arith.constant 0 : index
    %14 = vector.load %arg12[%c0_17, %c0_18] : memref<4x288xf32, #tpu.memory_space<vmem>>, vector<4x288xf32>
    tpu.vector_store %arg12[%c0_17, %c0_18], %13 {strides = array<i32>} : memref<4x288xf32, #tpu.memory_space<vmem>>, vector<4x288xf32>,
    %c0_19 = arith.constant 0 : index
    %c0_20 = arith.constant 0 : index
    %c2 = arith.constant 2 : index
    %15 = vector.load %arg1[%c0_19, %c0_20, %c2] : memref<1x4x326xf32, #tpu.memory_space<vmem>>, vector<1x4x288xf32>
    %16 = vector.shape_cast %15 : vector<1x4x288xf32> to vector<4x288xf32>
    %c2_21 = arith.constant 2 : index
    %c0_22 = arith.constant 0 : index
    %c0_23 = arith.constant 0 : index
    %17 = vector.load %arg3[%c2_21, %c0_22, %c0_23] : memref<9x4x4xf32, #tpu.memory_space<vmem>>, vector<1x4x4xf32>
    %18 = vector.shape_cast %17 : vector<1x4x4xf32> to vector<4x4xf32>
    %cst_24 = arith.constant dense<0.000000e+00> : vector<4x288xf32>
    %19 = tpu.matmul %18, %16, %cst_24 {dimension_numbers = #tpu.dot_dimension_numbers<[1], [0], [0], [1], [0, 0, 1, 1], [], []>} : vector<4x4xf32>, vector<4x288xf32>, vector<4x288xf32> -> vector<4x288xf32>
    %c0_25 = arith.constant 0 : index
    %c0_26 = arith.constant 0 : index
    %20 = vector.load %arg12[%c0_25, %c0_26] : memref<4x288xf32, #tpu.memory_space<vmem>>, vector<4x288xf32>
    %21 = arith.addf %20, %19 : vector<4x288xf32>
    %c0_27 = arith.constant 0 : index
    %c0_28 = arith.constant 0 : index
    %22 = vector.load %arg12[%c0_27, %c0_28] : memref<4x288xf32, #tpu.memory_space<vmem>>, vector<4x288xf32>
    tpu.vector_store %arg12[%c0_27, %c0_28], %21 {strides = array<i32>} : memref<4x288xf32, #tpu.memory_space<vmem>>, vector<4x288xf32>,
    %c0_29 = arith.constant 0 : index
    %c0_30 = arith.constant 0 : index
    %c18 = arith.constant 18 : index
    %23 = vector.load %arg1[%c0_29, %c0_30, %c18] : memref<1x4x326xf32, #tpu.memory_space<vmem>>, vector<1x4x288xf32>
    %24 = vector.shape_cast %23 : vector<1x4x288xf32> to vector<4x288xf32>
    %c3 = arith.constant 3 : index
    %c0_31 = arith.constant 0 : index
    %c0_32 = arith.constant 0 : index
    %25 = vector.load %arg3[%c3, %c0_31, %c0_32] : memref<9x4x4xf32, #tpu.memory_space<vmem>>, vector<1x4x4xf32>
    %26 = vector.shape_cast %25 : vector<1x4x4xf32> to vector<4x4xf32>
    %cst_33 = arith.constant dense<0.000000e+00> : vector<4x288xf32>
    %27 = tpu.matmul %26, %24, %cst_33 {dimension_numbers = #tpu.dot_dimension_numbers<[1], [0], [0], [1], [0, 0, 1, 1], [], []>} : vector<4x4xf32>, vector<4x288xf32>, vector<4x288xf32> -> vector<4x288xf32>
    %c0_34 = arith.constant 0 : index
    %c0_35 = arith.constant 0 : index
    %28 = vector.load %arg12[%c0_34, %c0_35] : memref<4x288xf32, #tpu.memory_space<vmem>>, vector<4x288xf32>
    %29 = arith.addf %28, %27 : vector<4x288xf32>
    %c0_36 = arith.constant 0 : index
    %c0_37 = arith.constant 0 : index
    %30 = vector.load %arg12[%c0_36, %c0_37] : memref<4x288xf32, #tpu.memory_space<vmem>>, vector<4x288xf32>
    tpu.vector_store %arg12[%c0_36, %c0_37], %29 {strides = array<i32>} : memref<4x288xf32, #tpu.memory_space<vmem>>, vector<4x288xf32>,
    %c0_38 = arith.constant 0 : index
    %c0_39 = arith.constant 0 : index
    %c19 = arith.constant 19 : index
    %31 = vector.load %arg1[%c0_38, %c0_39, %c19] : memref<1x4x326xf32, #tpu.memory_space<vmem>>, vector<1x4x288xf32>
    %32 = vector.shape_cast %31 : vector<1x4x288xf32> to vector<4x288xf32>
    %c4 = arith.constant 4 : index
    %c0_40 = arith.constant 0 : index
    %c0_41 = arith.constant 0 : index
    %33 = vector.load %arg3[%c4, %c0_40, %c0_41] : memref<9x4x4xf32, #tpu.memory_space<vmem>>, vector<1x4x4xf32>
    %34 = vector.shape_cast %33 : vector<1x4x4xf32> to vector<4x4xf32>
    %cst_42 = arith.constant dense<0.000000e+00> : vector<4x288xf32>
    %35 = tpu.matmul %34, %32, %cst_42 {dimension_numbers = #tpu.dot_dimension_numbers<[1], [0], [0], [1], [0, 0, 1, 1], [], []>} : vector<4x4xf32>, vector<4x288xf32>, vector<4x288xf32> -> vector<4x288xf32>
    %c0_43 = arith.constant 0 : index
    %c0_44 = arith.constant 0 : index
    %36 = vector.load %arg12[%c0_43, %c0_44] : memref<4x288xf32, #tpu.memory_space<vmem>>, vector<4x288xf32>
    %37 = arith.addf %36, %35 : vector<4x288xf32>
    %c0_45 = arith.constant 0 : index
    %c0_46 = arith.constant 0 : index
    %38 = vector.load %arg12[%c0_45, %c0_46] : memref<4x288xf32, #tpu.memory_space<vmem>>, vector<4x288xf32>
    tpu.vector_store %arg12[%c0_45, %c0_46], %37 {strides = array<i32>} : memref<4x288xf32, #tpu.memory_space<vmem>>, vector<4x288xf32>,
    %c0_47 = arith.constant 0 : index
    %c0_48 = arith.constant 0 : index
    %c20 = arith.constant 20 : index
    %39 = vector.load %arg1[%c0_47, %c0_48, %c20] : memref<1x4x326xf32, #tpu.memory_space<vmem>>, vector<1x4x288xf32>
    %40 = vector.shape_cast %39 : vector<1x4x288xf32> to vector<4x288xf32>
    %c5 = arith.constant 5 : index
    %c0_49 = arith.constant 0 : index
    %c0_50 = arith.constant 0 : index
    %41 = vector.load %arg3[%c5, %c0_49, %c0_50] : memref<9x4x4xf32, #tpu.memory_space<vmem>>, vector<1x4x4xf32>
    %42 = vector.shape_cast %41 : vector<1x4x4xf32> to vector<4x4xf32>
    %cst_51 = arith.constant dense<0.000000e+00> : vector<4x288xf32>
    %43 = tpu.matmul %42, %40, %cst_51 {dimension_numbers = #tpu.dot_dimension_numbers<[1], [0], [0], [1], [0, 0, 1, 1], [], []>} : vector<4x4xf32>, vector<4x288xf32>, vector<4x288xf32> -> vector<4x288xf32>
    %c0_52 = arith.constant 0 : index
    %c0_53 = arith.constant 0 : index
    %44 = vector.load %arg12[%c0_52, %c0_53] : memref<4x288xf32, #tpu.memory_space<vmem>>, vector<4x288xf32>
    %45 = arith.addf %44, %43 : vector<4x288xf32>
    %c0_54 = arith.constant 0 : index
    %c0_55 = arith.constant 0 : index
    %46 = vector.load %arg12[%c0_54, %c0_55] : memref<4x288xf32, #tpu.memory_space<vmem>>, vector<4x288xf32>
    tpu.vector_store %arg12[%c0_54, %c0_55], %45 {strides = array<i32>} : memref<4x288xf32, #tpu.memory_space<vmem>>, vector<4x288xf32>,
    %c0_56 = arith.constant 0 : index
    %c0_57 = arith.constant 0 : index
    %c36 = arith.constant 36 : index
    %47 = vector.load %arg1[%c0_56, %c0_57, %c36] : memref<1x4x326xf32, #tpu.memory_space<vmem>>, vector<1x4x288xf32>
    %48 = vector.shape_cast %47 : vector<1x4x288xf32> to vector<4x288xf32>
    %c6 = arith.constant 6 : index
    %c0_58 = arith.constant 0 : index
    %c0_59 = arith.constant 0 : index
    %49 = vector.load %arg3[%c6, %c0_58, %c0_59] : memref<9x4x4xf32, #tpu.memory_space<vmem>>, vector<1x4x4xf32>
    %50 = vector.shape_cast %49 : vector<1x4x4xf32> to vector<4x4xf32>
    %cst_60 = arith.constant dense<0.000000e+00> : vector<4x288xf32>
    %51 = tpu.matmul %50, %48, %cst_60 {dimension_numbers = #tpu.dot_dimension_numbers<[1], [0], [0], [1], [0, 0, 1, 1], [], []>} : vector<4x4xf32>, vector<4x288xf32>, vector<4x288xf32> -> vector<4x288xf32>
    %c0_61 = arith.constant 0 : index
    %c0_62 = arith.constant 0 : index
    %52 = vector.load %arg12[%c0_61, %c0_62] : memref<4x288xf32, #tpu.memory_space<vmem>>, vector<4x288xf32>
    %53 = arith.addf %52, %51 : vector<4x288xf32>
    %c0_63 = arith.constant 0 : index
    %c0_64 = arith.constant 0 : index
    %54 = vector.load %arg12[%c0_63, %c0_64] : memref<4x288xf32, #tpu.memory_space<vmem>>, vector<4x288xf32>
    tpu.vector_store %arg12[%c0_63, %c0_64], %53 {strides = array<i32>} : memref<4x288xf32, #tpu.memory_space<vmem>>, vector<4x288xf32>,
    %c0_65 = arith.constant 0 : index
    %c0_66 = arith.constant 0 : index
    %c37 = arith.constant 37 : index
    %55 = vector.load %arg1[%c0_65, %c0_66, %c37] : memref<1x4x326xf32, #tpu.memory_space<vmem>>, vector<1x4x288xf32>
    %56 = vector.shape_cast %55 : vector<1x4x288xf32> to vector<4x288xf32>
    %c7 = arith.constant 7 : index
    %c0_67 = arith.constant 0 : index
    %c0_68 = arith.constant 0 : index
    %57 = vector.load %arg3[%c7, %c0_67, %c0_68] : memref<9x4x4xf32, #tpu.memory_space<vmem>>, vector<1x4x4xf32>
    %58 = vector.shape_cast %57 : vector<1x4x4xf32> to vector<4x4xf32>
    %cst_69 = arith.constant dense<0.000000e+00> : vector<4x288xf32>
    %59 = tpu.matmul %58, %56, %cst_69 {dimension_numbers = #tpu.dot_dimension_numbers<[1], [0], [0], [1], [0, 0, 1, 1], [], []>} : vector<4x4xf32>, vector<4x288xf32>, vector<4x288xf32> -> vector<4x288xf32>
    %c0_70 = arith.constant 0 : index
    %c0_71 = arith.constant 0 : index
    %60 = vector.load %arg12[%c0_70, %c0_71] : memref<4x288xf32, #tpu.memory_space<vmem>>, vector<4x288xf32>
    %61 = arith.addf %60, %59 : vector<4x288xf32>
    %c0_72 = arith.constant 0 : index
    %c0_73 = arith.constant 0 : index
    %62 = vector.load %arg12[%c0_72, %c0_73] : memref<4x288xf32, #tpu.memory_space<vmem>>, vector<4x288xf32>
    tpu.vector_store %arg12[%c0_72, %c0_73], %61 {strides = array<i32>} : memref<4x288xf32, #tpu.memory_space<vmem>>, vector<4x288xf32>,
    %c0_74 = arith.constant 0 : index
    %c0_75 = arith.constant 0 : index
    %c38 = arith.constant 38 : index
    %63 = vector.load %arg1[%c0_74, %c0_75, %c38] : memref<1x4x326xf32, #tpu.memory_space<vmem>>, vector<1x4x288xf32>
    %64 = vector.shape_cast %63 : vector<1x4x288xf32> to vector<4x288xf32>
    %c8 = arith.constant 8 : index
    %c0_76 = arith.constant 0 : index
    %c0_77 = arith.constant 0 : index
    %65 = vector.load %arg3[%c8, %c0_76, %c0_77] : memref<9x4x4xf32, #tpu.memory_space<vmem>>, vector<1x4x4xf32>
    %66 = vector.shape_cast %65 : vector<1x4x4xf32> to vector<4x4xf32>
    %cst_78 = arith.constant dense<0.000000e+00> : vector<4x288xf32>
    %67 = tpu.matmul %66, %64, %cst_78 {dimension_numbers = #tpu.dot_dimension_numbers<[1], [0], [0], [1], [0, 0, 1, 1], [], []>} : vector<4x4xf32>, vector<4x288xf32>, vector<4x288xf32> -> vector<4x288xf32>
    %c0_79 = arith.constant 0 : index
    %c0_80 = arith.constant 0 : index
    %68 = vector.load %arg12[%c0_79, %c0_80] : memref<4x288xf32, #tpu.memory_space<vmem>>, vector<4x288xf32>
    %69 = arith.addf %68, %67 : vector<4x288xf32>
    %c0_81 = arith.constant 0 : index
    %c0_82 = arith.constant 0 : index
    %70 = vector.load %arg12[%c0_81, %c0_82] : memref<4x288xf32, #tpu.memory_space<vmem>>, vector<4x288xf32>
    tpu.vector_store %arg12[%c0_81, %c0_82], %69 {strides = array<i32>} : memref<4x288xf32, #tpu.memory_space<vmem>>, vector<4x288xf32>,
    %c0_83 = arith.constant 0 : index
    %c0_84 = arith.constant 0 : index
    %71 = vector.load %arg12[%c0_83, %c0_84] : memref<4x288xf32, #tpu.memory_space<vmem>>, vector<4x288xf32>
    %c0_85 = arith.constant 0 : index
    %c0_86 = arith.constant 0 : index
    %72 = vector.load %arg4[%c0_85, %c0_86] : memref<4x1xf32, #tpu.memory_space<vmem>>, vector<4x1xf32>
    %73 = vector.broadcast %72 : vector<4x1xf32> to vector<4x288xf32>
    %74 = arith.addf %71, %73 : vector<4x288xf32>
    %cst_87 = arith.constant 0.000000e+00 : f32
    %75 = vector.broadcast %cst_87 : f32 to vector<4x288xf32>
    %76 = arith.maximumf %74, %75 : vector<4x288xf32>
    %cst_88 = arith.constant 0.000000e+00 : f32
    %77 = vector.broadcast %cst_88 : f32 to vector<4x19xf32>
    %c0_89 = arith.constant 0 : index
    %c0_90 = arith.constant 0 : index
    %78 = vector.load %arg13[%c0_89, %c0_90] : memref<4x326xf32, #tpu.memory_space<vmem>>, vector<4x19xf32>
    tpu.vector_store %arg13[%c0_89, %c0_90], %77 {strides = array<i32>} : memref<4x326xf32, #tpu.memory_space<vmem>>, vector<4x19xf32>,
    %c0_91 = arith.constant 0 : index
    %c307 = arith.constant 307 : index
    %79 = vector.load %arg13[%c0_91, %c307] : memref<4x326xf32, #tpu.memory_space<vmem>>, vector<4x19xf32>
    tpu.vector_store %arg13[%c0_91, %c307], %77 {strides = array<i32>} : memref<4x326xf32, #tpu.memory_space<vmem>>, vector<4x19xf32>,
    %80 = vector.broadcast %0 : vector<1x288xf32> to vector<4x288xf32>
    %81 = arith.mulf %76, %80 : vector<4x288xf32>
    %c0_92 = arith.constant 0 : index
    %c19_93 = arith.constant 19 : index
    %82 = vector.load %arg13[%c0_92, %c19_93] : memref<4x326xf32, #tpu.memory_space<vmem>>, vector<4x288xf32>
    tpu.vector_store %arg13[%c0_92, %c19_93], %81 {strides = array<i32>} : memref<4x326xf32, #tpu.memory_space<vmem>>, vector<4x288xf32>,
    %c0_94 = arith.constant 0 : index
    %c0_95 = arith.constant 0 : index
    %83 = vector.load %arg13[%c0_94, %c0_95] : memref<4x326xf32, #tpu.memory_space<vmem>>, vector<4x288xf32>
    %c0_96 = arith.constant 0 : index
    %c0_97 = arith.constant 0 : index
    %c0_98 = arith.constant 0 : index
    %84 = vector.load %arg5[%c0_96, %c0_97, %c0_98] : memref<9x4x4xf32, #tpu.memory_space<vmem>>, vector<1x4x4xf32>
    %85 = vector.shape_cast %84 : vector<1x4x4xf32> to vector<4x4xf32>
    %cst_99 = arith.constant dense<0.000000e+00> : vector<4x288xf32>
    %86 = tpu.matmul %85, %83, %cst_99 {dimension_numbers = #tpu.dot_dimension_numbers<[1], [0], [0], [1], [0, 0, 1, 1], [], []>} : vector<4x4xf32>, vector<4x288xf32>, vector<4x288xf32> -> vector<4x288xf32>
    %c0_100 = arith.constant 0 : index
    %c0_101 = arith.constant 0 : index
    %87 = vector.load %arg12[%c0_100, %c0_101] : memref<4x288xf32, #tpu.memory_space<vmem>>, vector<4x288xf32>
    tpu.vector_store %arg12[%c0_100, %c0_101], %86 {strides = array<i32>} : memref<4x288xf32, #tpu.memory_space<vmem>>, vector<4x288xf32>,
    %c0_102 = arith.constant 0 : index
    %c1_103 = arith.constant 1 : index
    %88 = vector.load %arg13[%c0_102, %c1_103] : memref<4x326xf32, #tpu.memory_space<vmem>>, vector<4x288xf32>
    %c1_104 = arith.constant 1 : index
    %c0_105 = arith.constant 0 : index
    %c0_106 = arith.constant 0 : index
    %89 = vector.load %arg5[%c1_104, %c0_105, %c0_106] : memref<9x4x4xf32, #tpu.memory_space<vmem>>, vector<1x4x4xf32>
    %90 = vector.shape_cast %89 : vector<1x4x4xf32> to vector<4x4xf32>
    %cst_107 = arith.constant dense<0.000000e+00> : vector<4x288xf32>
    %91 = tpu.matmul %90, %88, %cst_107 {dimension_numbers = #tpu.dot_dimension_numbers<[1], [0], [0], [1], [0, 0, 1, 1], [], []>} : vector<4x4xf32>, vector<4x288xf32>, vector<4x288xf32> -> vector<4x288xf32>
    %c0_108 = arith.constant 0 : index
    %c0_109 = arith.constant 0 : index
    %92 = vector.load %arg12[%c0_108, %c0_109] : memref<4x288xf32, #tpu.memory_space<vmem>>, vector<4x288xf32>
    %93 = arith.addf %92, %91 : vector<4x288xf32>
    %c0_110 = arith.constant 0 : index
    %c0_111 = arith.constant 0 : index
    %94 = vector.load %arg12[%c0_110, %c0_111] : memref<4x288xf32, #tpu.memory_space<vmem>>, vector<4x288xf32>
    tpu.vector_store %arg12[%c0_110, %c0_111], %93 {strides = array<i32>} : memref<4x288xf32, #tpu.memory_space<vmem>>, vector<4x288xf32>,
    %c0_112 = arith.constant 0 : index
    %c2_113 = arith.constant 2 : index
    %95 = vector.load %arg13[%c0_112, %c2_113] : memref<4x326xf32, #tpu.memory_space<vmem>>, vector<4x288xf32>
    %c2_114 = arith.constant 2 : index
    %c0_115 = arith.constant 0 : index
    %c0_116 = arith.constant 0 : index
    %96 = vector.load %arg5[%c2_114, %c0_115, %c0_116] : memref<9x4x4xf32, #tpu.memory_space<vmem>>, vector<1x4x4xf32>
    %97 = vector.shape_cast %96 : vector<1x4x4xf32> to vector<4x4xf32>
    %cst_117 = arith.constant dense<0.000000e+00> : vector<4x288xf32>
    %98 = tpu.matmul %97, %95, %cst_117 {dimension_numbers = #tpu.dot_dimension_numbers<[1], [0], [0], [1], [0, 0, 1, 1], [], []>} : vector<4x4xf32>, vector<4x288xf32>, vector<4x288xf32> -> vector<4x288xf32>
    %c0_118 = arith.constant 0 : index
    %c0_119 = arith.constant 0 : index
    %99 = vector.load %arg12[%c0_118, %c0_119] : memref<4x288xf32, #tpu.memory_space<vmem>>, vector<4x288xf32>
    %100 = arith.addf %99, %98 : vector<4x288xf32>
    %c0_120 = arith.constant 0 : index
    %c0_121 = arith.constant 0 : index
    %101 = vector.load %arg12[%c0_120, %c0_121] : memref<4x288xf32, #tpu.memory_space<vmem>>, vector<4x288xf32>
    tpu.vector_store %arg12[%c0_120, %c0_121], %100 {strides = array<i32>} : memref<4x288xf32, #tpu.memory_space<vmem>>, vector<4x288xf32>,
    %c0_122 = arith.constant 0 : index
    %c18_123 = arith.constant 18 : index
    %102 = vector.load %arg13[%c0_122, %c18_123] : memref<4x326xf32, #tpu.memory_space<vmem>>, vector<4x288xf32>
    %c3_124 = arith.constant 3 : index
    %c0_125 = arith.constant 0 : index
    %c0_126 = arith.constant 0 : index
    %103 = vector.load %arg5[%c3_124, %c0_125, %c0_126] : memref<9x4x4xf32, #tpu.memory_space<vmem>>, vector<1x4x4xf32>
    %104 = vector.shape_cast %103 : vector<1x4x4xf32> to vector<4x4xf32>
    %cst_127 = arith.constant dense<0.000000e+00> : vector<4x288xf32>
    %105 = tpu.matmul %104, %102, %cst_127 {dimension_numbers = #tpu.dot_dimension_numbers<[1], [0], [0], [1], [0, 0, 1, 1], [], []>} : vector<4x4xf32>, vector<4x288xf32>, vector<4x288xf32> -> vector<4x288xf32>
    %c0_128 = arith.constant 0 : index
    %c0_129 = arith.constant 0 : index
    %106 = vector.load %arg12[%c0_128, %c0_129] : memref<4x288xf32, #tpu.memory_space<vmem>>, vector<4x288xf32>
    %107 = arith.addf %106, %105 : vector<4x288xf32>
    %c0_130 = arith.constant 0 : index
    %c0_131 = arith.constant 0 : index
    %108 = vector.load %arg12[%c0_130, %c0_131] : memref<4x288xf32, #tpu.memory_space<vmem>>, vector<4x288xf32>
    tpu.vector_store %arg12[%c0_130, %c0_131], %107 {strides = array<i32>} : memref<4x288xf32, #tpu.memory_space<vmem>>, vector<4x288xf32>,
    %c0_132 = arith.constant 0 : index
    %c19_133 = arith.constant 19 : index
    %109 = vector.load %arg13[%c0_132, %c19_133] : memref<4x326xf32, #tpu.memory_space<vmem>>, vector<4x288xf32>
    %c4_134 = arith.constant 4 : index
    %c0_135 = arith.constant 0 : index
    %c0_136 = arith.constant 0 : index
    %110 = vector.load %arg5[%c4_134, %c0_135, %c0_136] : memref<9x4x4xf32, #tpu.memory_space<vmem>>, vector<1x4x4xf32>
    %111 = vector.shape_cast %110 : vector<1x4x4xf32> to vector<4x4xf32>
    %cst_137 = arith.constant dense<0.000000e+00> : vector<4x288xf32>
    %112 = tpu.matmul %111, %109, %cst_137 {dimension_numbers = #tpu.dot_dimension_numbers<[1], [0], [0], [1], [0, 0, 1, 1], [], []>} : vector<4x4xf32>, vector<4x288xf32>, vector<4x288xf32> -> vector<4x288xf32>
    %c0_138 = arith.constant 0 : index
    %c0_139 = arith.constant 0 : index
    %113 = vector.load %arg12[%c0_138, %c0_139] : memref<4x288xf32, #tpu.memory_space<vmem>>, vector<4x288xf32>
    %114 = arith.addf %113, %112 : vector<4x288xf32>
    %c0_140 = arith.constant 0 : index
    %c0_141 = arith.constant 0 : index
    %115 = vector.load %arg12[%c0_140, %c0_141] : memref<4x288xf32, #tpu.memory_space<vmem>>, vector<4x288xf32>
    tpu.vector_store %arg12[%c0_140, %c0_141], %114 {strides = array<i32>} : memref<4x288xf32, #tpu.memory_space<vmem>>, vector<4x288xf32>,
    %c0_142 = arith.constant 0 : index
    %c20_143 = arith.constant 20 : index
    %116 = vector.load %arg13[%c0_142, %c20_143] : memref<4x326xf32, #tpu.memory_space<vmem>>, vector<4x288xf32>
    %c5_144 = arith.constant 5 : index
    %c0_145 = arith.constant 0 : index
    %c0_146 = arith.constant 0 : index
    %117 = vector.load %arg5[%c5_144, %c0_145, %c0_146] : memref<9x4x4xf32, #tpu.memory_space<vmem>>, vector<1x4x4xf32>
    %118 = vector.shape_cast %117 : vector<1x4x4xf32> to vector<4x4xf32>
    %cst_147 = arith.constant dense<0.000000e+00> : vector<4x288xf32>
    %119 = tpu.matmul %118, %116, %cst_147 {dimension_numbers = #tpu.dot_dimension_numbers<[1], [0], [0], [1], [0, 0, 1, 1], [], []>} : vector<4x4xf32>, vector<4x288xf32>, vector<4x288xf32> -> vector<4x288xf32>
    %c0_148 = arith.constant 0 : index
    %c0_149 = arith.constant 0 : index
    %120 = vector.load %arg12[%c0_148, %c0_149] : memref<4x288xf32, #tpu.memory_space<vmem>>, vector<4x288xf32>
    %121 = arith.addf %120, %119 : vector<4x288xf32>
    %c0_150 = arith.constant 0 : index
    %c0_151 = arith.constant 0 : index
    %122 = vector.load %arg12[%c0_150, %c0_151] : memref<4x288xf32, #tpu.memory_space<vmem>>, vector<4x288xf32>
    tpu.vector_store %arg12[%c0_150, %c0_151], %121 {strides = array<i32>} : memref<4x288xf32, #tpu.memory_space<vmem>>, vector<4x288xf32>,
    %c0_152 = arith.constant 0 : index
    %c36_153 = arith.constant 36 : index
    %123 = vector.load %arg13[%c0_152, %c36_153] : memref<4x326xf32, #tpu.memory_space<vmem>>, vector<4x288xf32>
    %c6_154 = arith.constant 6 : index
    %c0_155 = arith.constant 0 : index
    %c0_156 = arith.constant 0 : index
    %124 = vector.load %arg5[%c6_154, %c0_155, %c0_156] : memref<9x4x4xf32, #tpu.memory_space<vmem>>, vector<1x4x4xf32>
    %125 = vector.shape_cast %124 : vector<1x4x4xf32> to vector<4x4xf32>
    %cst_157 = arith.constant dense<0.000000e+00> : vector<4x288xf32>
    %126 = tpu.matmul %125, %123, %cst_157 {dimension_numbers = #tpu.dot_dimension_numbers<[1], [0], [0], [1], [0, 0, 1, 1], [], []>} : vector<4x4xf32>, vector<4x288xf32>, vector<4x288xf32> -> vector<4x288xf32>
    %c0_158 = arith.constant 0 : index
    %c0_159 = arith.constant 0 : index
    %127 = vector.load %arg12[%c0_158, %c0_159] : memref<4x288xf32, #tpu.memory_space<vmem>>, vector<4x288xf32>
    %128 = arith.addf %127, %126 : vector<4x288xf32>
    %c0_160 = arith.constant 0 : index
    %c0_161 = arith.constant 0 : index
    %129 = vector.load %arg12[%c0_160, %c0_161] : memref<4x288xf32, #tpu.memory_space<vmem>>, vector<4x288xf32>
    tpu.vector_store %arg12[%c0_160, %c0_161], %128 {strides = array<i32>} : memref<4x288xf32, #tpu.memory_space<vmem>>, vector<4x288xf32>,
    %c0_162 = arith.constant 0 : index
    %c37_163 = arith.constant 37 : index
    %130 = vector.load %arg13[%c0_162, %c37_163] : memref<4x326xf32, #tpu.memory_space<vmem>>, vector<4x288xf32>
    %c7_164 = arith.constant 7 : index
    %c0_165 = arith.constant 0 : index
    %c0_166 = arith.constant 0 : index
    %131 = vector.load %arg5[%c7_164, %c0_165, %c0_166] : memref<9x4x4xf32, #tpu.memory_space<vmem>>, vector<1x4x4xf32>
    %132 = vector.shape_cast %131 : vector<1x4x4xf32> to vector<4x4xf32>
    %cst_167 = arith.constant dense<0.000000e+00> : vector<4x288xf32>
    %133 = tpu.matmul %132, %130, %cst_167 {dimension_numbers = #tpu.dot_dimension_numbers<[1], [0], [0], [1], [0, 0, 1, 1], [], []>} : vector<4x4xf32>, vector<4x288xf32>, vector<4x288xf32> -> vector<4x288xf32>
    %c0_168 = arith.constant 0 : index
    %c0_169 = arith.constant 0 : index
    %134 = vector.load %arg12[%c0_168, %c0_169] : memref<4x288xf32, #tpu.memory_space<vmem>>, vector<4x288xf32>
    %135 = arith.addf %134, %133 : vector<4x288xf32>
    %c0_170 = arith.constant 0 : index
    %c0_171 = arith.constant 0 : index
    %136 = vector.load %arg12[%c0_170, %c0_171] : memref<4x288xf32, #tpu.memory_space<vmem>>, vector<4x288xf32>
    tpu.vector_store %arg12[%c0_170, %c0_171], %135 {strides = array<i32>} : memref<4x288xf32, #tpu.memory_space<vmem>>, vector<4x288xf32>,
    %c0_172 = arith.constant 0 : index
    %c38_173 = arith.constant 38 : index
    %137 = vector.load %arg13[%c0_172, %c38_173] : memref<4x326xf32, #tpu.memory_space<vmem>>, vector<4x288xf32>
    %c8_174 = arith.constant 8 : index
    %c0_175 = arith.constant 0 : index
    %c0_176 = arith.constant 0 : index
    %138 = vector.load %arg5[%c8_174, %c0_175, %c0_176] : memref<9x4x4xf32, #tpu.memory_space<vmem>>, vector<1x4x4xf32>
    %139 = vector.shape_cast %138 : vector<1x4x4xf32> to vector<4x4xf32>
    %cst_177 = arith.constant dense<0.000000e+00> : vector<4x288xf32>
    %140 = tpu.matmul %139, %137, %cst_177 {dimension_numbers = #tpu.dot_dimension_numbers<[1], [0], [0], [1], [0, 0, 1, 1], [], []>} : vector<4x4xf32>, vector<4x288xf32>, vector<4x288xf32> -> vector<4x288xf32>
    %c0_178 = arith.constant 0 : index
    %c0_179 = arith.constant 0 : index
    %141 = vector.load %arg12[%c0_178, %c0_179] : memref<4x288xf32, #tpu.memory_space<vmem>>, vector<4x288xf32>
    %142 = arith.addf %141, %140 : vector<4x288xf32>
    %c0_180 = arith.constant 0 : index
    %c0_181 = arith.constant 0 : index
    %143 = vector.load %arg12[%c0_180, %c0_181] : memref<4x288xf32, #tpu.memory_space<vmem>>, vector<4x288xf32>
    tpu.vector_store %arg12[%c0_180, %c0_181], %142 {strides = array<i32>} : memref<4x288xf32, #tpu.memory_space<vmem>>, vector<4x288xf32>,
    %c0_182 = arith.constant 0 : index
    %c0_183 = arith.constant 0 : index
    %144 = vector.load %arg12[%c0_182, %c0_183] : memref<4x288xf32, #tpu.memory_space<vmem>>, vector<4x288xf32>
    %c0_184 = arith.constant 0 : index
    %c0_185 = arith.constant 0 : index
    %145 = vector.load %arg6[%c0_184, %c0_185] : memref<4x1xf32, #tpu.memory_space<vmem>>, vector<4x1xf32>
    %146 = vector.broadcast %145 : vector<4x1xf32> to vector<4x288xf32>
    %147 = arith.addf %144, %146 : vector<4x288xf32>
    %148 = vector.broadcast %0 : vector<1x288xf32> to vector<4x288xf32>
    %149 = arith.mulf %147, %148 : vector<4x288xf32>
    %cst_186 = arith.constant dense<0.000000e+00> : vector<4xf32>
    %150 = vector.multi_reduction <add>, %149, %cst_186 [1] : vector<4x288xf32> to vector<4xf32>
    %151 = vector.shape_cast %150 : vector<4xf32> to vector<4x1xf32>
    %cst_187 = arith.constant 2.560000e+02 : f32
    %152 = vector.broadcast %cst_187 : f32 to vector<4x1xf32>
    %153 = arith.divf %151, %152 : vector<4x1xf32>
    %c0_188 = arith.constant 0 : index
    %c0_189 = arith.constant 0 : index
    %154 = vector.load %arg7[%c0_188, %c0_189] : memref<2x4xf32, #tpu.memory_space<vmem>>, vector<2x4xf32>
    %cst_190 = arith.constant dense<0.000000e+00> : vector<2x1xf32>
    %155 = tpu.matmul %154, %153, %cst_190 {dimension_numbers = #tpu.dot_dimension_numbers<[1], [0], [0], [1], [0, 0, 1, 1], [], []>} : vector<2x4xf32>, vector<4x1xf32>, vector<2x1xf32> -> vector<2x1xf32>
    %c0_191 = arith.constant 0 : index
    %c0_192 = arith.constant 0 : index
    %156 = vector.load %arg8[%c0_191, %c0_192] : memref<2x1xf32, #tpu.memory_space<vmem>>, vector<2x1xf32>
    %157 = arith.addf %155, %156 : vector<2x1xf32>
    %cst_193 = arith.constant 0.000000e+00 : f32
    %158 = vector.broadcast %cst_193 : f32 to vector<2x1xf32>
    %159 = arith.maximumf %157, %158 : vector<2x1xf32>
    %c0_194 = arith.constant 0 : index
    %c0_195 = arith.constant 0 : index
    %160 = vector.load %arg9[%c0_194, %c0_195] : memref<4x2xf32, #tpu.memory_space<vmem>>, vector<4x2xf32>
    %cst_196 = arith.constant dense<0.000000e+00> : vector<4x1xf32>
    %161 = tpu.matmul %160, %159, %cst_196 {dimension_numbers = #tpu.dot_dimension_numbers<[1], [0], [0], [1], [0, 0, 1, 1], [], []>} : vector<4x2xf32>, vector<2x1xf32>, vector<4x1xf32> -> vector<4x1xf32>
    %c0_197 = arith.constant 0 : index
    %c0_198 = arith.constant 0 : index
    %162 = vector.load %arg10[%c0_197, %c0_198] : memref<4x1xf32, #tpu.memory_space<vmem>>, vector<4x1xf32>
    %163 = arith.addf %161, %162 : vector<4x1xf32>
    %164 = arith.negf %163 : vector<4x1xf32>
    %165 = math.exp %164 : vector<4x1xf32>
    %cst_199 = arith.constant 1.000000e+00 : f32
    %166 = vector.broadcast %cst_199 : f32 to vector<4x1xf32>
    %167 = arith.addf %166, %165 : vector<4x1xf32>
    %168 = arith.divf %166, %167 : vector<4x1xf32>
    %c0_200 = arith.constant 0 : index
    %c0_201 = arith.constant 0 : index
    %c19_202 = arith.constant 19 : index
    %169 = vector.load %arg1[%c0_200, %c0_201, %c19_202] : memref<1x4x326xf32, #tpu.memory_space<vmem>>, vector<1x4x288xf32>
    %170 = vector.shape_cast %169 : vector<1x4x288xf32> to vector<4x288xf32>
    %171 = vector.broadcast %168 : vector<4x1xf32> to vector<4x288xf32>
    %172 = arith.mulf %147, %171 : vector<4x288xf32>
    %173 = arith.addf %172, %170 : vector<4x288xf32>
    %c0_203 = arith.constant 0 : index
    %c0_204 = arith.constant 0 : index
    %c0_205 = arith.constant 0 : index
    %174 = vector.load %arg11[%c0_203, %c0_204, %c0_205] : memref<1x4x288xf32, #tpu.memory_space<vmem>>, vector<1x4x288xf32>
    %175 = vector.shape_cast %174 : vector<1x4x288xf32> to vector<4x288xf32>
    %176 = vector.shape_cast %173 : vector<4x288xf32> to vector<1x4x288xf32>
    tpu.vector_store %arg11[%c0_203, %c0_204, %c0_205], %176 {strides = array<i32>} : memref<1x4x288xf32, #tpu.memory_space<vmem>>, vector<1x4x288xf32>,
    return
  }
  func.func @transform_0(%arg0: i32) -> (i32, i32, i32) {
    %c0_i32 = arith.constant 0 : i32
    %c0_i32_0 = arith.constant 0 : i32
    %c0_i32_1 = arith.constant 0 : i32
    return %arg0, %c0_i32, %c0_i32_0 : i32, i32, i32
  }
  func.func @transform_1(%arg0: i32) -> (i32, i32) {
    %c0_i32 = arith.constant 0 : i32
    %c0_i32_0 = arith.constant 0 : i32
    %c0_i32_1 = arith.constant 0 : i32
    return %c0_i32, %c0_i32_0 : i32, i32
  }
  func.func @transform_2(%arg0: i32) -> (i32, i32, i32) {
    %c0_i32 = arith.constant 0 : i32
    %c0_i32_0 = arith.constant 0 : i32
    %c0_i32_1 = arith.constant 0 : i32
    %c0_i32_2 = arith.constant 0 : i32
    return %c0_i32, %c0_i32_0, %c0_i32_1 : i32, i32, i32
  }
  func.func @transform_3(%arg0: i32) -> (i32, i32) {
    %c0_i32 = arith.constant 0 : i32
    %c0_i32_0 = arith.constant 0 : i32
    %c0_i32_1 = arith.constant 0 : i32
    return %c0_i32, %c0_i32_0 : i32, i32
  }
  func.func @transform_4(%arg0: i32) -> (i32, i32, i32) {
    %c0_i32 = arith.constant 0 : i32
    %c0_i32_0 = arith.constant 0 : i32
    %c0_i32_1 = arith.constant 0 : i32
    %c0_i32_2 = arith.constant 0 : i32
    return %c0_i32, %c0_i32_0, %c0_i32_1 : i32, i32, i32
  }
  func.func @transform_5(%arg0: i32) -> (i32, i32) {
    %c0_i32 = arith.constant 0 : i32
    %c0_i32_0 = arith.constant 0 : i32
    %c0_i32_1 = arith.constant 0 : i32
    return %c0_i32, %c0_i32_0 : i32, i32
  }
  func.func @transform_6(%arg0: i32) -> (i32, i32) {
    %c0_i32 = arith.constant 0 : i32
    %c0_i32_0 = arith.constant 0 : i32
    %c0_i32_1 = arith.constant 0 : i32
    return %c0_i32, %c0_i32_0 : i32, i32
  }
  func.func @transform_7(%arg0: i32) -> (i32, i32) {
    %c0_i32 = arith.constant 0 : i32
    %c0_i32_0 = arith.constant 0 : i32
    %c0_i32_1 = arith.constant 0 : i32
    return %c0_i32, %c0_i32_0 : i32, i32
  }
  func.func @transform_8(%arg0: i32) -> (i32, i32) {
    %c0_i32 = arith.constant 0 : i32
    %c0_i32_0 = arith.constant 0 : i32
    %c0_i32_1 = arith.constant 0 : i32
    return %c0_i32, %c0_i32_0 : i32, i32
  }
  func.func @transform_9(%arg0: i32) -> (i32, i32) {
    %c0_i32 = arith.constant 0 : i32
    %c0_i32_0 = arith.constant 0 : i32
    %c0_i32_1 = arith.constant 0 : i32
    return %c0_i32, %c0_i32_0 : i32, i32
  }
  func.func @transform_10(%arg0: i32) -> (i32, i32, i32) {
    %c0_i32 = arith.constant 0 : i32
    %c0_i32_0 = arith.constant 0 : i32
    %c0_i32_1 = arith.constant 0 : i32
    return %arg0, %c0_i32, %c0_i32_0 : i32, i32, i32
  }
}

</mosaic_0001>

<llo_original>
// kernel: tpu_custom_call.1
$region0: #{tpu_custom_call.1}
  #allocation0 [shape = 'u32[]', space=smem, size = 0x4, offset = 0x4, fixed_abs, tag = 'smem constant byte address 0x4 - core index']
  #allocation1 [shape = 'u32[144,128]{1,0:T(1,128)}', space=vmem, size = 0x12000, scoped, tag = 'internal scratch']
  #allocation2 [shape = 'f32[4,288]{1,0:T(4,128)}', space=vmem, size = 0x1800, scoped, tag = 'scratch operand']
  #allocation3 [shape = 'f32[4,326]{1,0:T(4,128)}', space=vmem, size = 0x1800, scoped, tag = 'scratch operand']
  %s0 = inlined_call_operand.vmem [shape: f32[2,4,326], index: 0, kind: input, shape index: {}]
  %s1 = inlined_call_operand.vmem [shape: f32[1,288], index: 1, kind: input, shape index: {}]
  %s2 = inlined_call_operand.vmem [shape: f32[9,4,4], index: 2, kind: input, shape index: {}]
  %s3 = inlined_call_operand.vmem [shape: f32[4,1], index: 3, kind: input, shape index: {}]
  %s4 = inlined_call_operand.vmem [shape: f32[9,4,4], index: 4, kind: input, shape index: {}]
  %s5 = inlined_call_operand.vmem [shape: f32[4,1], index: 5, kind: input, shape index: {}]
  %s6 = inlined_call_operand.vmem [shape: f32[2,4], index: 6, kind: input, shape index: {}]
  %s7 = inlined_call_operand.vmem [shape: f32[2,1], index: 7, kind: input, shape index: {}]
  %s8 = inlined_call_operand.vmem [shape: f32[4,2], index: 8, kind: input, shape index: {}]
  %s9 = inlined_call_operand.vmem [shape: f32[4,1], index: 9, kind: input, shape index: {}]
  %s10 = inlined_call_operand.hbm [shape: f32[2,4,288], index: 10, kind: output, shape index: {}]
  %s11 = sld [smem:[#allocation0]]
  $region73: #{tpu_custom_call.1} parent=0
    _
  %s13 = ssub.s32 1, %s11
  %s14 = scalar_select 0, %s13, %s11
  $region1: #{tpu_custom_call.1} parent=0
    #allocation4 [shape = 'u8[12288]{0}', space=vmem, size = 0x3000, scoped, tag = 'output window, operand 0']
    #allocation5 [shape = 's32[2]{0}', space=sflag, size = 0x8, scoped, tag = 'scoped memory for tpu_custom_call.1']
    %15 = vsyncpa [#allocation5], 0
    %s16 = scalar_lea.sflag [#allocation5], 1
    %17 = vsyncpa %s16, 0
    loop: start=0, step=1, limit=4
    $region2: #{tpu_custom_call.1} parent=1 // loop_pre_header
      _
    $region3: #{tpu_custom_call.1} parent=1 // loop_header
      %s19 = sphi 0, %s23
      %p20 = scmp.ge.s32.totalorder %s19, 4
      %s29 = sphi 0, %s31
      %s32 = sphi 0, %s29
      %s33 = sphi 0, %s32
      %s49 = sphi 0, %s33
      %s53 = sphi 0, %s53
      %s55 = sphi 0, %s53
      %s56 = sphi 0, %s55
      %s70 = sphi 0, %s56
      %s74 = sphi 0, %s74
      %s76 = sphi 0, %s74
      %s77 = sphi 0, %s76
      %s91 = sphi 0, %s77
      %s95 = sphi 0, %s95
      %s97 = sphi 0, %s95
      %s98 = sphi 0, %s97
      %s112 = sphi 0, %s98
      %s116 = sphi 0, %s116
      %s118 = sphi 0, %s116
      %s119 = sphi 0, %s118
      %s133 = sphi 0, %s119
      %s137 = sphi 0, %s137
      %s139 = sphi 0, %s137
      %s140 = sphi 0, %s139
      %s154 = sphi 0, %s140
      %s158 = sphi 0, %s158
      %s160 = sphi 0, %s158
      %s161 = sphi 0, %s160
      %s175 = sphi 0, %s161
      %s179 = sphi 0, %s179
      %s181 = sphi 0, %s179
      %s182 = sphi 0, %s181
      %s196 = sphi 0, %s182
      %s200 = sphi 0, %s200
      %s202 = sphi 0, %s200
      %s203 = sphi 0, %s202
      %s217 = sphi 0, %s203
      %s221 = sphi 0, %s221
      %s223 = sphi 0, %s221
      %s224 = sphi 0, %s223
      %s238 = sphi 0, %s224
      %s244 = sphi 0, %s246
      %s247 = sphi 0, %s244
      %s248 = sphi 0, %s247
      %s264 = sphi 0, %s248
    $region4: #{tpu_custom_call.1} parent=1 // loop_header_branch
      %22 = sbr.rel (%p20) target = $region8
    $region5: #{tpu_custom_call.1} parent=1 // loop_body
      %s24 = ssub.s32 %s19, 1
      %s25 = ssub.s32 %s19, 2
      %s26 = sadd.s32 %s19, 1
      %s27 = ssub.s32 %s19, %s26
      %p28 = scmp.eq.s32.totalorder %s27, 0
      %s30 = sadd.s32 %s29, 1
      %s31 = scalar_select %p28, %s29, %s30
      %p34 = pneg %p28
      %p35 = scmp.eq.s32.totalorder %s19, 1
      %p36 = por %p34, %p35
      %p37 = scmp.ne.s32.totalorder %s29, %s32
      %p38 = scmp.eq.s32.totalorder %s19, 0
      %p39 = por %p37, %p38
      %p40 = scmp.ne.s32.totalorder %s29, %s32
      %p41 = scmp.eq.s32.totalorder %s24, 1
      %p42 = por %p40, %p41
      %p43 = scmp.ne.s32.totalorder %s32, %s33
      %p44 = scmp.eq.s32.totalorder %s24, 0
      %p45 = por %p43, %p44
      %p46 = scmp.ne.s32.totalorder %s32, %s33
      %p47 = scmp.eq.s32.totalorder %s25, 1
      %p48 = por %p46, %p47
      %p50 = scmp.ne.s32.totalorder %s33, %s49
      %p51 = scmp.eq.s32.totalorder %s25, 0
      %p52 = por %p50, %p51
      %s54 = sadd.s32 %s53, 1
      %p57 = scmp.eq.s32.totalorder %s19, 1
      %p58 = scmp.ne.s32.totalorder %s53, %s55
      %p59 = scmp.eq.s32.totalorder %s19, 0
      %p60 = por %p58, %p59
      %p61 = scmp.ne.s32.totalorder %s53, %s55
      %p62 = scmp.eq.s32.totalorder %s24, 1
      %p63 = por %p61, %p62
      %p64 = scmp.ne.s32.totalorder %s55, %s56
      %p65 = scmp.eq.s32.totalorder %s24, 0
      %p66 = por %p64, %p65
      %p67 = scmp.ne.s32.totalorder %s55, %s56
      %p68 = scmp.eq.s32.totalorder %s25, 1
      %p69 = por %p67, %p68
      %p71 = scmp.ne.s32.totalorder %s56, %s70
      %p72 = scmp.eq.s32.totalorder %s25, 0
      %p73 = por %p71, %p72
      %s75 = sadd.s32 %s74, 1
      %p78 = scmp.eq.s32.totalorder %s19, 1
      %p79 = scmp.ne.s32.totalorder %s74, %s76
      %p80 = scmp.eq.s32.totalorder %s19, 0
      %p81 = por %p79, %p80
      %p82 = scmp.ne.s32.totalorder %s74, %s76
      %p83 = scmp.eq.s32.totalorder %s24, 1
      %p84 = por %p82, %p83
      %p85 = scmp.ne.s32.totalorder %s76, %s77
      %p86 = scmp.eq.s32.totalorder %s24, 0
      %p87 = por %p85, %p86
      %p88 = scmp.ne.s32.totalorder %s76, %s77
      %p89 = scmp.eq.s32.totalorder %s25, 1
      %p90 = por %p88, %p89
      %p92 = scmp.ne.s32.totalorder %s77, %s91
      %p93 = scmp.eq.s32.totalorder %s25, 0
      %p94 = por %p92, %p93
      %s96 = sadd.s32 %s95, 1
      %p99 = scmp.eq.s32.totalorder %s19, 1
      %p100 = scmp.ne.s32.totalorder %s95, %s97
      %p101 = scmp.eq.s32.totalorder %s19, 0
      %p102 = por %p100, %p101
      %p103 = scmp.ne.s32.totalorder %s95, %s97
      %p104 = scmp.eq.s32.totalorder %s24, 1
      %p105 = por %p103, %p104
      %p106 = scmp.ne.s32.totalorder %s97, %s98
      %p107 = scmp.eq.s32.totalorder %s24, 0
      %p108 = por %p106, %p107
      %p109 = scmp.ne.s32.totalorder %s97, %s98
      %p110 = scmp.eq.s32.totalorder %s25, 1
      %p111 = por %p109, %p110
      %p113 = scmp.ne.s32.totalorder %s98, %s112
      %p114 = scmp.eq.s32.totalorder %s25, 0
      %p115 = por %p113, %p114
      %s117 = sadd.s32 %s116, 1
      %p120 = scmp.eq.s32.totalorder %s19, 1
      %p121 = scmp.ne.s32.totalorder %s116, %s118
      %p122 = scmp.eq.s32.totalorder %s19, 0
      %p123 = por %p121, %p122
      %p124 = scmp.ne.s32.totalorder %s116, %s118
      %p125 = scmp.eq.s32.totalorder %s24, 1
      %p126 = por %p124, %p125
      %p127 = scmp.ne.s32.totalorder %s118, %s119
      %p128 = scmp.eq.s32.totalorder %s24, 0
      %p129 = por %p127, %p128
      %p130 = scmp.ne.s32.totalorder %s118, %s119
      %p131 = scmp.eq.s32.totalorder %s25, 1
      %p132 = por %p130, %p131
      %p134 = scmp.ne.s32.totalorder %s119, %s133
      %p135 = scmp.eq.s32.totalorder %s25, 0
      %p136 = por %p134, %p135
      %s138 = sadd.s32 %s137, 1
      %p141 = scmp.eq.s32.totalorder %s19, 1
      %p142 = scmp.ne.s32.totalorder %s137, %s139
      %p143 = scmp.eq.s32.totalorder %s19, 0
      %p144 = por %p142, %p143
      %p145 = scmp.ne.s32.totalorder %s137, %s139
      %p146 = scmp.eq.s32.totalorder %s24, 1
      %p147 = por %p145, %p146
      %p148 = scmp.ne.s32.totalorder %s139, %s140
      %p149 = scmp.eq.s32.totalorder %s24, 0
      %p150 = por %p148, %p149
      %p151 = scmp.ne.s32.totalorder %s139, %s140
      %p152 = scmp.eq.s32.totalorder %s25, 1
      %p153 = por %p151, %p152
      %p155 = scmp.ne.s32.totalorder %s140, %s154
      %p156 = scmp.eq.s32.totalorder %s25, 0
      %p157 = por %p155, %p156
      %s159 = sadd.s32 %s158, 1
      %p162 = scmp.eq.s32.totalorder %s19, 1
      %p163 = scmp.ne.s32.totalorder %s158, %s160
      %p164 = scmp.eq.s32.totalorder %s19, 0
      %p165 = por %p163, %p164
      %p166 = scmp.ne.s32.totalorder %s158, %s160
      %p167 = scmp.eq.s32.totalorder %s24, 1
      %p168 = por %p166, %p167
      %p169 = scmp.ne.s32.totalorder %s160, %s161
      %p170 = scmp.eq.s32.totalorder %s24, 0
      %p171 = por %p169, %p170
      %p172 = scmp.ne.s32.totalorder %s160, %s161
      %p173 = scmp.eq.s32.totalorder %s25, 1
      %p174 = por %p172, %p173
      %p176 = scmp.ne.s32.totalorder %s161, %s175
      %p177 = scmp.eq.s32.totalorder %s25, 0
      %p178 = por %p176, %p177
      %s180 = sadd.s32 %s179, 1
      %p183 = scmp.eq.s32.totalorder %s19, 1
      %p184 = scmp.ne.s32.totalorder %s179, %s181
      %p185 = scmp.eq.s32.totalorder %s19, 0
      %p186 = por %p184, %p185
      %p187 = scmp.ne.s32.totalorder %s179, %s181
      %p188 = scmp.eq.s32.totalorder %s24, 1
      %p189 = por %p187, %p188
      %p190 = scmp.ne.s32.totalorder %s181, %s182
      %p191 = scmp.eq.s32.totalorder %s24, 0
      %p192 = por %p190, %p191
      %p193 = scmp.ne.s32.totalorder %s181, %s182
      %p194 = scmp.eq.s32.totalorder %s25, 1
      %p195 = por %p193, %p194
      %p197 = scmp.ne.s32.totalorder %s182, %s196
      %p198 = scmp.eq.s32.totalorder %s25, 0
      %p199 = por %p197, %p198
      %s201 = sadd.s32 %s200, 1
      %p204 = scmp.eq.s32.totalorder %s19, 1
      %p205 = scmp.ne.s32.totalorder %s200, %s202
      %p206 = scmp.eq.s32.totalorder %s19, 0
      %p207 = por %p205, %p206
      %p208 = scmp.ne.s32.totalorder %s200, %s202
      %p209 = scmp.eq.s32.totalorder %s24, 1
      %p210 = por %p208, %p209
      %p211 = scmp.ne.s32.totalorder %s202, %s203
      %p212 = scmp.eq.s32.totalorder %s24, 0
      %p213 = por %p211, %p212
      %p214 = scmp.ne.s32.totalorder %s202, %s203
      %p215 = scmp.eq.s32.totalorder %s25, 1
      %p216 = por %p214, %p215
      %p218 = scmp.ne.s32.totalorder %s203, %s217
      %p219 = scmp.eq.s32.totalorder %s25, 0
      %p220 = por %p218, %p219
      %s222 = sadd.s32 %s221, 1
      %p225 = scmp.eq.s32.totalorder %s19, 1
      %p226 = scmp.ne.s32.totalorder %s221, %s223
      %p227 = scmp.eq.s32.totalorder %s19, 0
      %p228 = por %p226, %p227
      %p229 = scmp.ne.s32.totalorder %s221, %s223
      %p230 = scmp.eq.s32.totalorder %s24, 1
      %p231 = por %p229, %p230
      %p232 = scmp.ne.s32.totalorder %s223, %s224
      %p233 = scmp.eq.s32.totalorder %s24, 0
      %p234 = por %p232, %p233
      %p235 = scmp.ne.s32.totalorder %s223, %s224
      %p236 = scmp.eq.s32.totalorder %s25, 1
      %p237 = por %p235, %p236
      %p239 = scmp.ne.s32.totalorder %s224, %s238
      %p240 = scmp.eq.s32.totalorder %s25, 0
      %p241 = por %p239, %p240
      %s242 = ssub.s32 %s19, %s26
      %p243 = scmp.eq.s32.totalorder %s242, 0
      %s245 = sadd.s32 %s244, 1
      %s246 = scalar_select %p243, %s244, %s245
      %p249 = pneg %p243
      %p250 = scmp.eq.s32.totalorder %s19, 1
      %p251 = por %p249, %p250
      %p252 = scmp.ne.s32.totalorder %s244, %s247
      %p253 = scmp.eq.s32.totalorder %s19, 0
      %p254 = por %p252, %p253
      %p255 = scmp.ne.s32.totalorder %s244, %s247
      %p256 = scmp.eq.s32.totalorder %s24, 1
      %p257 = por %p255, %p256
      %p258 = scmp.ne.s32.totalorder %s247, %s248
      %p259 = scmp.eq.s32.totalorder %s24, 0
      %p260 = por %p258, %p259
      %p261 = scmp.ne.s32.totalorder %s247, %s248
      %p262 = scmp.eq.s32.totalorder %s25, 1
      %p263 = por %p261, %p262
      %p265 = scmp.ne.s32.totalorder %s248, %s264
      %p266 = scmp.eq.s32.totalorder %s25, 0
      %p267 = por %p265, %p266
      %p268 = scmp.le.s32.totalorder 1, %s19
      %p269 = scmp.lt.s32.totalorder %s19, 3
      %p270 = pnand %p268, %p269
      %p271 = pneg %p270
      // Predicated region
      $region9: #{tpu_custom_call.1} parent=5 // pred_check
        _
      $region10: #{tpu_custom_call.1} parent=5 // pred_check_branch
        %273 = sbr.rel (%p270) target = $region12
      $region11: #{tpu_custom_call.1} parent=5 // pred_region
        %s274 = ssub.s32 %s19, 1
        // Predicated region
        $region13: #{tpu_custom_call.1} parent=11 // pred_check
          %p275 = pneg %p66
        $region14: #{tpu_custom_call.1} parent=11 // pred_check_branch
          %277 = sbr.rel (%p275) target = $region16
        $region15: #{tpu_custom_call.1} parent=11 // pred_region
          _
        $region16: #{tpu_custom_call.1} parent=11 // pred_fallthru
          _
        // Predicated region
        $region17: #{tpu_custom_call.1} parent=11 // pred_check
          %p278 = pneg %p87
        $region18: #{tpu_custom_call.1} parent=11 // pred_check_branch
          %280 = sbr.rel (%p278) target = $region20
        $region19: #{tpu_custom_call.1} parent=11 // pred_region
          _
        $region20: #{tpu_custom_call.1} parent=11 // pred_fallthru
          _
        // Predicated region
        $region21: #{tpu_custom_call.1} parent=11 // pred_check
          %p281 = pneg %p108
        $region22: #{tpu_custom_call.1} parent=11 // pred_check_branch
          %283 = sbr.rel (%p281) target = $region24
        $region23: #{tpu_custom_call.1} parent=11 // pred_region
          _
        $region24: #{tpu_custom_call.1} parent=11 // pred_fallthru
          _
        // Predicated region
        $region25: #{tpu_custom_call.1} parent=11 // pred_check
          %p284 = pneg %p129
        $region26: #{tpu_custom_call.1} parent=11 // pred_check_branch
          %286 = sbr.rel (%p284) target = $region28
        $region27: #{tpu_custom_call.1} parent=11 // pred_region
          _
        $region28: #{tpu_custom_call.1} parent=11 // pred_fallthru
          _
        // Predicated region
        $region29: #{tpu_custom_call.1} parent=11 // pred_check
          %p287 = pneg %p150
        $region30: #{tpu_custom_call.1} parent=11 // pred_check_branch
          %289 = sbr.rel (%p287) target = $region32
        $region31: #{tpu_custom_call.1} parent=11 // pred_region
          _
        $region32: #{tpu_custom_call.1} parent=11 // pred_fallthru
          _
        // Predicated region
        $region33: #{tpu_custom_call.1} parent=11 // pred_check
          %p290 = pneg %p171
        $region34: #{tpu_custom_call.1} parent=11 // pred_check_branch
          %292 = sbr.rel (%p290) target = $region36
        $region35: #{tpu_custom_call.1} parent=11 // pred_region
          _
        $region36: #{tpu_custom_call.1} parent=11 // pred_fallthru
          _
        // Predicated region
        $region37: #{tpu_custom_call.1} parent=11 // pred_check
          %p293 = pneg %p192
        $region38: #{tpu_custom_call.1} parent=11 // pred_check_branch
          %295 = sbr.rel (%p293) target = $region40
        $region39: #{tpu_custom_call.1} parent=11 // pred_region
          _
        $region40: #{tpu_custom_call.1} parent=11 // pred_fallthru
          _
        // Predicated region
        $region41: #{tpu_custom_call.1} parent=11 // pred_check
          %p296 = pneg %p213
        $region42: #{tpu_custom_call.1} parent=11 // pred_check_branch
          %298 = sbr.rel (%p296) target = $region44
        $region43: #{tpu_custom_call.1} parent=11 // pred_region
          _
        $region44: #{tpu_custom_call.1} parent=11 // pred_fallthru
          _
        // Predicated region
        $region45: #{tpu_custom_call.1} parent=11 // pred_check
          %p299 = pneg %p234
        $region46: #{tpu_custom_call.1} parent=11 // pred_check_branch
          %301 = sbr.rel (%p299) target = $region48
        $region47: #{tpu_custom_call.1} parent=11 // pred_region
          _
        $region48: #{tpu_custom_call.1} parent=11 // pred_fallthru
          _
      $region12: #{tpu_custom_call.1} parent=5 // pred_fallthru
        _
      %p302 = scmp.lt.s32.totalorder %s19, 2
      // Predicated region
      $region49: #{tpu_custom_call.1} parent=5 // pred_check
        %p303 = pneg %p302
      $region50: #{tpu_custom_call.1} parent=5 // pred_check_branch
        %305 = sbr.rel (%p303) target = $region52
      $region51: #{tpu_custom_call.1} parent=5 // pred_region
        // Predicated region
        $region53: #{tpu_custom_call.1} parent=51 // pred_check
          %p306 = pneg %p39
        $region54: #{tpu_custom_call.1} parent=51 // pred_check_branch
          %308 = sbr.rel (%p306) target = $region56
        $region55: #{tpu_custom_call.1} parent=51 // pred_region
          %p309 = scmp.lt.s32.totalorder %s19, 1
          %s310 = scalar_select %p309, %s19, 1
          %s311 = smul.addr %s310, 3
          %s312 = smul.addr %s311, 4
          %s313 = scalar_lea.vmem %s0, %s312
        $region56: #{tpu_custom_call.1} parent=51 // pred_fallthru
          _
      $region52: #{tpu_custom_call.1} parent=5 // pred_fallthru
        _
      %p314 = scmp.le.s32.totalorder 1, %s19
      %p315 = scmp.lt.s32.totalorder %s19, 3
      %p316 = pnand %p314, %p315
      %p317 = pneg %p316
      // Predicated region
      $region57: #{tpu_custom_call.1} parent=5 // pred_check
        _
      $region58: #{tpu_custom_call.1} parent=5 // pred_check_branch
        %319 = sbr.rel (%p316) target = $region60
      $region59: #{tpu_custom_call.1} parent=5 // pred_region
        %s320 = ssub.s32 %s19, 1
        %p321 = scmp.lt.s32.totalorder %s24, 1
        %s322 = scalar_select %p321, %s24, 1
        %s323 = smul.addr %s322, 3
        %s324 = smul.addr %s323, 4
        %s325 = scalar_lea.vmem %s0, %s324
        %p326 = pneg %p45
        %p327 = pneg %p42
        %p328 = pneg %p66
        %p329 = pneg %p63
        %p330 = pneg %p87
        %p331 = pneg %p84
        %p332 = pneg %p108
        %p333 = pneg %p105
        %p334 = pneg %p129
        %p335 = pneg %p126
        %p336 = pneg %p150
        %p337 = pneg %p147
        %p338 = pneg %p171
        %p339 = pneg %p168
        %p340 = pneg %p192
        %p341 = pneg %p189
        %p342 = pneg %p213
        %p343 = pneg %p210
        %p344 = pneg %p234
        %p345 = pneg %p231
        %p346 = pneg %p260
        %p347 = pneg %p257
        %s348 = sand.u32 %s247, 1
        %s349 = scalar_lea.sflag [#allocation5], %s348
        %s350 = sand.u32 %s247, 1
        %s351 = smul.addr %s350, 12
        %s352 = scalar_lea.vmem [#allocation4], %s351
        %p353 = scmp.lt.s32.totalorder %s24, 1
        %s354 = scalar_select %p353, %s24, 1
        %s355 = smul.addr %s354, 3
        %s356 = smul.addr %s355, 4
        %s357 = scalar_lea.vmem %s0, %s356
        %v358 = vld [vmem:[%s1] sm:$0x7]
        %v359 = vld [vmem:[%s357] sm:$0xff]
        %v360 = vld [vmem:[%s357 + $0x8] sm:$0xf]
        %v361 = vld [vmem:[%s2] sm:$0xf]
        %v364 = vcombine.high %v359, %v359
        %vm365 = vcmask 31744
        %v367 = vsel %vm365, %v361, 0
        %vm369 = vcmask 1043456
        %v370 = vsel %vm369, %v359, 0
        %v372 = vsel %vm369, %v364, 0
        %v374 = vsel %vm369, %v360, 0
        %376 = vmatprep.subr.mxu0 0.0
        %377 = vmatpush1.msra.mxu0 0.0
        %378 = vmatprep.subr.mxu0 0.0
        %379 = vmatpush1.msra.mxu0 0.0
        %380 = vmatprep.subr.mxu0 0.0
        %381 = vmatpush1.msra.mxu0 0.0
        %382 = vmatprep.subr.mxu0 0.0
        %383 = vmatpush1.msra.mxu0 0.0
        %384 = vmatprep.subr.mxu0 0.0
        %385 = vmatpush1.msra.mxu0 0.0
        %386 = vmatprep.subr.mxu0 0.0
        %387 = vmatpush1.msra.mxu0 0.0
        %388 = vmatprep.subr.mxu0 0.0
        %389 = vmatpush1.msra.mxu0 0.0
        %390 = vmatprep.subr.mxu0 0.0
        %391 = vmatpush1.msra.mxu0 0.0
        %392 = vmatprep.subr.mxu0 0.0
        %393 = vmatpush1.msra.mxu0 0.0
        %394 = vmatprep.subr.mxu0 0.0
        %395 = vmatpush1.msra.mxu0 0.0
        %396 = vmatprep.subr.mxu0 0.0
        %397 = vmatpush1.msra.mxu0 0.0
        %398 = vmatprep.subr.mxu0 0.0
        %399 = vmatpush1.msra.mxu0 0.0
        %400 = vmatprep.subr.mxu0 0.0
        %401 = vmatpush1.msra.mxu0 0.0
        %402 = vmatprep.subr.mxu0 0.0
        %403 = vmatpush1.msra.mxu0 0.0
        %404 = vmatprep.subr.mxu0 0.0
        %405 = vmatpush1.msra.mxu0 0.0
        %406 = vmatprep.subr.mxu0 %v372
        %407 = vmatpush1.msra.mxu0 %v370
        %408 = vmatprep.subr.mxu0 0.0
        %409 = vmatpush2.msra.mxu0 0.0
        %410 = vmatprep.subr.mxu0 0.0
        %411 = vmatpush2.msra.mxu0 0.0
        %412 = vmatprep.subr.mxu0 0.0
        %413 = vmatpush2.msra.mxu0 0.0
        %414 = vmatprep.subr.mxu0 0.0
        %415 = vmatpush2.msra.mxu0 0.0
        %416 = vmatprep.subr.mxu0 0.0
        %417 = vmatpush2.msra.mxu0 0.0
        %418 = vmatprep.subr.mxu0 0.0
        %419 = vmatpush2.msra.mxu0 0.0
        %420 = vmatprep.subr.mxu0 0.0
        %421 = vmatpush2.msra.mxu0 0.0
        %422 = vmatprep.subr.mxu0 0.0
        %423 = vmatpush2.msra.mxu0 0.0
        %424 = vmatprep.subr.mxu0 0.0
        %425 = vmatpush2.msra.mxu0 0.0
        %426 = vmatprep.subr.mxu0 0.0
        %427 = vmatpush2.msra.mxu0 0.0
        %428 = vmatprep.subr.mxu0 0.0
        %429 = vmatpush2.msra.mxu0 0.0
        %430 = vmatprep.subr.mxu0 0.0
        %431 = vmatpush2.msra.mxu0 0.0
        %432 = vmatprep.subr.mxu0 0.0
        %433 = vmatpush2.msra.mxu0 0.0
        %434 = vmatprep.subr.mxu0 0.0
        %435 = vmatpush2.msra.mxu0 0.0
        %436 = vmatprep.subr.mxu0 0.0
        %437 = vmatpush2.msra.mxu0 0.0
        %438 = vmatprep.subr.mxu0 0.0
        %439 = vmatpush2.msra.mxu0 0.0
        %440 = vmatprep.mubr.f32.mxu0 0.0
        %441 = vmatmul.mubr.f32.gmra.mxu0 %v367
        %v442 = vpop.f32.mrf.mxu0
        %v443 = vadd.f32 0.0, %v442
        %v444 = vpop.f32.mrf.mxu0
        %v445 = vadd.f32 0.0, %v444
        %446 = vdwg.mxu0
        %447 = vmatprep.subr.mxu0 0.0
        %448 = vmatpush1.msra.mxu0 0.0
        %449 = vmatprep.subr.mxu0 0.0
        %450 = vmatpush1.msra.mxu0 0.0
        %451 = vmatprep.subr.mxu0 0.0
        %452 = vmatpush1.msra.mxu0 0.0
        %453 = vmatprep.subr.mxu0 0.0
        %454 = vmatpush1.msra.mxu0 0.0
        %455 = vmatprep.subr.mxu0 0.0
        %456 = vmatpush1.msra.mxu0 0.0
        %457 = vmatprep.subr.mxu0 0.0
        %458 = vmatpush1.msra.mxu0 0.0
        %459 = vmatprep.subr.mxu0 0.0
        %460 = vmatpush1.msra.mxu0 0.0
        %461 = vmatprep.subr.mxu0 0.0
        %462 = vmatpush1.msra.mxu0 0.0
        %463 = vmatprep.subr.mxu0 0.0
        %464 = vmatpush1.msra.mxu0 0.0
        %465 = vmatprep.subr.mxu0 0.0
        %466 = vmatpush1.msra.mxu0 0.0
        %467 = vmatprep.subr.mxu0 0.0
        %468 = vmatpush1.msra.mxu0 0.0
        %469 = vmatprep.subr.mxu0 0.0
        %470 = vmatpush1.msra.mxu0 0.0
        %471 = vmatprep.subr.mxu0 0.0
        %472 = vmatpush1.msra.mxu0 0.0
        %473 = vmatprep.subr.mxu0 0.0
        %474 = vmatpush1.msra.mxu0 0.0
        %475 = vmatprep.subr.mxu0 0.0
        %476 = vmatpush1.msra.mxu0 0.0
        %477 = vmatprep.subr.mxu0 0.0
        %478 = vmatpush1.msra.mxu0 %v374
        %479 = vmatprep.subr.mxu0 0.0
        %480 = vmatpush2.msra.mxu0 0.0
        %481 = vmatprep.subr.mxu0 0.0
        %482 = vmatpush2.msra.mxu0 0.0
        %483 = vmatprep.subr.mxu0 0.0
        %484 = vmatpush2.msra.mxu0 0.0
        %485 = vmatprep.subr.mxu0 0.0
        %486 = vmatpush2.msra.mxu0 0.0
        %487 = vmatprep.subr.mxu0 0.0
        %488 = vmatpush2.msra.mxu0 0.0
        %489 = vmatprep.subr.mxu0 0.0
        %490 = vmatpush2.msra.mxu0 0.0
        %491 = vmatprep.subr.mxu0 0.0
        %492 = vmatpush2.msra.mxu0 0.0
        %493 = vmatprep.subr.mxu0 0.0
        %494 = vmatpush2.msra.mxu0 0.0
        %495 = vmatprep.subr.mxu0 0.0
        %496 = vmatpush2.msra.mxu0 0.0
        %497 = vmatprep.subr.mxu0 0.0
        %498 = vmatpush2.msra.mxu0 0.0
        %499 = vmatprep.subr.mxu0 0.0
        %500 = vmatpush2.msra.mxu0 0.0
        %501 = vmatprep.subr.mxu0 0.0
        %502 = vmatpush2.msra.mxu0 0.0
        %503 = vmatprep.subr.mxu0 0.0
        %504 = vmatpush2.msra.mxu0 0.0
        %505 = vmatprep.subr.mxu0 0.0
        %506 = vmatpush2.msra.mxu0 0.0
        %507 = vmatprep.subr.mxu0 0.0
        %508 = vmatpush2.msra.mxu0 0.0
        %509 = vmatprep.subr.mxu0 0.0
        %510 = vmatpush2.msra.mxu0 0.0
        %511 = vmatprep.mubr.f32.mxu0 0.0
        %512 = vmatmul.mubr.f32.gmra.mxu0 %v367
        %v513 = vpop.f32.mrf.mxu0
        %v514 = vadd.f32 0.0, %v513
        %v515 = vpop.f32.mrf.mxu0
        %516 = vdwg.mxu0
        %v519 = vcombine.low %v443, %v445
        %521 = vst [vmem:[#allocation2] sm:$0xff] %v519
        %vm522 = vcmask 257024
        %523 = vst.msk [vmem:[#allocation2 + $0x8] sm:$0xf] %vm522, %v514
        %v524 = vld [vmem:[%s357] sm:$0xff]
        %v525 = vld [vmem:[%s357 + $0x8] sm:$0xf]
        %s526 = scalar_lea.vmem %s2, 4
        %v527 = vld [vmem:[%s526] sm:$0xf]
        %v530 = vcombine.high %v524, %v524
        %531 = vrot.lane.b32.xlu0 %v524, 127
        %v532 = vpop.permute.xlu0 %531
        %533 = vrot.lane.b32.xlu0 %v530, 127
        %v534 = vpop.permute.xlu0 %533
        %535 = vrot.lane.b32.xlu0 %v525, 127
        %v536 = vpop.permute.xlu0 %535
        %vm537 = vcmask 1039360
        %v538 = vsel %vm537, %v532, %v534
        %v539 = vsel %vm537, %v534, %v536
        %v541 = vsel %vm365, %v527, 0
        %v543 = vsel %vm369, %v538, 0
        %v545 = vsel %vm369, %v539, 0
        %v547 = vsel %vm369, %v536, 0
        %549 = vmatprep.subr.mxu0 0.0
        %550 = vmatpush1.msra.mxu0 0.0
        %551 = vmatprep.subr.mxu0 0.0
        %552 = vmatpush1.msra.mxu0 0.0
        %553 = vmatprep.subr.mxu0 0.0
        %554 = vmatpush1.msra.mxu0 0.0
        %555 = vmatprep.subr.mxu0 0.0
        %556 = vmatpush1.msra.mxu0 0.0
        %557 = vmatprep.subr.mxu0 0.0
        %558 = vmatpush1.msra.mxu0 0.0
        %559 = vmatprep.subr.mxu0 0.0
        %560 = vmatpush1.msra.mxu0 0.0
        %561 = vmatprep.subr.mxu0 0.0
        %562 = vmatpush1.msra.mxu0 0.0
        %563 = vmatprep.subr.mxu0 0.0
        %564 = vmatpush1.msra.mxu0 0.0
        %565 = vmatprep.subr.mxu0 0.0
        %566 = vmatpush1.msra.mxu0 0.0
        %567 = vmatprep.subr.mxu0 0.0
        %568 = vmatpush1.msra.mxu0 0.0
        %569 = vmatprep.subr.mxu0 0.0
        %570 = vmatpush1.msra.mxu0 0.0
        %571 = vmatprep.subr.mxu0 0.0
        %572 = vmatpush1.msra.mxu0 0.0
        %573 = vmatprep.subr.mxu0 0.0
        %574 = vmatpush1.msra.mxu0 0.0
        %575 = vmatprep.subr.mxu0 0.0
        %576 = vmatpush1.msra.mxu0 0.0
        %577 = vmatprep.subr.mxu0 0.0
        %578 = vmatpush1.msra.mxu0 0.0
        %579 = vmatprep.subr.mxu0 %v545
        %580 = vmatpush1.msra.mxu0 %v543
        %581 = vmatprep.subr.mxu0 0.0
        %582 = vmatpush2.msra.mxu0 0.0
        %583 = vmatprep.subr.mxu0 0.0
        %584 = vmatpush2.msra.mxu0 0.0
        %585 = vmatprep.subr.mxu0 0.0
        %586 = vmatpush2.msra.mxu0 0.0
        %587 = vmatprep.subr.mxu0 0.0
        %588 = vmatpush2.msra.mxu0 0.0
        %589 = vmatprep.subr.mxu0 0.0
        %590 = vmatpush2.msra.mxu0 0.0
        %591 = vmatprep.subr.mxu0 0.0
        %592 = vmatpush2.msra.mxu0 0.0
        %593 = vmatprep.subr.mxu0 0.0
        %594 = vmatpush2.msra.mxu0 0.0
        %595 = vmatprep.subr.mxu0 0.0
        %596 = vmatpush2.msra.mxu0 0.0
        %597 = vmatprep.subr.mxu0 0.0
        %598 = vmatpush2.msra.mxu0 0.0
        %599 = vmatprep.subr.mxu0 0.0
        %600 = vmatpush2.msra.mxu0 0.0
        %601 = vmatprep.subr.mxu0 0.0
        %602 = vmatpush2.msra.mxu0 0.0
        %603 = vmatprep.subr.mxu0 0.0
        %604 = vmatpush2.msra.mxu0 0.0
        %605 = vmatprep.subr.mxu0 0.0
        %606 = vmatpush2.msra.mxu0 0.0
        %607 = vmatprep.subr.mxu0 0.0
        %608 = vmatpush2.msra.mxu0 0.0
        %609 = vmatprep.subr.mxu0 0.0
        %610 = vmatpush2.msra.mxu0 0.0
        %611 = vmatprep.subr.mxu0 0.0
        %612 = vmatpush2.msra.mxu0 0.0
        %613 = vmatprep.mubr.f32.mxu0 0.0
        %614 = vmatmul.mubr.f32.gmra.mxu0 %v541
        %v615 = vpop.f32.mrf.mxu0
        %v616 = vadd.f32 0.0, %v615
        %v617 = vpop.f32.mrf.mxu0
        %v618 = vadd.f32 0.0, %v617
        %619 = vdwg.mxu0
        %620 = vmatprep.subr.mxu0 0.0
        %621 = vmatpush1.msra.mxu0 0.0
        %622 = vmatprep.subr.mxu0 0.0
        %623 = vmatpush1.msra.mxu0 0.0
        %624 = vmatprep.subr.mxu0 0.0
        %625 = vmatpush1.msra.mxu0 0.0
        %626 = vmatprep.subr.mxu0 0.0
        %627 = vmatpush1.msra.mxu0 0.0
        %628 = vmatprep.subr.mxu0 0.0
        %629 = vmatpush1.msra.mxu0 0.0
        %630 = vmatprep.subr.mxu0 0.0
        %631 = vmatpush1.msra.mxu0 0.0
        %632 = vmatprep.subr.mxu0 0.0
        %633 = vmatpush1.msra.mxu0 0.0
        %634 = vmatprep.subr.mxu0 0.0
        %635 = vmatpush1.msra.mxu0 0.0
        %636 = vmatprep.subr.mxu0 0.0
        %637 = vmatpush1.msra.mxu0 0.0
        %638 = vmatprep.subr.mxu0 0.0
        %639 = vmatpush1.msra.mxu0 0.0
        %640 = vmatprep.subr.mxu0 0.0
        %641 = vmatpush1.msra.mxu0 0.0
        %642 = vmatprep.subr.mxu0 0.0
        %643 = vmatpush1.msra.mxu0 0.0
        %644 = vmatprep.subr.mxu0 0.0
        %645 = vmatpush1.msra.mxu0 0.0
        %646 = vmatprep.subr.mxu0 0.0
        %647 = vmatpush1.msra.mxu0 0.0
        %648 = vmatprep.subr.mxu0 0.0
        %649 = vmatpush1.msra.mxu0 0.0
        %650 = vmatprep.subr.mxu0 0.0
        %651 = vmatpush1.msra.mxu0 %v547
        %652 = vmatprep.subr.mxu0 0.0
        %653 = vmatpush2.msra.mxu0 0.0
        %654 = vmatprep.subr.mxu0 0.0
        %655 = vmatpush2.msra.mxu0 0.0
        %656 = vmatprep.subr.mxu0 0.0
        %657 = vmatpush2.msra.mxu0 0.0
        %658 = vmatprep.subr.mxu0 0.0
        %659 = vmatpush2.msra.mxu0 0.0
        %660 = vmatprep.subr.mxu0 0.0
        %661 = vmatpush2.msra.mxu0 0.0
        %662 = vmatprep.subr.mxu0 0.0
        %663 = vmatpush2.msra.mxu0 0.0
        %664 = vmatprep.subr.mxu0 0.0
        %665 = vmatpush2.msra.mxu0 0.0
        %666 = vmatprep.subr.mxu0 0.0
        %667 = vmatpush2.msra.mxu0 0.0
        %668 = vmatprep.subr.mxu0 0.0
        %669 = vmatpush2.msra.mxu0 0.0
        %670 = vmatprep.subr.mxu0 0.0
        %671 = vmatpush2.msra.mxu0 0.0
        %672 = vmatprep.subr.mxu0 0.0
        %673 = vmatpush2.msra.mxu0 0.0
        %674 = vmatprep.subr.mxu0 0.0
        %675 = vmatpush2.msra.mxu0 0.0
        %676 = vmatprep.subr.mxu0 0.0
        %677 = vmatpush2.msra.mxu0 0.0
        %678 = vmatprep.subr.mxu0 0.0
        %679 = vmatpush2.msra.mxu0 0.0
        %680 = vmatprep.subr.mxu0 0.0
        %681 = vmatpush2.msra.mxu0 0.0
        %682 = vmatprep.subr.mxu0 0.0
        %683 = vmatpush2.msra.mxu0 0.0
        %684 = vmatprep.mubr.f32.mxu0 0.0
        %685 = vmatmul.mubr.f32.gmra.mxu0 %v541
        %v686 = vpop.f32.mrf.mxu0
        %v687 = vadd.f32 0.0, %v686
        %v688 = vpop.f32.mrf.mxu0
        %689 = vdwg.mxu0
        %v690 = vld [vmem:[#allocation2] sm:$0xff]
        %v691 = vld [vmem:[#allocation2 + $0x8] sm:$0xf]
        %v694 = vcombine.low %v616, %v618
        %v696 = vadd.f32 %v690, %v694
        %v697 = vadd.f32 %v691, %v687
        %698 = vst [vmem:[#allocation2] sm:$0xff] %v696
        %699 = vst.msk [vmem:[#allocation2 + $0x8] sm:$0xf] %vm522, %v697
        %v700 = vld [vmem:[%s357] sm:$0xff]
        %v701 = vld [vmem:[%s357 + $0x8] sm:$0xf]
        %s702 = scalar_lea.vmem %s2, 8
        %v703 = vld [vmem:[%s702] sm:$0xf]
        %v706 = vcombine.high %v700, %v700
        %707 = vrot.lane.b32.xlu0 %v700, 126
        %v708 = vpop.permute.xlu0 %707
        %709 = vrot.lane.b32.xlu0 %v706, 126
        %v710 = vpop.permute.xlu0 %709
        %711 = vrot.lane.b32.xlu0 %v701, 126
        %v712 = vpop.permute.xlu0 %711
        %vm713 = vcmask 1031168
        %v714 = vsel %vm713, %v708, %v710
        %v715 = vsel %vm713, %v710, %v712
        %v717 = vsel %vm365, %v703, 0
        %v719 = vsel %vm369, %v714, 0
        %v721 = vsel %vm369, %v715, 0
        %v723 = vsel %vm369, %v712, 0
        %725 = vmatprep.subr.mxu0 0.0
        %726 = vmatpush1.msra.mxu0 0.0
        %727 = vmatprep.subr.mxu0 0.0
        %728 = vmatpush1.msra.mxu0 0.0
        %729 = vmatprep.subr.mxu0 0.0
        %730 = vmatpush1.msra.mxu0 0.0
        %731 = vmatprep.subr.mxu0 0.0
        %732 = vmatpush1.msra.mxu0 0.0
        %733 = vmatprep.subr.mxu0 0.0
        %734 = vmatpush1.msra.mxu0 0.0
        %735 = vmatprep.subr.mxu0 0.0
        %736 = vmatpush1.msra.mxu0 0.0
        %737 = vmatprep.subr.mxu0 0.0
        %738 = vmatpush1.msra.mxu0 0.0
        %739 = vmatprep.subr.mxu0 0.0
        %740 = vmatpush1.msra.mxu0 0.0
        %741 = vmatprep.subr.mxu0 0.0
        %742 = vmatpush1.msra.mxu0 0.0
        %743 = vmatprep.subr.mxu0 0.0
        %744 = vmatpush1.msra.mxu0 0.0
        %745 = vmatprep.subr.mxu0 0.0
        %746 = vmatpush1.msra.mxu0 0.0
        %747 = vmatprep.subr.mxu0 0.0
        %748 = vmatpush1.msra.mxu0 0.0
        %749 = vmatprep.subr.mxu0 0.0
        %750 = vmatpush1.msra.mxu0 0.0
        %751 = vmatprep.subr.mxu0 0.0
        %752 = vmatpush1.msra.mxu0 0.0
        %753 = vmatprep.subr.mxu0 0.0
        %754 = vmatpush1.msra.mxu0 0.0
        %755 = vmatprep.subr.mxu0 %v721
        %756 = vmatpush1.msra.mxu0 %v719
        %757 = vmatprep.subr.mxu0 0.0
        %758 = vmatpush2.msra.mxu0 0.0
        %759 = vmatprep.subr.mxu0 0.0
        %760 = vmatpush2.msra.mxu0 0.0
        %761 = vmatprep.subr.mxu0 0.0
        %762 = vmatpush2.msra.mxu0 0.0
        %763 = vmatprep.subr.mxu0 0.0
        %764 = vmatpush2.msra.mxu0 0.0
        %765 = vmatprep.subr.mxu0 0.0
        %766 = vmatpush2.msra.mxu0 0.0
        %767 = vmatprep.subr.mxu0 0.0
        %768 = vmatpush2.msra.mxu0 0.0
        %769 = vmatprep.subr.mxu0 0.0
        %770 = vmatpush2.msra.mxu0 0.0
        %771 = vmatprep.subr.mxu0 0.0
        %772 = vmatpush2.msra.mxu0 0.0
        %773 = vmatprep.subr.mxu0 0.0
        %774 = vmatpush2.msra.mxu0 0.0
        %775 = vmatprep.subr.mxu0 0.0
        %776 = vmatpush2.msra.mxu0 0.0
        %777 = vmatprep.subr.mxu0 0.0
        %778 = vmatpush2.msra.mxu0 0.0
        %779 = vmatprep.subr.mxu0 0.0
        %780 = vmatpush2.msra.mxu0 0.0
        %781 = vmatprep.subr.mxu0 0.0
        %782 = vmatpush2.msra.mxu0 0.0
        %783 = vmatprep.subr.mxu0 0.0
        %784 = vmatpush2.msra.mxu0 0.0
        %785 = vmatprep.subr.mxu0 0.0
        %786 = vmatpush2.msra.mxu0 0.0
        %787 = vmatprep.subr.mxu0 0.0
        %788 = vmatpush2.msra.mxu0 0.0
        %789 = vmatprep.mubr.f32.mxu0 0.0
        %790 = vmatmul.mubr.f32.gmra.mxu0 %v717
        %v791 = vpop.f32.mrf.mxu0
        %v792 = vadd.f32 0.0, %v791
        %v793 = vpop.f32.mrf.mxu0
        %v794 = vadd.f32 0.0, %v793
        %795 = vdwg.mxu0
        %796 = vmatprep.subr.mxu0 0.0
        %797 = vmatpush1.msra.mxu0 0.0
        %798 = vmatprep.subr.mxu0 0.0
        %799 = vmatpush1.msra.mxu0 0.0
        %800 = vmatprep.subr.mxu0 0.0
        %801 = vmatpush1.msra.mxu0 0.0
        %802 = vmatprep.subr.mxu0 0.0
        %803 = vmatpush1.msra.mxu0 0.0
        %804 = vmatprep.subr.mxu0 0.0
        %805 = vmatpush1.msra.mxu0 0.0
        %806 = vmatprep.subr.mxu0 0.0
        %807 = vmatpush1.msra.mxu0 0.0
        %808 = vmatprep.subr.mxu0 0.0
        %809 = vmatpush1.msra.mxu0 0.0
        %810 = vmatprep.subr.mxu0 0.0
        %811 = vmatpush1.msra.mxu0 0.0
        %812 = vmatprep.subr.mxu0 0.0
        %813 = vmatpush1.msra.mxu0 0.0
        %814 = vmatprep.subr.mxu0 0.0
        %815 = vmatpush1.msra.mxu0 0.0
        %816 = vmatprep.subr.mxu0 0.0
        %817 = vmatpush1.msra.mxu0 0.0
        %818 = vmatprep.subr.mxu0 0.0
        %819 = vmatpush1.msra.mxu0 0.0
        %820 = vmatprep.subr.mxu0 0.0
        %821 = vmatpush1.msra.mxu0 0.0
        %822 = vmatprep.subr.mxu0 0.0
        %823 = vmatpush1.msra.mxu0 0.0
        %824 = vmatprep.subr.mxu0 0.0
        %825 = vmatpush1.msra.mxu0 0.0
        %826 = vmatprep.subr.mxu0 0.0
        %827 = vmatpush1.msra.mxu0 %v723
        %828 = vmatprep.subr.mxu0 0.0
        %829 = vmatpush2.msra.mxu0 0.0
        %830 = vmatprep.subr.mxu0 0.0
        %831 = vmatpush2.msra.mxu0 0.0
        %832 = vmatprep.subr.mxu0 0.0
        %833 = vmatpush2.msra.mxu0 0.0
        %834 = vmatprep.subr.mxu0 0.0
        %835 = vmatpush2.msra.mxu0 0.0
        %836 = vmatprep.subr.mxu0 0.0
        %837 = vmatpush2.msra.mxu0 0.0
        %838 = vmatprep.subr.mxu0 0.0
        %839 = vmatpush2.msra.mxu0 0.0
        %840 = vmatprep.subr.mxu0 0.0
        %841 = vmatpush2.msra.mxu0 0.0
        %842 = vmatprep.subr.mxu0 0.0
        %843 = vmatpush2.msra.mxu0 0.0
        %844 = vmatprep.subr.mxu0 0.0
        %845 = vmatpush2.msra.mxu0 0.0
        %846 = vmatprep.subr.mxu0 0.0
        %847 = vmatpush2.msra.mxu0 0.0
        %848 = vmatprep.subr.mxu0 0.0
        %849 = vmatpush2.msra.mxu0 0.0
        %850 = vmatprep.subr.mxu0 0.0
        %851 = vmatpush2.msra.mxu0 0.0
        %852 = vmatprep.subr.mxu0 0.0
        %853 = vmatpush2.msra.mxu0 0.0
        %854 = vmatprep.subr.mxu0 0.0
        %855 = vmatpush2.msra.mxu0 0.0
        %856 = vmatprep.subr.mxu0 0.0
        %857 = vmatpush2.msra.mxu0 0.0
        %858 = vmatprep.subr.mxu0 0.0
        %859 = vmatpush2.msra.mxu0 0.0
        %860 = vmatprep.mubr.f32.mxu0 0.0
        %861 = vmatmul.mubr.f32.gmra.mxu0 %v717
        %v862 = vpop.f32.mrf.mxu0
        %v863 = vadd.f32 0.0, %v862
        %v864 = vpop.f32.mrf.mxu0
        %865 = vdwg.mxu0
        %v866 = vld [vmem:[#allocation2] sm:$0xff]
        %v867 = vld [vmem:[#allocation2 + $0x8] sm:$0xf]
        %v870 = vcombine.low %v792, %v794
        %v872 = vadd.f32 %v866, %v870
        %v873 = vadd.f32 %v867, %v863
        %874 = vst [vmem:[#allocation2] sm:$0xff] %v872
        %875 = vst.msk [vmem:[#allocation2 + $0x8] sm:$0xf] %vm522, %v873
        %v876 = vld [vmem:[%s357] sm:$0xff]
        %v877 = vld [vmem:[%s357 + $0x8] sm:$0xf]
        %s878 = scalar_lea.vmem %s2, 12
        %v879 = vld [vmem:[%s878] sm:$0xf]
        %v882 = vcombine.high %v876, %v876
        %883 = vrot.lane.b32.xlu0 %v876, 110
        %v884 = vpop.permute.xlu0 %883
        %885 = vrot.lane.b32.xlu0 %v882, 110
        %v886 = vpop.permute.xlu0 %885
        %887 = vrot.lane.b32.xlu0 %v877, 110
        %v888 = vpop.permute.xlu0 %887
        %vm889 = vcmask 900096
        %v890 = vsel %vm889, %v884, %v886
        %v891 = vsel %vm889, %v886, %v888
        %v893 = vsel %vm365, %v879, 0
        %v895 = vsel %vm369, %v890, 0
        %v897 = vsel %vm369, %v891, 0
        %v899 = vsel %vm369, %v888, 0
        %901 = vmatprep.subr.mxu0 0.0
        %902 = vmatpush1.msra.mxu0 0.0
        %903 = vmatprep.subr.mxu0 0.0
        %904 = vmatpush1.msra.mxu0 0.0
        %905 = vmatprep.subr.mxu0 0.0
        %906 = vmatpush1.msra.mxu0 0.0
        %907 = vmatprep.subr.mxu0 0.0
        %908 = vmatpush1.msra.mxu0 0.0
        %909 = vmatprep.subr.mxu0 0.0
        %910 = vmatpush1.msra.mxu0 0.0
        %911 = vmatprep.subr.mxu0 0.0
        %912 = vmatpush1.msra.mxu0 0.0
        %913 = vmatprep.subr.mxu0 0.0
        %914 = vmatpush1.msra.mxu0 0.0
        %915 = vmatprep.subr.mxu0 0.0
        %916 = vmatpush1.msra.mxu0 0.0
        %917 = vmatprep.subr.mxu0 0.0
        %918 = vmatpush1.msra.mxu0 0.0
        %919 = vmatprep.subr.mxu0 0.0
        %920 = vmatpush1.msra.mxu0 0.0
        %921 = vmatprep.subr.mxu0 0.0
        %922 = vmatpush1.msra.mxu0 0.0
        %923 = vmatprep.subr.mxu0 0.0
        %924 = vmatpush1.msra.mxu0 0.0
        %925 = vmatprep.subr.mxu0 0.0
        %926 = vmatpush1.msra.mxu0 0.0
        %927 = vmatprep.subr.mxu0 0.0
        %928 = vmatpush1.msra.mxu0 0.0
        %929 = vmatprep.subr.mxu0 0.0
        %930 = vmatpush1.msra.mxu0 0.0
        %931 = vmatprep.subr.mxu0 %v897
        %932 = vmatpush1.msra.mxu0 %v895
        %933 = vmatprep.subr.mxu0 0.0
        %934 = vmatpush2.msra.mxu0 0.0
        %935 = vmatprep.subr.mxu0 0.0
        %936 = vmatpush2.msra.mxu0 0.0
        %937 = vmatprep.subr.mxu0 0.0
        %938 = vmatpush2.msra.mxu0 0.0
        %939 = vmatprep.subr.mxu0 0.0
        %940 = vmatpush2.msra.mxu0 0.0
        %941 = vmatprep.subr.mxu0 0.0
        %942 = vmatpush2.msra.mxu0 0.0
        %943 = vmatprep.subr.mxu0 0.0
        %944 = vmatpush2.msra.mxu0 0.0
        %945 = vmatprep.subr.mxu0 0.0
        %946 = vmatpush2.msra.mxu0 0.0
        %947 = vmatprep.subr.mxu0 0.0
        %948 = vmatpush2.msra.mxu0 0.0
        %949 = vmatprep.subr.mxu0 0.0
        %950 = vmatpush2.msra.mxu0 0.0
        %951 = vmatprep.subr.mxu0 0.0
        %952 = vmatpush2.msra.mxu0 0.0
        %953 = vmatprep.subr.mxu0 0.0
        %954 = vmatpush2.msra.mxu0 0.0
        %955 = vmatprep.subr.mxu0 0.0
        %956 = vmatpush2.msra.mxu0 0.0
        %957 = vmatprep.subr.mxu0 0.0
        %958 = vmatpush2.msra.mxu0 0.0
        %959 = vmatprep.subr.mxu0 0.0
        %960 = vmatpush2.msra.mxu0 0.0
        %961 = vmatprep.subr.mxu0 0.0
        %962 = vmatpush2.msra.mxu0 0.0
        %963 = vmatprep.subr.mxu0 0.0
        %964 = vmatpush2.msra.mxu0 0.0
        %965 = vmatprep.mubr.f32.mxu0 0.0
        %966 = vmatmul.mubr.f32.gmra.mxu0 %v893
        %v967 = vpop.f32.mrf.mxu0
        %v968 = vadd.f32 0.0, %v967
        %v969 = vpop.f32.mrf.mxu0
        %v970 = vadd.f32 0.0, %v969
        %971 = vdwg.mxu0
        %972 = vmatprep.subr.mxu0 0.0
        %973 = vmatpush1.msra.mxu0 0.0
        %974 = vmatprep.subr.mxu0 0.0
        %975 = vmatpush1.msra.mxu0 0.0
        %976 = vmatprep.subr.mxu0 0.0
        %977 = vmatpush1.msra.mxu0 0.0
        %978 = vmatprep.subr.mxu0 0.0
        %979 = vmatpush1.msra.mxu0 0.0
        %980 = vmatprep.subr.mxu0 0.0
        %981 = vmatpush1.msra.mxu0 0.0
        %982 = vmatprep.subr.mxu0 0.0
        %983 = vmatpush1.msra.mxu0 0.0
        %984 = vmatprep.subr.mxu0 0.0
        %985 = vmatpush1.msra.mxu0 0.0
        %986 = vmatprep.subr.mxu0 0.0
        %987 = vmatpush1.msra.mxu0 0.0
        %988 = vmatprep.subr.mxu0 0.0
        %989 = vmatpush1.msra.mxu0 0.0
        %990 = vmatprep.subr.mxu0 0.0
        %991 = vmatpush1.msra.mxu0 0.0
        %992 = vmatprep.subr.mxu0 0.0
        %993 = vmatpush1.msra.mxu0 0.0
        %994 = vmatprep.subr.mxu0 0.0
        %995 = vmatpush1.msra.mxu0 0.0
        %996 = vmatprep.subr.mxu0 0.0
        %997 = vmatpush1.msra.mxu0 0.0
        %998 = vmatprep.subr.mxu0 0.0
        %999 = vmatpush1.msra.mxu0 0.0
        %1000 = vmatprep.subr.mxu0 0.0
        %1001 = vmatpush1.msra.mxu0 0.0
        %1002 = vmatprep.subr.mxu0 0.0
        %1003 = vmatpush1.msra.mxu0 %v899
        %1004 = vmatprep.subr.mxu0 0.0
        %1005 = vmatpush2.msra.mxu0 0.0
        %1006 = vmatprep.subr.mxu0 0.0
        %1007 = vmatpush2.msra.mxu0 0.0
        %1008 = vmatprep.subr.mxu0 0.0
        %1009 = vmatpush2.msra.mxu0 0.0
        %1010 = vmatprep.subr.mxu0 0.0
        %1011 = vmatpush2.msra.mxu0 0.0
        %1012 = vmatprep.subr.mxu0 0.0
        %1013 = vmatpush2.msra.mxu0 0.0
        %1014 = vmatprep.subr.mxu0 0.0
        %1015 = vmatpush2.msra.mxu0 0.0
        %1016 = vmatprep.subr.mxu0 0.0
        %1017 = vmatpush2.msra.mxu0 0.0
        %1018 = vmatprep.subr.mxu0 0.0
        %1019 = vmatpush2.msra.mxu0 0.0
        %1020 = vmatprep.subr.mxu0 0.0
        %1021 = vmatpush2.msra.mxu0 0.0
        %1022 = vmatprep.subr.mxu0 0.0
        %1023 = vmatpush2.msra.mxu0 0.0
        %1024 = vmatprep.subr.mxu0 0.0
        %1025 = vmatpush2.msra.mxu0 0.0
        %1026 = vmatprep.subr.mxu0 0.0
        %1027 = vmatpush2.msra.mxu0 0.0
        %1028 = vmatprep.subr.mxu0 0.0
        %1029 = vmatpush2.msra.mxu0 0.0
        %1030 = vmatprep.subr.mxu0 0.0
        %1031 = vmatpush2.msra.mxu0 0.0
        %1032 = vmatprep.subr.mxu0 0.0
        %1033 = vmatpush2.msra.mxu0 0.0
        %1034 = vmatprep.subr.mxu0 0.0
        %1035 = vmatpush2.msra.mxu0 0.0
        %1036 = vmatprep.mubr.f32.mxu0 0.0
        %1037 = vmatmul.mubr.f32.gmra.mxu0 %v893
        %v1038 = vpop.f32.mrf.mxu0
        %v1039 = vadd.f32 0.0, %v1038
        %v1040 = vpop.f32.mrf.mxu0
        %1041 = vdwg.mxu0
        %v1042 = vld [vmem:[#allocation2] sm:$0xff]
        %v1043 = vld [vmem:[#allocation2 + $0x8] sm:$0xf]
        %v1046 = vcombine.low %v968, %v970
        %v1048 = vadd.f32 %v1042, %v1046
        %v1049 = vadd.f32 %v1043, %v1039
        %1050 = vst [vmem:[#allocation2] sm:$0xff] %v1048
        %1051 = vst.msk [vmem:[#allocation2 + $0x8] sm:$0xf] %vm522, %v1049
        %v1052 = vld [vmem:[%s357] sm:$0xff]
        %v1053 = vld [vmem:[%s357 + $0x8] sm:$0xf]
        %s1054 = scalar_lea.vmem %s2, 16
        %v1055 = vld [vmem:[%s1054] sm:$0xf]
        %v1058 = vcombine.high %v1052, %v1052
        %1059 = vrot.lane.b32.xlu0 %v1052, 109
        %v1060 = vpop.permute.xlu0 %1059
        %1061 = vrot.lane.b32.xlu0 %v1058, 109
        %v1062 = vpop.permute.xlu0 %1061
        %1063 = vrot.lane.b32.xlu0 %v1053, 109
        %v1064 = vpop.permute.xlu0 %1063
        %vm1065 = vcmask 891904
        %v1066 = vsel %vm1065, %v1060, %v1062
        %v1067 = vsel %vm1065, %v1062, %v1064
        %v1069 = vsel %vm365, %v1055, 0
        %v1071 = vsel %vm369, %v1066, 0
        %v1073 = vsel %vm369, %v1067, 0
        %v1075 = vsel %vm369, %v1064, 0
        %1077 = vmatprep.subr.mxu0 0.0
        %1078 = vmatpush1.msra.mxu0 0.0
        %1079 = vmatprep.subr.mxu0 0.0
        %1080 = vmatpush1.msra.mxu0 0.0
        %1081 = vmatprep.subr.mxu0 0.0
        %1082 = vmatpush1.msra.mxu0 0.0
        %1083 = vmatprep.subr.mxu0 0.0
        %1084 = vmatpush1.msra.mxu0 0.0
        %1085 = vmatprep.subr.mxu0 0.0
        %1086 = vmatpush1.msra.mxu0 0.0
        %1087 = vmatprep.subr.mxu0 0.0
        %1088 = vmatpush1.msra.mxu0 0.0
        %1089 = vmatprep.subr.mxu0 0.0
        %1090 = vmatpush1.msra.mxu0 0.0
        %1091 = vmatprep.subr.mxu0 0.0
        %1092 = vmatpush1.msra.mxu0 0.0
        %1093 = vmatprep.subr.mxu0 0.0
        %1094 = vmatpush1.msra.mxu0 0.0
        %1095 = vmatprep.subr.mxu0 0.0
        %1096 = vmatpush1.msra.mxu0 0.0
        %1097 = vmatprep.subr.mxu0 0.0
        %1098 = vmatpush1.msra.mxu0 0.0
        %1099 = vmatprep.subr.mxu0 0.0
        %1100 = vmatpush1.msra.mxu0 0.0
        %1101 = vmatprep.subr.mxu0 0.0
        %1102 = vmatpush1.msra.mxu0 0.0
        %1103 = vmatprep.subr.mxu0 0.0
        %1104 = vmatpush1.msra.mxu0 0.0
        %1105 = vmatprep.subr.mxu0 0.0
        %1106 = vmatpush1.msra.mxu0 0.0
        %1107 = vmatprep.subr.mxu0 %v1073
        %1108 = vmatpush1.msra.mxu0 %v1071
        %1109 = vmatprep.subr.mxu0 0.0
        %1110 = vmatpush2.msra.mxu0 0.0
        %1111 = vmatprep.subr.mxu0 0.0
        %1112 = vmatpush2.msra.mxu0 0.0
        %1113 = vmatprep.subr.mxu0 0.0
        %1114 = vmatpush2.msra.mxu0 0.0
        %1115 = vmatprep.subr.mxu0 0.0
        %1116 = vmatpush2.msra.mxu0 0.0
        %1117 = vmatprep.subr.mxu0 0.0
        %1118 = vmatpush2.msra.mxu0 0.0
        %1119 = vmatprep.subr.mxu0 0.0
        %1120 = vmatpush2.msra.mxu0 0.0
        %1121 = vmatprep.subr.mxu0 0.0
        %1122 = vmatpush2.msra.mxu0 0.0
        %1123 = vmatprep.subr.mxu0 0.0
        %1124 = vmatpush2.msra.mxu0 0.0
        %1125 = vmatprep.subr.mxu0 0.0
        %1126 = vmatpush2.msra.mxu0 0.0
        %1127 = vmatprep.subr.mxu0 0.0
        %1128 = vmatpush2.msra.mxu0 0.0
        %1129 = vmatprep.subr.mxu0 0.0
        %1130 = vmatpush2.msra.mxu0 0.0
        %1131 = vmatprep.subr.mxu0 0.0
        %1132 = vmatpush2.msra.mxu0 0.0
        %1133 = vmatprep.subr.mxu0 0.0
        %1134 = vmatpush2.msra.mxu0 0.0
        %1135 = vmatprep.subr.mxu0 0.0
        %1136 = vmatpush2.msra.mxu0 0.0
        %1137 = vmatprep.subr.mxu0 0.0
        %1138 = vmatpush2.msra.mxu0 0.0
        %1139 = vmatprep.subr.mxu0 0.0
        %1140 = vmatpush2.msra.mxu0 0.0
        %1141 = vmatprep.mubr.f32.mxu0 0.0
        %1142 = vmatmul.mubr.f32.gmra.mxu0 %v1069
        %v1143 = vpop.f32.mrf.mxu0
        %v1144 = vadd.f32 0.0, %v1143
        %v1145 = vpop.f32.mrf.mxu0
        %v1146 = vadd.f32 0.0, %v1145
        %1147 = vdwg.mxu0
        %1148 = vmatprep.subr.mxu0 0.0
        %1149 = vmatpush1.msra.mxu0 0.0
        %1150 = vmatprep.subr.mxu0 0.0
        %1151 = vmatpush1.msra.mxu0 0.0
        %1152 = vmatprep.subr.mxu0 0.0
        %1153 = vmatpush1.msra.mxu0 0.0
        %1154 = vmatprep.subr.mxu0 0.0
        %1155 = vmatpush1.msra.mxu0 0.0
        %1156 = vmatprep.subr.mxu0 0.0
        %1157 = vmatpush1.msra.mxu0 0.0
        %1158 = vmatprep.subr.mxu0 0.0
        %1159 = vmatpush1.msra.mxu0 0.0
        %1160 = vmatprep.subr.mxu0 0.0
        %1161 = vmatpush1.msra.mxu0 0.0
        %1162 = vmatprep.subr.mxu0 0.0
        %1163 = vmatpush1.msra.mxu0 0.0
        %1164 = vmatprep.subr.mxu0 0.0
        %1165 = vmatpush1.msra.mxu0 0.0
        %1166 = vmatprep.subr.mxu0 0.0
        %1167 = vmatpush1.msra.mxu0 0.0
        %1168 = vmatprep.subr.mxu0 0.0
        %1169 = vmatpush1.msra.mxu0 0.0
        %1170 = vmatprep.subr.mxu0 0.0
        %1171 = vmatpush1.msra.mxu0 0.0
        %1172 = vmatprep.subr.mxu0 0.0
        %1173 = vmatpush1.msra.mxu0 0.0
        %1174 = vmatprep.subr.mxu0 0.0
        %1175 = vmatpush1.msra.mxu0 0.0
        %1176 = vmatprep.subr.mxu0 0.0
        %1177 = vmatpush1.msra.mxu0 0.0
        %1178 = vmatprep.subr.mxu0 0.0
        %1179 = vmatpush1.msra.mxu0 %v1075
        %1180 = vmatprep.subr.mxu0 0.0
        %1181 = vmatpush2.msra.mxu0 0.0
        %1182 = vmatprep.subr.mxu0 0.0
        %1183 = vmatpush2.msra.mxu0 0.0
        %1184 = vmatprep.subr.mxu0 0.0
        %1185 = vmatpush2.msra.mxu0 0.0
        %1186 = vmatprep.subr.mxu0 0.0
        %1187 = vmatpush2.msra.mxu0 0.0
        %1188 = vmatprep.subr.mxu0 0.0
        %1189 = vmatpush2.msra.mxu0 0.0
        %1190 = vmatprep.subr.mxu0 0.0
        %1191 = vmatpush2.msra.mxu0 0.0
        %1192 = vmatprep.subr.mxu0 0.0
        %1193 = vmatpush2.msra.mxu0 0.0
        %1194 = vmatprep.subr.mxu0 0.0
        %1195 = vmatpush2.msra.mxu0 0.0
        %1196 = vmatprep.subr.mxu0 0.0
        %1197 = vmatpush2.msra.mxu0 0.0
        %1198 = vmatprep.subr.mxu0 0.0
        %1199 = vmatpush2.msra.mxu0 0.0
        %1200 = vmatprep.subr.mxu0 0.0
        %1201 = vmatpush2.msra.mxu0 0.0
        %1202 = vmatprep.subr.mxu0 0.0
        %1203 = vmatpush2.msra.mxu0 0.0
        %1204 = vmatprep.subr.mxu0 0.0
        %1205 = vmatpush2.msra.mxu0 0.0
        %1206 = vmatprep.subr.mxu0 0.0
        %1207 = vmatpush2.msra.mxu0 0.0
        %1208 = vmatprep.subr.mxu0 0.0
        %1209 = vmatpush2.msra.mxu0 0.0
        %1210 = vmatprep.subr.mxu0 0.0
        %1211 = vmatpush2.msra.mxu0 0.0
        %1212 = vmatprep.mubr.f32.mxu0 0.0
        %1213 = vmatmul.mubr.f32.gmra.mxu0 %v1069
        %v1214 = vpop.f32.mrf.mxu0
        %v1215 = vadd.f32 0.0, %v1214
        %v1216 = vpop.f32.mrf.mxu0
        %1217 = vdwg.mxu0
        %v1218 = vld [vmem:[#allocation2] sm:$0xff]
        %v1219 = vld [vmem:[#allocation2 + $0x8] sm:$0xf]
        %v1222 = vcombine.low %v1144, %v1146
        %v1224 = vadd.f32 %v1218, %v1222
        %v1225 = vadd.f32 %v1219, %v1215
        %1226 = vst [vmem:[#allocation2] sm:$0xff] %v1224
        %1227 = vst.msk [vmem:[#allocation2 + $0x8] sm:$0xf] %vm522, %v1225
        %v1228 = vld [vmem:[%s357] sm:$0xff]
        %v1229 = vld [vmem:[%s357 + $0x8] sm:$0xf]
        %s1230 = scalar_lea.vmem %s2, 20
        %v1231 = vld [vmem:[%s1230] sm:$0xf]
        %v1234 = vcombine.high %v1228, %v1228
        %1235 = vrot.lane.b32.xlu0 %v1228, 108
        %v1236 = vpop.permute.xlu0 %1235
        %1237 = vrot.lane.b32.xlu0 %v1234, 108
        %v1238 = vpop.permute.xlu0 %1237
        %1239 = vrot.lane.b32.xlu0 %v1229, 108
        %v1240 = vpop.permute.xlu0 %1239
        %vm1241 = vcmask 883712
        %v1242 = vsel %vm1241, %v1236, %v1238
        %v1243 = vsel %vm1241, %v1238, %v1240
        %v1245 = vsel %vm365, %v1231, 0
        %v1247 = vsel %vm369, %v1242, 0
        %v1249 = vsel %vm369, %v1243, 0
        %v1251 = vsel %vm369, %v1240, 0
        %1253 = vmatprep.subr.mxu0 0.0
        %1254 = vmatpush1.msra.mxu0 0.0
        %1255 = vmatprep.subr.mxu0 0.0
        %1256 = vmatpush1.msra.mxu0 0.0
        %1257 = vmatprep.subr.mxu0 0.0
        %1258 = vmatpush1.msra.mxu0 0.0
        %1259 = vmatprep.subr.mxu0 0.0
        %1260 = vmatpush1.msra.mxu0 0.0
        %1261 = vmatprep.subr.mxu0 0.0
        %1262 = vmatpush1.msra.mxu0 0.0
        %1263 = vmatprep.subr.mxu0 0.0
        %1264 = vmatpush1.msra.mxu0 0.0
        %1265 = vmatprep.subr.mxu0 0.0
        %1266 = vmatpush1.msra.mxu0 0.0
        %1267 = vmatprep.subr.mxu0 0.0
        %1268 = vmatpush1.msra.mxu0 0.0
        %1269 = vmatprep.subr.mxu0 0.0
        %1270 = vmatpush1.msra.mxu0 0.0
        %1271 = vmatprep.subr.mxu0 0.0
        %1272 = vmatpush1.msra.mxu0 0.0
        %1273 = vmatprep.subr.mxu0 0.0
        %1274 = vmatpush1.msra.mxu0 0.0
        %1275 = vmatprep.subr.mxu0 0.0
        %1276 = vmatpush1.msra.mxu0 0.0
        %1277 = vmatprep.subr.mxu0 0.0
        %1278 = vmatpush1.msra.mxu0 0.0
        %1279 = vmatprep.subr.mxu0 0.0
        %1280 = vmatpush1.msra.mxu0 0.0
        %1281 = vmatprep.subr.mxu0 0.0
        %1282 = vmatpush1.msra.mxu0 0.0
        %1283 = vmatprep.subr.mxu0 %v1249
        %1284 = vmatpush1.msra.mxu0 %v1247
        %1285 = vmatprep.subr.mxu0 0.0
        %1286 = vmatpush2.msra.mxu0 0.0
        %1287 = vmatprep.subr.mxu0 0.0
        %1288 = vmatpush2.msra.mxu0 0.0
        %1289 = vmatprep.subr.mxu0 0.0
        %1290 = vmatpush2.msra.mxu0 0.0
        %1291 = vmatprep.subr.mxu0 0.0
        %1292 = vmatpush2.msra.mxu0 0.0
        %1293 = vmatprep.subr.mxu0 0.0
        %1294 = vmatpush2.msra.mxu0 0.0
        %1295 = vmatprep.subr.mxu0 0.0
        %1296 = vmatpush2.msra.mxu0 0.0
        %1297 = vmatprep.subr.mxu0 0.0
        %1298 = vmatpush2.msra.mxu0 0.0
        %1299 = vmatprep.subr.mxu0 0.0
        %1300 = vmatpush2.msra.mxu0 0.0
        %1301 = vmatprep.subr.mxu0 0.0
        %1302 = vmatpush2.msra.mxu0 0.0
        %1303 = vmatprep.subr.mxu0 0.0
        %1304 = vmatpush2.msra.mxu0 0.0
        %1305 = vmatprep.subr.mxu0 0.0
        %1306 = vmatpush2.msra.mxu0 0.0
        %1307 = vmatprep.subr.mxu0 0.0
        %1308 = vmatpush2.msra.mxu0 0.0
        %1309 = vmatprep.subr.mxu0 0.0
        %1310 = vmatpush2.msra.mxu0 0.0
        %1311 = vmatprep.subr.mxu0 0.0
        %1312 = vmatpush2.msra.mxu0 0.0
        %1313 = vmatprep.subr.mxu0 0.0
        %1314 = vmatpush2.msra.mxu0 0.0
        %1315 = vmatprep.subr.mxu0 0.0
        %1316 = vmatpush2.msra.mxu0 0.0
        %1317 = vmatprep.mubr.f32.mxu0 0.0
        %1318 = vmatmul.mubr.f32.gmra.mxu0 %v1245
        %v1319 = vpop.f32.mrf.mxu0
        %v1320 = vadd.f32 0.0, %v1319
        %v1321 = vpop.f32.mrf.mxu0
        %v1322 = vadd.f32 0.0, %v1321
        %1323 = vdwg.mxu0
        %1324 = vmatprep.subr.mxu0 0.0
        %1325 = vmatpush1.msra.mxu0 0.0
        %1326 = vmatprep.subr.mxu0 0.0
        %1327 = vmatpush1.msra.mxu0 0.0
        %1328 = vmatprep.subr.mxu0 0.0
        %1329 = vmatpush1.msra.mxu0 0.0
        %1330 = vmatprep.subr.mxu0 0.0
        %1331 = vmatpush1.msra.mxu0 0.0
        %1332 = vmatprep.subr.mxu0 0.0
        %1333 = vmatpush1.msra.mxu0 0.0
        %1334 = vmatprep.subr.mxu0 0.0
        %1335 = vmatpush1.msra.mxu0 0.0
        %1336 = vmatprep.subr.mxu0 0.0
        %1337 = vmatpush1.msra.mxu0 0.0
        %1338 = vmatprep.subr.mxu0 0.0
        %1339 = vmatpush1.msra.mxu0 0.0
        %1340 = vmatprep.subr.mxu0 0.0
        %1341 = vmatpush1.msra.mxu0 0.0
        %1342 = vmatprep.subr.mxu0 0.0
        %1343 = vmatpush1.msra.mxu0 0.0
        %1344 = vmatprep.subr.mxu0 0.0
        %1345 = vmatpush1.msra.mxu0 0.0
        %1346 = vmatprep.subr.mxu0 0.0
        %1347 = vmatpush1.msra.mxu0 0.0
        %1348 = vmatprep.subr.mxu0 0.0
        %1349 = vmatpush1.msra.mxu0 0.0
        %1350 = vmatprep.subr.mxu0 0.0
        %1351 = vmatpush1.msra.mxu0 0.0
        %1352 = vmatprep.subr.mxu0 0.0
        %1353 = vmatpush1.msra.mxu0 0.0
        %1354 = vmatprep.subr.mxu0 0.0
        %1355 = vmatpush1.msra.mxu0 %v1251
        %1356 = vmatprep.subr.mxu0 0.0
        %1357 = vmatpush2.msra.mxu0 0.0
        %1358 = vmatprep.subr.mxu0 0.0
        %1359 = vmatpush2.msra.mxu0 0.0
        %1360 = vmatprep.subr.mxu0 0.0
        %1361 = vmatpush2.msra.mxu0 0.0
        %1362 = vmatprep.subr.mxu0 0.0
        %1363 = vmatpush2.msra.mxu0 0.0
        %1364 = vmatprep.subr.mxu0 0.0
        %1365 = vmatpush2.msra.mxu0 0.0
        %1366 = vmatprep.subr.mxu0 0.0
        %1367 = vmatpush2.msra.mxu0 0.0
        %1368 = vmatprep.subr.mxu0 0.0
        %1369 = vmatpush2.msra.mxu0 0.0
        %1370 = vmatprep.subr.mxu0 0.0
        %1371 = vmatpush2.msra.mxu0 0.0
        %1372 = vmatprep.subr.mxu0 0.0
        %1373 = vmatpush2.msra.mxu0 0.0
        %1374 = vmatprep.subr.mxu0 0.0
        %1375 = vmatpush2.msra.mxu0 0.0
        %1376 = vmatprep.subr.mxu0 0.0
        %1377 = vmatpush2.msra.mxu0 0.0
        %1378 = vmatprep.subr.mxu0 0.0
        %1379 = vmatpush2.msra.mxu0 0.0
        %1380 = vmatprep.subr.mxu0 0.0
        %1381 = vmatpush2.msra.mxu0 0.0
        %1382 = vmatprep.subr.mxu0 0.0
        %1383 = vmatpush2.msra.mxu0 0.0
        %1384 = vmatprep.subr.mxu0 0.0
        %1385 = vmatpush2.msra.mxu0 0.0
        %1386 = vmatprep.subr.mxu0 0.0
        %1387 = vmatpush2.msra.mxu0 0.0
        %1388 = vmatprep.mubr.f32.mxu0 0.0
        %1389 = vmatmul.mubr.f32.gmra.mxu0 %v1245
        %v1390 = vpop.f32.mrf.mxu0
        %v1391 = vadd.f32 0.0, %v1390
        %v1392 = vpop.f32.mrf.mxu0
        %1393 = vdwg.mxu0
        %v1394 = vld [vmem:[#allocation2] sm:$0xff]
        %v1395 = vld [vmem:[#allocation2 + $0x8] sm:$0xf]
        %v1398 = vcombine.low %v1320, %v1322
        %v1400 = vadd.f32 %v1394, %v1398
        %v1401 = vadd.f32 %v1395, %v1391
        %1402 = vst [vmem:[#allocation2] sm:$0xff] %v1400
        %1403 = vst.msk [vmem:[#allocation2 + $0x8] sm:$0xf] %vm522, %v1401
        %v1404 = vld [vmem:[%s357] sm:$0xff]
        %v1405 = vld [vmem:[%s357 + $0x8] sm:$0xf]
        %s1406 = scalar_lea.vmem %s2, 24
        %v1407 = vld [vmem:[%s1406] sm:$0xf]
        %v1410 = vcombine.high %v1404, %v1404
        %1411 = vrot.lane.b32.xlu0 %v1404, 92
        %v1412 = vpop.permute.xlu0 %1411
        %1413 = vrot.lane.b32.xlu0 %v1410, 92
        %v1414 = vpop.permute.xlu0 %1413
        %1415 = vrot.lane.b32.xlu0 %v1405, 92
        %v1416 = vpop.permute.xlu0 %1415
        %vm1417 = vcmask 752640
        %v1418 = vsel %vm1417, %v1412, %v1414
        %v1419 = vsel %vm1417, %v1414, %v1416
        %v1421 = vsel %vm365, %v1407, 0
        %v1423 = vsel %vm369, %v1418, 0
        %v1425 = vsel %vm369, %v1419, 0
        %v1427 = vsel %vm369, %v1416, 0
        %1429 = vmatprep.subr.mxu0 0.0
        %1430 = vmatpush1.msra.mxu0 0.0
        %1431 = vmatprep.subr.mxu0 0.0
        %1432 = vmatpush1.msra.mxu0 0.0
        %1433 = vmatprep.subr.mxu0 0.0
        %1434 = vmatpush1.msra.mxu0 0.0
        %1435 = vmatprep.subr.mxu0 0.0
        %1436 = vmatpush1.msra.mxu0 0.0
        %1437 = vmatprep.subr.mxu0 0.0
        %1438 = vmatpush1.msra.mxu0 0.0
        %1439 = vmatprep.subr.mxu0 0.0
        %1440 = vmatpush1.msra.mxu0 0.0
        %1441 = vmatprep.subr.mxu0 0.0
        %1442 = vmatpush1.msra.mxu0 0.0
        %1443 = vmatprep.subr.mxu0 0.0
        %1444 = vmatpush1.msra.mxu0 0.0
        %1445 = vmatprep.subr.mxu0 0.0
        %1446 = vmatpush1.msra.mxu0 0.0
        %1447 = vmatprep.subr.mxu0 0.0
        %1448 = vmatpush1.msra.mxu0 0.0
        %1449 = vmatprep.subr.mxu0 0.0
        %1450 = vmatpush1.msra.mxu0 0.0
        %1451 = vmatprep.subr.mxu0 0.0
        %1452 = vmatpush1.msra.mxu0 0.0
        %1453 = vmatprep.subr.mxu0 0.0
        %1454 = vmatpush1.msra.mxu0 0.0
        %1455 = vmatprep.subr.mxu0 0.0
        %1456 = vmatpush1.msra.mxu0 0.0
        %1457 = vmatprep.subr.mxu0 0.0
        %1458 = vmatpush1.msra.mxu0 0.0
        %1459 = vmatprep.subr.mxu0 %v1425
        %1460 = vmatpush1.msra.mxu0 %v1423
        %1461 = vmatprep.subr.mxu0 0.0
        %1462 = vmatpush2.msra.mxu0 0.0
        %1463 = vmatprep.subr.mxu0 0.0
        %1464 = vmatpush2.msra.mxu0 0.0
        %1465 = vmatprep.subr.mxu0 0.0
        %1466 = vmatpush2.msra.mxu0 0.0
        %1467 = vmatprep.subr.mxu0 0.0
        %1468 = vmatpush2.msra.mxu0 0.0
        %1469 = vmatprep.subr.mxu0 0.0
        %1470 = vmatpush2.msra.mxu0 0.0
        %1471 = vmatprep.subr.mxu0 0.0
        %1472 = vmatpush2.msra.mxu0 0.0
        %1473 = vmatprep.subr.mxu0 0.0
        %1474 = vmatpush2.msra.mxu0 0.0
        %1475 = vmatprep.subr.mxu0 0.0
        %1476 = vmatpush2.msra.mxu0 0.0
        %1477 = vmatprep.subr.mxu0 0.0
        %1478 = vmatpush2.msra.mxu0 0.0
        %1479 = vmatprep.subr.mxu0 0.0
        %1480 = vmatpush2.msra.mxu0 0.0
        %1481 = vmatprep.subr.mxu0 0.0
        %1482 = vmatpush2.msra.mxu0 0.0
        %1483 = vmatprep.subr.mxu0 0.0
        %1484 = vmatpush2.msra.mxu0 0.0
        %1485 = vmatprep.subr.mxu0 0.0
        %1486 = vmatpush2.msra.mxu0 0.0
        %1487 = vmatprep.subr.mxu0 0.0
        %1488 = vmatpush2.msra.mxu0 0.0
        %1489 = vmatprep.subr.mxu0 0.0
        %1490 = vmatpush2.msra.mxu0 0.0
        %1491 = vmatprep.subr.mxu0 0.0
        %1492 = vmatpush2.msra.mxu0 0.0
        %1493 = vmatprep.mubr.f32.mxu0 0.0
        %1494 = vmatmul.mubr.f32.gmra.mxu0 %v1421
        %v1495 = vpop.f32.mrf.mxu0
        %v1496 = vadd.f32 0.0, %v1495
        %v1497 = vpop.f32.mrf.mxu0
        %v1498 = vadd.f32 0.0, %v1497
        %1499 = vdwg.mxu0
        %1500 = vmatprep.subr.mxu0 0.0
        %1501 = vmatpush1.msra.mxu0 0.0
        %1502 = vmatprep.subr.mxu0 0.0
        %1503 = vmatpush1.msra.mxu0 0.0
        %1504 = vmatprep.subr.mxu0 0.0
        %1505 = vmatpush1.msra.mxu0 0.0
        %1506 = vmatprep.subr.mxu0 0.0
        %1507 = vmatpush1.msra.mxu0 0.0
        %1508 = vmatprep.subr.mxu0 0.0
        %1509 = vmatpush1.msra.mxu0 0.0
        %1510 = vmatprep.subr.mxu0 0.0
        %1511 = vmatpush1.msra.mxu0 0.0
        %1512 = vmatprep.subr.mxu0 0.0
        %1513 = vmatpush1.msra.mxu0 0.0
        %1514 = vmatprep.subr.mxu0 0.0
        %1515 = vmatpush1.msra.mxu0 0.0
        %1516 = vmatprep.subr.mxu0 0.0
        %1517 = vmatpush1.msra.mxu0 0.0
        %1518 = vmatprep.subr.mxu0 0.0
        %1519 = vmatpush1.msra.mxu0 0.0
        %1520 = vmatprep.subr.mxu0 0.0
        %1521 = vmatpush1.msra.mxu0 0.0
        %1522 = vmatprep.subr.mxu0 0.0
        %1523 = vmatpush1.msra.mxu0 0.0
        %1524 = vmatprep.subr.mxu0 0.0
        %1525 = vmatpush1.msra.mxu0 0.0
        %1526 = vmatprep.subr.mxu0 0.0
        %1527 = vmatpush1.msra.mxu0 0.0
        %1528 = vmatprep.subr.mxu0 0.0
        %1529 = vmatpush1.msra.mxu0 0.0
        %1530 = vmatprep.subr.mxu0 0.0
        %1531 = vmatpush1.msra.mxu0 %v1427
        %1532 = vmatprep.subr.mxu0 0.0
        %1533 = vmatpush2.msra.mxu0 0.0
        %1534 = vmatprep.subr.mxu0 0.0
        %1535 = vmatpush2.msra.mxu0 0.0
        %1536 = vmatprep.subr.mxu0 0.0
        %1537 = vmatpush2.msra.mxu0 0.0
        %1538 = vmatprep.subr.mxu0 0.0
        %1539 = vmatpush2.msra.mxu0 0.0
        %1540 = vmatprep.subr.mxu0 0.0
        %1541 = vmatpush2.msra.mxu0 0.0
        %1542 = vmatprep.subr.mxu0 0.0
        %1543 = vmatpush2.msra.mxu0 0.0
        %1544 = vmatprep.subr.mxu0 0.0
        %1545 = vmatpush2.msra.mxu0 0.0
        %1546 = vmatprep.subr.mxu0 0.0
        %1547 = vmatpush2.msra.mxu0 0.0
        %1548 = vmatprep.subr.mxu0 0.0
        %1549 = vmatpush2.msra.mxu0 0.0
        %1550 = vmatprep.subr.mxu0 0.0
        %1551 = vmatpush2.msra.mxu0 0.0
        %1552 = vmatprep.subr.mxu0 0.0
        %1553 = vmatpush2.msra.mxu0 0.0
        %1554 = vmatprep.subr.mxu0 0.0
        %1555 = vmatpush2.msra.mxu0 0.0
        %1556 = vmatprep.subr.mxu0 0.0
        %1557 = vmatpush2.msra.mxu0 0.0
        %1558 = vmatprep.subr.mxu0 0.0
        %1559 = vmatpush2.msra.mxu0 0.0
        %1560 = vmatprep.subr.mxu0 0.0
        %1561 = vmatpush2.msra.mxu0 0.0
        %1562 = vmatprep.subr.mxu0 0.0
        %1563 = vmatpush2.msra.mxu0 0.0
        %1564 = vmatprep.mubr.f32.mxu0 0.0
        %1565 = vmatmul.mubr.f32.gmra.mxu0 %v1421
        %v1566 = vpop.f32.mrf.mxu0
        %v1567 = vadd.f32 0.0, %v1566
        %v1568 = vpop.f32.mrf.mxu0
        %1569 = vdwg.mxu0
        %v1570 = vld [vmem:[#allocation2] sm:$0xff]
        %v1571 = vld [vmem:[#allocation2 + $0x8] sm:$0xf]
        %v1574 = vcombine.low %v1496, %v1498
        %v1576 = vadd.f32 %v1570, %v1574
        %v1577 = vadd.f32 %v1571, %v1567
        %1578 = vst [vmem:[#allocation2] sm:$0xff] %v1576
        %1579 = vst.msk [vmem:[#allocation2 + $0x8] sm:$0xf] %vm522, %v1577
        %v1580 = vld [vmem:[%s357] sm:$0xff]
        %v1581 = vld [vmem:[%s357 + $0x8] sm:$0xf]
        %s1582 = scalar_lea.vmem %s2, 28
        %v1583 = vld [vmem:[%s1582] sm:$0xf]
        %v1586 = vcombine.high %v1580, %v1580
        %1587 = vrot.lane.b32.xlu0 %v1580, 91
        %v1588 = vpop.permute.xlu0 %1587
        %1589 = vrot.lane.b32.xlu0 %v1586, 91
        %v1590 = vpop.permute.xlu0 %1589
        %1591 = vrot.lane.b32.xlu0 %v1581, 91
        %v1592 = vpop.permute.xlu0 %1591
        %vm1593 = vcmask 744448
        %v1594 = vsel %vm1593, %v1588, %v1590
        %v1595 = vsel %vm1593, %v1590, %v1592
        %v1597 = vsel %vm365, %v1583, 0
        %v1599 = vsel %vm369, %v1594, 0
        %v1601 = vsel %vm369, %v1595, 0
        %v1603 = vsel %vm369, %v1592, 0
        %1605 = vmatprep.subr.mxu0 0.0
        %1606 = vmatpush1.msra.mxu0 0.0
        %1607 = vmatprep.subr.mxu0 0.0
        %1608 = vmatpush1.msra.mxu0 0.0
        %1609 = vmatprep.subr.mxu0 0.0
        %1610 = vmatpush1.msra.mxu0 0.0
        %1611 = vmatprep.subr.mxu0 0.0
        %1612 = vmatpush1.msra.mxu0 0.0
        %1613 = vmatprep.subr.mxu0 0.0
        %1614 = vmatpush1.msra.mxu0 0.0
        %1615 = vmatprep.subr.mxu0 0.0
        %1616 = vmatpush1.msra.mxu0 0.0
        %1617 = vmatprep.subr.mxu0 0.0
        %1618 = vmatpush1.msra.mxu0 0.0
        %1619 = vmatprep.subr.mxu0 0.0
        %1620 = vmatpush1.msra.mxu0 0.0
        %1621 = vmatprep.subr.mxu0 0.0
        %1622 = vmatpush1.msra.mxu0 0.0
        %1623 = vmatprep.subr.mxu0 0.0
        %1624 = vmatpush1.msra.mxu0 0.0
        %1625 = vmatprep.subr.mxu0 0.0
        %1626 = vmatpush1.msra.mxu0 0.0
        %1627 = vmatprep.subr.mxu0 0.0
        %1628 = vmatpush1.msra.mxu0 0.0
        %1629 = vmatprep.subr.mxu0 0.0
        %1630 = vmatpush1.msra.mxu0 0.0
        %1631 = vmatprep.subr.mxu0 0.0
        %1632 = vmatpush1.msra.mxu0 0.0
        %1633 = vmatprep.subr.mxu0 0.0
        %1634 = vmatpush1.msra.mxu0 0.0
        %1635 = vmatprep.subr.mxu0 %v1601
        %1636 = vmatpush1.msra.mxu0 %v1599
        %1637 = vmatprep.subr.mxu0 0.0
        %1638 = vmatpush2.msra.mxu0 0.0
        %1639 = vmatprep.subr.mxu0 0.0
        %1640 = vmatpush2.msra.mxu0 0.0
        %1641 = vmatprep.subr.mxu0 0.0
        %1642 = vmatpush2.msra.mxu0 0.0
        %1643 = vmatprep.subr.mxu0 0.0
        %1644 = vmatpush2.msra.mxu0 0.0
        %1645 = vmatprep.subr.mxu0 0.0
        %1646 = vmatpush2.msra.mxu0 0.0
        %1647 = vmatprep.subr.mxu0 0.0
        %1648 = vmatpush2.msra.mxu0 0.0
        %1649 = vmatprep.subr.mxu0 0.0
        %1650 = vmatpush2.msra.mxu0 0.0
        %1651 = vmatprep.subr.mxu0 0.0
        %1652 = vmatpush2.msra.mxu0 0.0
        %1653 = vmatprep.subr.mxu0 0.0
        %1654 = vmatpush2.msra.mxu0 0.0
        %1655 = vmatprep.subr.mxu0 0.0
        %1656 = vmatpush2.msra.mxu0 0.0
        %1657 = vmatprep.subr.mxu0 0.0
        %1658 = vmatpush2.msra.mxu0 0.0
        %1659 = vmatprep.subr.mxu0 0.0
        %1660 = vmatpush2.msra.mxu0 0.0
        %1661 = vmatprep.subr.mxu0 0.0
        %1662 = vmatpush2.msra.mxu0 0.0
        %1663 = vmatprep.subr.mxu0 0.0
        %1664 = vmatpush2.msra.mxu0 0.0
        %1665 = vmatprep.subr.mxu0 0.0
        %1666 = vmatpush2.msra.mxu0 0.0
        %1667 = vmatprep.subr.mxu0 0.0
        %1668 = vmatpush2.msra.mxu0 0.0
        %1669 = vmatprep.mubr.f32.mxu0 0.0
        %1670 = vmatmul.mubr.f32.gmra.mxu0 %v1597
        %v1671 = vpop.f32.mrf.mxu0
        %v1672 = vadd.f32 0.0, %v1671
        %v1673 = vpop.f32.mrf.mxu0
        %v1674 = vadd.f32 0.0, %v1673
        %1675 = vdwg.mxu0
        %1676 = vmatprep.subr.mxu0 0.0
        %1677 = vmatpush1.msra.mxu0 0.0
        %1678 = vmatprep.subr.mxu0 0.0
        %1679 = vmatpush1.msra.mxu0 0.0
        %1680 = vmatprep.subr.mxu0 0.0
        %1681 = vmatpush1.msra.mxu0 0.0
        %1682 = vmatprep.subr.mxu0 0.0
        %1683 = vmatpush1.msra.mxu0 0.0
        %1684 = vmatprep.subr.mxu0 0.0
        %1685 = vmatpush1.msra.mxu0 0.0
        %1686 = vmatprep.subr.mxu0 0.0
        %1687 = vmatpush1.msra.mxu0 0.0
        %1688 = vmatprep.subr.mxu0 0.0
        %1689 = vmatpush1.msra.mxu0 0.0
        %1690 = vmatprep.subr.mxu0 0.0
        %1691 = vmatpush1.msra.mxu0 0.0
        %1692 = vmatprep.subr.mxu0 0.0
        %1693 = vmatpush1.msra.mxu0 0.0
        %1694 = vmatprep.subr.mxu0 0.0
        %1695 = vmatpush1.msra.mxu0 0.0
        %1696 = vmatprep.subr.mxu0 0.0
        %1697 = vmatpush1.msra.mxu0 0.0
        %1698 = vmatprep.subr.mxu0 0.0
        %1699 = vmatpush1.msra.mxu0 0.0
        %1700 = vmatprep.subr.mxu0 0.0
        %1701 = vmatpush1.msra.mxu0 0.0
        %1702 = vmatprep.subr.mxu0 0.0
        %1703 = vmatpush1.msra.mxu0 0.0
        %1704 = vmatprep.subr.mxu0 0.0
        %1705 = vmatpush1.msra.mxu0 0.0
        %1706 = vmatprep.subr.mxu0 0.0
        %1707 = vmatpush1.msra.mxu0 %v1603
        %1708 = vmatprep.subr.mxu0 0.0
        %1709 = vmatpush2.msra.mxu0 0.0
        %1710 = vmatprep.subr.mxu0 0.0
        %1711 = vmatpush2.msra.mxu0 0.0
        %1712 = vmatprep.subr.mxu0 0.0
        %1713 = vmatpush2.msra.mxu0 0.0
        %1714 = vmatprep.subr.mxu0 0.0
        %1715 = vmatpush2.msra.mxu0 0.0
        %1716 = vmatprep.subr.mxu0 0.0
        %1717 = vmatpush2.msra.mxu0 0.0
        %1718 = vmatprep.subr.mxu0 0.0
        %1719 = vmatpush2.msra.mxu0 0.0
        %1720 = vmatprep.subr.mxu0 0.0
        %1721 = vmatpush2.msra.mxu0 0.0
        %1722 = vmatprep.subr.mxu0 0.0
        %1723 = vmatpush2.msra.mxu0 0.0
        %1724 = vmatprep.subr.mxu0 0.0
        %1725 = vmatpush2.msra.mxu0 0.0
        %1726 = vmatprep.subr.mxu0 0.0
        %1727 = vmatpush2.msra.mxu0 0.0
        %1728 = vmatprep.subr.mxu0 0.0
        %1729 = vmatpush2.msra.mxu0 0.0
        %1730 = vmatprep.subr.mxu0 0.0
        %1731 = vmatpush2.msra.mxu0 0.0
        %1732 = vmatprep.subr.mxu0 0.0
        %1733 = vmatpush2.msra.mxu0 0.0
        %1734 = vmatprep.subr.mxu0 0.0
        %1735 = vmatpush2.msra.mxu0 0.0
        %1736 = vmatprep.subr.mxu0 0.0
        %1737 = vmatpush2.msra.mxu0 0.0
        %1738 = vmatprep.subr.mxu0 0.0
        %1739 = vmatpush2.msra.mxu0 0.0
        %1740 = vmatprep.mubr.f32.mxu0 0.0
        %1741 = vmatmul.mubr.f32.gmra.mxu0 %v1597
        %v1742 = vpop.f32.mrf.mxu0
        %v1743 = vadd.f32 0.0, %v1742
        %v1744 = vpop.f32.mrf.mxu0
        %1745 = vdwg.mxu0
        %v1746 = vld [vmem:[#allocation2] sm:$0xff]
        %v1747 = vld [vmem:[#allocation2 + $0x8] sm:$0xf]
        %v1750 = vcombine.low %v1672, %v1674
        %v1752 = vadd.f32 %v1746, %v1750
        %v1753 = vadd.f32 %v1747, %v1743
        %1754 = vst [vmem:[#allocation2] sm:$0xff] %v1752
        %1755 = vst.msk [vmem:[#allocation2 + $0x8] sm:$0xf] %vm522, %v1753
        %v1756 = vld [vmem:[%s357] sm:$0xff]
        %v1757 = vld [vmem:[%s357 + $0x8] sm:$0xf]
        %s1758 = scalar_lea.vmem %s2, 32
        %v1759 = vld [vmem:[%s1758] sm:$0xf]
        %v1762 = vcombine.high %v1756, %v1756
        %1763 = vrot.lane.b32.xlu0 %v1756, 90
        %v1764 = vpop.permute.xlu0 %1763
        %1765 = vrot.lane.b32.xlu0 %v1762, 90
        %v1766 = vpop.permute.xlu0 %1765
        %1767 = vrot.lane.b32.xlu0 %v1757, 90
        %v1768 = vpop.permute.xlu0 %1767
        %vm1769 = vcmask 736256
        %v1770 = vsel %vm1769, %v1764, %v1766
        %v1771 = vsel %vm1769, %v1766, %v1768
        %v1773 = vsel %vm365, %v1759, 0
        %v1775 = vsel %vm369, %v1770, 0
        %v1777 = vsel %vm369, %v1771, 0
        %v1779 = vsel %vm369, %v1768, 0
        %1781 = vmatprep.subr.mxu0 0.0
        %1782 = vmatpush1.msra.mxu0 0.0
        %1783 = vmatprep.subr.mxu0 0.0
        %1784 = vmatpush1.msra.mxu0 0.0
        %1785 = vmatprep.subr.mxu0 0.0
        %1786 = vmatpush1.msra.mxu0 0.0
        %1787 = vmatprep.subr.mxu0 0.0
        %1788 = vmatpush1.msra.mxu0 0.0
        %1789 = vmatprep.subr.mxu0 0.0
        %1790 = vmatpush1.msra.mxu0 0.0
        %1791 = vmatprep.subr.mxu0 0.0
        %1792 = vmatpush1.msra.mxu0 0.0
        %1793 = vmatprep.subr.mxu0 0.0
        %1794 = vmatpush1.msra.mxu0 0.0
        %1795 = vmatprep.subr.mxu0 0.0
        %1796 = vmatpush1.msra.mxu0 0.0
        %1797 = vmatprep.subr.mxu0 0.0
        %1798 = vmatpush1.msra.mxu0 0.0
        %1799 = vmatprep.subr.mxu0 0.0
        %1800 = vmatpush1.msra.mxu0 0.0
        %1801 = vmatprep.subr.mxu0 0.0
        %1802 = vmatpush1.msra.mxu0 0.0
        %1803 = vmatprep.subr.mxu0 0.0
        %1804 = vmatpush1.msra.mxu0 0.0
        %1805 = vmatprep.subr.mxu0 0.0
        %1806 = vmatpush1.msra.mxu0 0.0
        %1807 = vmatprep.subr.mxu0 0.0
        %1808 = vmatpush1.msra.mxu0 0.0
        %1809 = vmatprep.subr.mxu0 0.0
        %1810 = vmatpush1.msra.mxu0 0.0
        %1811 = vmatprep.subr.mxu0 %v1777
        %1812 = vmatpush1.msra.mxu0 %v1775
        %1813 = vmatprep.subr.mxu0 0.0
        %1814 = vmatpush2.msra.mxu0 0.0
        %1815 = vmatprep.subr.mxu0 0.0
        %1816 = vmatpush2.msra.mxu0 0.0
        %1817 = vmatprep.subr.mxu0 0.0
        %1818 = vmatpush2.msra.mxu0 0.0
        %1819 = vmatprep.subr.mxu0 0.0
        %1820 = vmatpush2.msra.mxu0 0.0
        %1821 = vmatprep.subr.mxu0 0.0
        %1822 = vmatpush2.msra.mxu0 0.0
        %1823 = vmatprep.subr.mxu0 0.0
        %1824 = vmatpush2.msra.mxu0 0.0
        %1825 = vmatprep.subr.mxu0 0.0
        %1826 = vmatpush2.msra.mxu0 0.0
        %1827 = vmatprep.subr.mxu0 0.0
        %1828 = vmatpush2.msra.mxu0 0.0
        %1829 = vmatprep.subr.mxu0 0.0
        %1830 = vmatpush2.msra.mxu0 0.0
        %1831 = vmatprep.subr.mxu0 0.0
        %1832 = vmatpush2.msra.mxu0 0.0
        %1833 = vmatprep.subr.mxu0 0.0
        %1834 = vmatpush2.msra.mxu0 0.0
        %1835 = vmatprep.subr.mxu0 0.0
        %1836 = vmatpush2.msra.mxu0 0.0
        %1837 = vmatprep.subr.mxu0 0.0
        %1838 = vmatpush2.msra.mxu0 0.0
        %1839 = vmatprep.subr.mxu0 0.0
        %1840 = vmatpush2.msra.mxu0 0.0
        %1841 = vmatprep.subr.mxu0 0.0
        %1842 = vmatpush2.msra.mxu0 0.0
        %1843 = vmatprep.subr.mxu0 0.0
        %1844 = vmatpush2.msra.mxu0 0.0
        %1845 = vmatprep.mubr.f32.mxu0 0.0
        %1846 = vmatmul.mubr.f32.gmra.mxu0 %v1773
        %v1847 = vpop.f32.mrf.mxu0
        %v1848 = vadd.f32 0.0, %v1847
        %v1849 = vpop.f32.mrf.mxu0
        %v1850 = vadd.f32 0.0, %v1849
        %1851 = vdwg.mxu0
        %1852 = vmatprep.subr.mxu0 0.0
        %1853 = vmatpush1.msra.mxu0 0.0
        %1854 = vmatprep.subr.mxu0 0.0
        %1855 = vmatpush1.msra.mxu0 0.0
        %1856 = vmatprep.subr.mxu0 0.0
        %1857 = vmatpush1.msra.mxu0 0.0
        %1858 = vmatprep.subr.mxu0 0.0
        %1859 = vmatpush1.msra.mxu0 0.0
        %1860 = vmatprep.subr.mxu0 0.0
        %1861 = vmatpush1.msra.mxu0 0.0
        %1862 = vmatprep.subr.mxu0 0.0
        %1863 = vmatpush1.msra.mxu0 0.0
        %1864 = vmatprep.subr.mxu0 0.0
        %1865 = vmatpush1.msra.mxu0 0.0
        %1866 = vmatprep.subr.mxu0 0.0
        %1867 = vmatpush1.msra.mxu0 0.0
        %1868 = vmatprep.subr.mxu0 0.0
        %1869 = vmatpush1.msra.mxu0 0.0
        %1870 = vmatprep.subr.mxu0 0.0
        %1871 = vmatpush1.msra.mxu0 0.0
        %1872 = vmatprep.subr.mxu0 0.0
        %1873 = vmatpush1.msra.mxu0 0.0
        %1874 = vmatprep.subr.mxu0 0.0
        %1875 = vmatpush1.msra.mxu0 0.0
        %1876 = vmatprep.subr.mxu0 0.0
        %1877 = vmatpush1.msra.mxu0 0.0
        %1878 = vmatprep.subr.mxu0 0.0
        %1879 = vmatpush1.msra.mxu0 0.0
        %1880 = vmatprep.subr.mxu0 0.0
        %1881 = vmatpush1.msra.mxu0 0.0
        %1882 = vmatprep.subr.mxu0 0.0
        %1883 = vmatpush1.msra.mxu0 %v1779
        %1884 = vmatprep.subr.mxu0 0.0
        %1885 = vmatpush2.msra.mxu0 0.0
        %1886 = vmatprep.subr.mxu0 0.0
        %1887 = vmatpush2.msra.mxu0 0.0
        %1888 = vmatprep.subr.mxu0 0.0
        %1889 = vmatpush2.msra.mxu0 0.0
        %1890 = vmatprep.subr.mxu0 0.0
        %1891 = vmatpush2.msra.mxu0 0.0
        %1892 = vmatprep.subr.mxu0 0.0
        %1893 = vmatpush2.msra.mxu0 0.0
        %1894 = vmatprep.subr.mxu0 0.0
        %1895 = vmatpush2.msra.mxu0 0.0
        %1896 = vmatprep.subr.mxu0 0.0
        %1897 = vmatpush2.msra.mxu0 0.0
        %1898 = vmatprep.subr.mxu0 0.0
        %1899 = vmatpush2.msra.mxu0 0.0
        %1900 = vmatprep.subr.mxu0 0.0
        %1901 = vmatpush2.msra.mxu0 0.0
        %1902 = vmatprep.subr.mxu0 0.0
        %1903 = vmatpush2.msra.mxu0 0.0
        %1904 = vmatprep.subr.mxu0 0.0
        %1905 = vmatpush2.msra.mxu0 0.0
        %1906 = vmatprep.subr.mxu0 0.0
        %1907 = vmatpush2.msra.mxu0 0.0
        %1908 = vmatprep.subr.mxu0 0.0
        %1909 = vmatpush2.msra.mxu0 0.0
        %1910 = vmatprep.subr.mxu0 0.0
        %1911 = vmatpush2.msra.mxu0 0.0
        %1912 = vmatprep.subr.mxu0 0.0
        %1913 = vmatpush2.msra.mxu0 0.0
        %1914 = vmatprep.subr.mxu0 0.0
        %1915 = vmatpush2.msra.mxu0 0.0
        %1916 = vmatprep.mubr.f32.mxu0 0.0
        %1917 = vmatmul.mubr.f32.gmra.mxu0 %v1773
        %v1918 = vpop.f32.mrf.mxu0
        %v1919 = vadd.f32 0.0, %v1918
        %v1920 = vpop.f32.mrf.mxu0
        %1921 = vdwg.mxu0
        %v1922 = vld [vmem:[#allocation2] sm:$0xff]
        %v1923 = vld [vmem:[#allocation2 + $0x8] sm:$0xf]
        %v1926 = vcombine.low %v1848, %v1850
        %v1928 = vadd.f32 %v1922, %v1926
        %v1929 = vadd.f32 %v1923, %v1919
        %1930 = vst [vmem:[#allocation2] sm:$0xff] %v1928
        %1931 = vst.msk [vmem:[#allocation2 + $0x8] sm:$0xf] %vm522, %v1929
        %v1932 = vld [vmem:[#allocation2] sm:$0xff]
        %v1933 = vld [vmem:[#allocation2 + $0x8] sm:$0xf]
        %v1934 = vld [vmem:[%s3] sm:$0xf]
        %1936 = vset.pattern.permute.xlu0 0
        %1937 = vperm.xlu0 %1936, %v1934
        %v1938 = vpop.permute.xlu0 %1937
        %v1940 = vunpack.c.l.s4 839922192
        %v1941 = vunpack.c.0.s8 %v1940
        %v1942 = vlaneseq
        %v1943 = vshrl.u32 %v1942, 7
        %v1944 = vsub.s32 %v1941, %v1943
        %v1945 = vrot.slane %v1938, %v1944
        %v1947 = vadd.f32 %v1932, %v1945
        %v1948 = vadd.f32 %v1933, %v1945
        %v1949 = vmax.f32 %v1947, 0.0
        %v1950 = vmax.f32 %v1948, 0.0
        %vm1951 = vcmask 150528
        %1952 = vst.msk [vmem:[#allocation3] sm:$0xf] %vm1951, 0.0
        %vm1953 = vcmask 568728
        %1954 = vst.msk [vmem:[#allocation3 + $0x8] sm:$0xf] %vm1953, 0.0
        %v1956 = vlaneseq
        %v1957 = vshrl.u32 %v1956, 7
        %v1958 = vsub.s32 0, %v1957
        %v1959 = vrot.slane %v358, %v1958
        %v1960 = vlaneseq
        %v1961 = vshrl.u32 %v1960, 7
        %v1962 = vsub.s32 1, %v1961
        %v1963 = vrot.slane %v358, %v1962
        %v1964 = vlaneseq
        %v1965 = vshrl.u32 %v1964, 7
        %v1966 = vsub.s32 2, %v1965
        %v1967 = vrot.slane %v358, %v1966
        %v1969 = vcombine.low %v1959, %v1963
        %v1971 = vmul.f32 %v1949, %v1969
        %v1972 = vmul.f32 %v1950, %v1967
        %1975 = vrot.lane.b32.xlu0 %v1971, 19
        %v1976 = vpop.permute.xlu0 %1975
        %1977 = vrot.lane.b32.xlu0 %v1972, 19
        %v1978 = vpop.permute.xlu0 %1977
        %v1979 = vrot.slane %v1976, 4
        %vm1980 = vcmask 154624
        %v1981 = vsel %vm1980, %v1979, %v1976
        %v1982 = vsel %vm1980, %v1979, %v1978
        %vm1985 = vcmask 1043608
        %vm1986 = vcmask 1047556
        %vm1987 = vmor %vm1986, %vm1985
        %1988 = vst.msk [vmem:[#allocation3] sm:$0xff] %vm1987, %v1981
        %vm1989 = vcmask 412672
        %1990 = vst.msk [vmem:[#allocation3 + $0x8] sm:$0xf] %vm1989, %v1982
        %v1991 = vld [vmem:[#allocation3] sm:$0xff]
        %v1992 = vld [vmem:[#allocation3 + $0x8] sm:$0xf]
        %v1993 = vld [vmem:[%s4] sm:$0xf]
        %v1996 = vcombine.high %v1991, %v1991
        %v1998 = vsel %vm365, %v1993, 0
        %v2000 = vsel %vm369, %v1991, 0
        %v2002 = vsel %vm369, %v1996, 0
        %v2004 = vsel %vm369, %v1992, 0
        %2006 = vmatprep.subr.mxu0 0.0
        %2007 = vmatpush1.msra.mxu0 0.0
        %2008 = vmatprep.subr.mxu0 0.0
        %2009 = vmatpush1.msra.mxu0 0.0
        %2010 = vmatprep.subr.mxu0 0.0
        %2011 = vmatpush1.msra.mxu0 0.0
        %2012 = vmatprep.subr.mxu0 0.0
        %2013 = vmatpush1.msra.mxu0 0.0
        %2014 = vmatprep.subr.mxu0 0.0
        %2015 = vmatpush1.msra.mxu0 0.0
        %2016 = vmatprep.subr.mxu0 0.0
        %2017 = vmatpush1.msra.mxu0 0.0
        %2018 = vmatprep.subr.mxu0 0.0
        %2019 = vmatpush1.msra.mxu0 0.0
        %2020 = vmatprep.subr.mxu0 0.0
        %2021 = vmatpush1.msra.mxu0 0.0
        %2022 = vmatprep.subr.mxu0 0.0
        %2023 = vmatpush1.msra.mxu0 0.0
        %2024 = vmatprep.subr.mxu0 0.0
        %2025 = vmatpush1.msra.mxu0 0.0
        %2026 = vmatprep.subr.mxu0 0.0
        %2027 = vmatpush1.msra.mxu0 0.0
        %2028 = vmatprep.subr.mxu0 0.0
        %2029 = vmatpush1.msra.mxu0 0.0
        %2030 = vmatprep.subr.mxu0 0.0
        %2031 = vmatpush1.msra.mxu0 0.0
        %2032 = vmatprep.subr.mxu0 0.0
        %2033 = vmatpush1.msra.mxu0 0.0
        %2034 = vmatprep.subr.mxu0 0.0
        %2035 = vmatpush1.msra.mxu0 0.0
        %2036 = vmatprep.subr.mxu0 %v2002
        %2037 = vmatpush1.msra.mxu0 %v2000
        %2038 = vmatprep.subr.mxu0 0.0
        %2039 = vmatpush2.msra.mxu0 0.0
        %2040 = vmatprep.subr.mxu0 0.0
        %2041 = vmatpush2.msra.mxu0 0.0
        %2042 = vmatprep.subr.mxu0 0.0
        %2043 = vmatpush2.msra.mxu0 0.0
        %2044 = vmatprep.subr.mxu0 0.0
        %2045 = vmatpush2.msra.mxu0 0.0
        %2046 = vmatprep.subr.mxu0 0.0
        %2047 = vmatpush2.msra.mxu0 0.0
        %2048 = vmatprep.subr.mxu0 0.0
        %2049 = vmatpush2.msra.mxu0 0.0
        %2050 = vmatprep.subr.mxu0 0.0
        %2051 = vmatpush2.msra.mxu0 0.0
        %2052 = vmatprep.subr.mxu0 0.0
        %2053 = vmatpush2.msra.mxu0 0.0
        %2054 = vmatprep.subr.mxu0 0.0
        %2055 = vmatpush2.msra.mxu0 0.0
        %2056 = vmatprep.subr.mxu0 0.0
        %2057 = vmatpush2.msra.mxu0 0.0
        %2058 = vmatprep.subr.mxu0 0.0
        %2059 = vmatpush2.msra.mxu0 0.0
        %2060 = vmatprep.subr.mxu0 0.0
        %2061 = vmatpush2.msra.mxu0 0.0
        %2062 = vmatprep.subr.mxu0 0.0
        %2063 = vmatpush2.msra.mxu0 0.0
        %2064 = vmatprep.subr.mxu0 0.0
        %2065 = vmatpush2.msra.mxu0 0.0
        %2066 = vmatprep.subr.mxu0 0.0
        %2067 = vmatpush2.msra.mxu0 0.0
        %2068 = vmatprep.subr.mxu0 0.0
        %2069 = vmatpush2.msra.mxu0 0.0
        %2070 = vmatprep.mubr.f32.mxu0 0.0
        %2071 = vmatmul.mubr.f32.gmra.mxu0 %v1998
        %v2072 = vpop.f32.mrf.mxu0
        %v2073 = vadd.f32 0.0, %v2072
        %v2074 = vpop.f32.mrf.mxu0
        %v2075 = vadd.f32 0.0, %v2074
        %2076 = vdwg.mxu0
        %2077 = vmatprep.subr.mxu0 0.0
        %2078 = vmatpush1.msra.mxu0 0.0
        %2079 = vmatprep.subr.mxu0 0.0
        %2080 = vmatpush1.msra.mxu0 0.0
        %2081 = vmatprep.subr.mxu0 0.0
        %2082 = vmatpush1.msra.mxu0 0.0
        %2083 = vmatprep.subr.mxu0 0.0
        %2084 = vmatpush1.msra.mxu0 0.0
        %2085 = vmatprep.subr.mxu0 0.0
        %2086 = vmatpush1.msra.mxu0 0.0
        %2087 = vmatprep.subr.mxu0 0.0
        %2088 = vmatpush1.msra.mxu0 0.0
        %2089 = vmatprep.subr.mxu0 0.0
        %2090 = vmatpush1.msra.mxu0 0.0
        %2091 = vmatprep.subr.mxu0 0.0
        %2092 = vmatpush1.msra.mxu0 0.0
        %2093 = vmatprep.subr.mxu0 0.0
        %2094 = vmatpush1.msra.mxu0 0.0
        %2095 = vmatprep.subr.mxu0 0.0
        %2096 = vmatpush1.msra.mxu0 0.0
        %2097 = vmatprep.subr.mxu0 0.0
        %2098 = vmatpush1.msra.mxu0 0.0
        %2099 = vmatprep.subr.mxu0 0.0
        %2100 = vmatpush1.msra.mxu0 0.0
        %2101 = vmatprep.subr.mxu0 0.0
        %2102 = vmatpush1.msra.mxu0 0.0
        %2103 = vmatprep.subr.mxu0 0.0
        %2104 = vmatpush1.msra.mxu0 0.0
        %2105 = vmatprep.subr.mxu0 0.0
        %2106 = vmatpush1.msra.mxu0 0.0
        %2107 = vmatprep.subr.mxu0 0.0
        %2108 = vmatpush1.msra.mxu0 %v2004
        %2109 = vmatprep.subr.mxu0 0.0
        %2110 = vmatpush2.msra.mxu0 0.0
        %2111 = vmatprep.subr.mxu0 0.0
        %2112 = vmatpush2.msra.mxu0 0.0
        %2113 = vmatprep.subr.mxu0 0.0
        %2114 = vmatpush2.msra.mxu0 0.0
        %2115 = vmatprep.subr.mxu0 0.0
        %2116 = vmatpush2.msra.mxu0 0.0
        %2117 = vmatprep.subr.mxu0 0.0
        %2118 = vmatpush2.msra.mxu0 0.0
        %2119 = vmatprep.subr.mxu0 0.0
        %2120 = vmatpush2.msra.mxu0 0.0
        %2121 = vmatprep.subr.mxu0 0.0
        %2122 = vmatpush2.msra.mxu0 0.0
        %2123 = vmatprep.subr.mxu0 0.0
        %2124 = vmatpush2.msra.mxu0 0.0
        %2125 = vmatprep.subr.mxu0 0.0
        %2126 = vmatpush2.msra.mxu0 0.0
        %2127 = vmatprep.subr.mxu0 0.0
        %2128 = vmatpush2.msra.mxu0 0.0
        %2129 = vmatprep.subr.mxu0 0.0
        %2130 = vmatpush2.msra.mxu0 0.0
        %2131 = vmatprep.subr.mxu0 0.0
        %2132 = vmatpush2.msra.mxu0 0.0
        %2133 = vmatprep.subr.mxu0 0.0
        %2134 = vmatpush2.msra.mxu0 0.0
        %2135 = vmatprep.subr.mxu0 0.0
        %2136 = vmatpush2.msra.mxu0 0.0
        %2137 = vmatprep.subr.mxu0 0.0
        %2138 = vmatpush2.msra.mxu0 0.0
        %2139 = vmatprep.subr.mxu0 0.0
        %2140 = vmatpush2.msra.mxu0 0.0
        %2141 = vmatprep.mubr.f32.mxu0 0.0
        %2142 = vmatmul.mubr.f32.gmra.mxu0 %v1998
        %v2143 = vpop.f32.mrf.mxu0
        %v2144 = vadd.f32 0.0, %v2143
        %v2145 = vpop.f32.mrf.mxu0
        %2146 = vdwg.mxu0
        %v2149 = vcombine.low %v2073, %v2075
        %2151 = vst [vmem:[#allocation2] sm:$0xff] %v2149
        %2152 = vst.msk [vmem:[#allocation2 + $0x8] sm:$0xf] %vm522, %v2144
        %v2153 = vld [vmem:[#allocation3] sm:$0xff]
        %v2154 = vld [vmem:[#allocation3 + $0x8] sm:$0xf]
        %s2155 = scalar_lea.vmem %s4, 4
        %v2156 = vld [vmem:[%s2155] sm:$0xf]
        %v2159 = vcombine.high %v2153, %v2153
        %2160 = vrot.lane.b32.xlu0 %v2153, 127
        %v2161 = vpop.permute.xlu0 %2160
        %2162 = vrot.lane.b32.xlu0 %v2159, 127
        %v2163 = vpop.permute.xlu0 %2162
        %2164 = vrot.lane.b32.xlu0 %v2154, 127
        %v2165 = vpop.permute.xlu0 %2164
        %v2166 = vsel %vm537, %v2161, %v2163
        %v2167 = vsel %vm537, %v2163, %v2165
        %v2169 = vsel %vm365, %v2156, 0
        %v2171 = vsel %vm369, %v2166, 0
        %v2173 = vsel %vm369, %v2167, 0
        %v2175 = vsel %vm369, %v2165, 0
        %2177 = vmatprep.subr.mxu0 0.0
        %2178 = vmatpush1.msra.mxu0 0.0
        %2179 = vmatprep.subr.mxu0 0.0
        %2180 = vmatpush1.msra.mxu0 0.0
        %2181 = vmatprep.subr.mxu0 0.0
        %2182 = vmatpush1.msra.mxu0 0.0
        %2183 = vmatprep.subr.mxu0 0.0
        %2184 = vmatpush1.msra.mxu0 0.0
        %2185 = vmatprep.subr.mxu0 0.0
        %2186 = vmatpush1.msra.mxu0 0.0
        %2187 = vmatprep.subr.mxu0 0.0
        %2188 = vmatpush1.msra.mxu0 0.0
        %2189 = vmatprep.subr.mxu0 0.0
        %2190 = vmatpush1.msra.mxu0 0.0
        %2191 = vmatprep.subr.mxu0 0.0
        %2192 = vmatpush1.msra.mxu0 0.0
        %2193 = vmatprep.subr.mxu0 0.0
        %2194 = vmatpush1.msra.mxu0 0.0
        %2195 = vmatprep.subr.mxu0 0.0
        %2196 = vmatpush1.msra.mxu0 0.0
        %2197 = vmatprep.subr.mxu0 0.0
        %2198 = vmatpush1.msra.mxu0 0.0
        %2199 = vmatprep.subr.mxu0 0.0
        %2200 = vmatpush1.msra.mxu0 0.0
        %2201 = vmatprep.subr.mxu0 0.0
        %2202 = vmatpush1.msra.mxu0 0.0
        %2203 = vmatprep.subr.mxu0 0.0
        %2204 = vmatpush1.msra.mxu0 0.0
        %2205 = vmatprep.subr.mxu0 0.0
        %2206 = vmatpush1.msra.mxu0 0.0
        %2207 = vmatprep.subr.mxu0 %v2173
        %2208 = vmatpush1.msra.mxu0 %v2171
        %2209 = vmatprep.subr.mxu0 0.0
        %2210 = vmatpush2.msra.mxu0 0.0
        %2211 = vmatprep.subr.mxu0 0.0
        %2212 = vmatpush2.msra.mxu0 0.0
        %2213 = vmatprep.subr.mxu0 0.0
        %2214 = vmatpush2.msra.mxu0 0.0
        %2215 = vmatprep.subr.mxu0 0.0
        %2216 = vmatpush2.msra.mxu0 0.0
        %2217 = vmatprep.subr.mxu0 0.0
        %2218 = vmatpush2.msra.mxu0 0.0
        %2219 = vmatprep.subr.mxu0 0.0
        %2220 = vmatpush2.msra.mxu0 0.0
        %2221 = vmatprep.subr.mxu0 0.0
        %2222 = vmatpush2.msra.mxu0 0.0
        %2223 = vmatprep.subr.mxu0 0.0
        %2224 = vmatpush2.msra.mxu0 0.0
        %2225 = vmatprep.subr.mxu0 0.0
        %2226 = vmatpush2.msra.mxu0 0.0
        %2227 = vmatprep.subr.mxu0 0.0
        %2228 = vmatpush2.msra.mxu0 0.0
        %2229 = vmatprep.subr.mxu0 0.0
        %2230 = vmatpush2.msra.mxu0 0.0
        %2231 = vmatprep.subr.mxu0 0.0
        %2232 = vmatpush2.msra.mxu0 0.0
        %2233 = vmatprep.subr.mxu0 0.0
        %2234 = vmatpush2.msra.mxu0 0.0
        %2235 = vmatprep.subr.mxu0 0.0
        %2236 = vmatpush2.msra.mxu0 0.0
        %2237 = vmatprep.subr.mxu0 0.0
        %2238 = vmatpush2.msra.mxu0 0.0
        %2239 = vmatprep.subr.mxu0 0.0
        %2240 = vmatpush2.msra.mxu0 0.0
        %2241 = vmatprep.mubr.f32.mxu0 0.0
        %2242 = vmatmul.mubr.f32.gmra.mxu0 %v2169
        %v2243 = vpop.f32.mrf.mxu0
        %v2244 = vadd.f32 0.0, %v2243
        %v2245 = vpop.f32.mrf.mxu0
        %v2246 = vadd.f32 0.0, %v2245
        %2247 = vdwg.mxu0
        %2248 = vmatprep.subr.mxu0 0.0
        %2249 = vmatpush1.msra.mxu0 0.0
        %2250 = vmatprep.subr.mxu0 0.0
        %2251 = vmatpush1.msra.mxu0 0.0
        %2252 = vmatprep.subr.mxu0 0.0
        %2253 = vmatpush1.msra.mxu0 0.0
        %2254 = vmatprep.subr.mxu0 0.0
        %2255 = vmatpush1.msra.mxu0 0.0
        %2256 = vmatprep.subr.mxu0 0.0
        %2257 = vmatpush1.msra.mxu0 0.0
        %2258 = vmatprep.subr.mxu0 0.0
        %2259 = vmatpush1.msra.mxu0 0.0
        %2260 = vmatprep.subr.mxu0 0.0
        %2261 = vmatpush1.msra.mxu0 0.0
        %2262 = vmatprep.subr.mxu0 0.0
        %2263 = vmatpush1.msra.mxu0 0.0
        %2264 = vmatprep.subr.mxu0 0.0
        %2265 = vmatpush1.msra.mxu0 0.0
        %2266 = vmatprep.subr.mxu0 0.0
        %2267 = vmatpush1.msra.mxu0 0.0
        %2268 = vmatprep.subr.mxu0 0.0
        %2269 = vmatpush1.msra.mxu0 0.0
        %2270 = vmatprep.subr.mxu0 0.0
        %2271 = vmatpush1.msra.mxu0 0.0
        %2272 = vmatprep.subr.mxu0 0.0
        %2273 = vmatpush1.msra.mxu0 0.0
        %2274 = vmatprep.subr.mxu0 0.0
        %2275 = vmatpush1.msra.mxu0 0.0
        %2276 = vmatprep.subr.mxu0 0.0
        %2277 = vmatpush1.msra.mxu0 0.0
        %2278 = vmatprep.subr.mxu0 0.0
        %2279 = vmatpush1.msra.mxu0 %v2175
        %2280 = vmatprep.subr.mxu0 0.0
        %2281 = vmatpush2.msra.mxu0 0.0
        %2282 = vmatprep.subr.mxu0 0.0
        %2283 = vmatpush2.msra.mxu0 0.0
        %2284 = vmatprep.subr.mxu0 0.0
        %2285 = vmatpush2.msra.mxu0 0.0
        %2286 = vmatprep.subr.mxu0 0.0
        %2287 = vmatpush2.msra.mxu0 0.0
        %2288 = vmatprep.subr.mxu0 0.0
        %2289 = vmatpush2.msra.mxu0 0.0
        %2290 = vmatprep.subr.mxu0 0.0
        %2291 = vmatpush2.msra.mxu0 0.0
        %2292 = vmatprep.subr.mxu0 0.0
        %2293 = vmatpush2.msra.mxu0 0.0
        %2294 = vmatprep.subr.mxu0 0.0
        %2295 = vmatpush2.msra.mxu0 0.0
        %2296 = vmatprep.subr.mxu0 0.0
        %2297 = vmatpush2.msra.mxu0 0.0
        %2298 = vmatprep.subr.mxu0 0.0
        %2299 = vmatpush2.msra.mxu0 0.0
        %2300 = vmatprep.subr.mxu0 0.0
        %2301 = vmatpush2.msra.mxu0 0.0
        %2302 = vmatprep.subr.mxu0 0.0
        %2303 = vmatpush2.msra.mxu0 0.0
        %2304 = vmatprep.subr.mxu0 0.0
        %2305 = vmatpush2.msra.mxu0 0.0
        %2306 = vmatprep.subr.mxu0 0.0
        %2307 = vmatpush2.msra.mxu0 0.0
        %2308 = vmatprep.subr.mxu0 0.0
        %2309 = vmatpush2.msra.mxu0 0.0
        %2310 = vmatprep.subr.mxu0 0.0
        %2311 = vmatpush2.msra.mxu0 0.0
        %2312 = vmatprep.mubr.f32.mxu0 0.0
        %2313 = vmatmul.mubr.f32.gmra.mxu0 %v2169
        %v2314 = vpop.f32.mrf.mxu0
        %v2315 = vadd.f32 0.0, %v2314
        %v2316 = vpop.f32.mrf.mxu0
        %2317 = vdwg.mxu0
        %v2318 = vld [vmem:[#allocation2] sm:$0xff]
        %v2319 = vld [vmem:[#allocation2 + $0x8] sm:$0xf]
        %v2322 = vcombine.low %v2244, %v2246
        %v2324 = vadd.f32 %v2318, %v2322
        %v2325 = vadd.f32 %v2319, %v2315
        %2326 = vst [vmem:[#allocation2] sm:$0xff] %v2324
        %2327 = vst.msk [vmem:[#allocation2 + $0x8] sm:$0xf] %vm522, %v2325
        %v2328 = vld [vmem:[#allocation3] sm:$0xff]
        %v2329 = vld [vmem:[#allocation3 + $0x8] sm:$0xf]
        %s2330 = scalar_lea.vmem %s4, 8
        %v2331 = vld [vmem:[%s2330] sm:$0xf]
        %v2334 = vcombine.high %v2328, %v2328
        %2335 = vrot.lane.b32.xlu0 %v2328, 126
        %v2336 = vpop.permute.xlu0 %2335
        %2337 = vrot.lane.b32.xlu0 %v2334, 126
        %v2338 = vpop.permute.xlu0 %2337
        %2339 = vrot.lane.b32.xlu0 %v2329, 126
        %v2340 = vpop.permute.xlu0 %2339
        %v2341 = vsel %vm713, %v2336, %v2338
        %v2342 = vsel %vm713, %v2338, %v2340
        %v2344 = vsel %vm365, %v2331, 0
        %v2346 = vsel %vm369, %v2341, 0
        %v2348 = vsel %vm369, %v2342, 0
        %v2350 = vsel %vm369, %v2340, 0
        %2352 = vmatprep.subr.mxu0 0.0
        %2353 = vmatpush1.msra.mxu0 0.0
        %2354 = vmatprep.subr.mxu0 0.0
        %2355 = vmatpush1.msra.mxu0 0.0
        %2356 = vmatprep.subr.mxu0 0.0
        %2357 = vmatpush1.msra.mxu0 0.0
        %2358 = vmatprep.subr.mxu0 0.0
        %2359 = vmatpush1.msra.mxu0 0.0
        %2360 = vmatprep.subr.mxu0 0.0
        %2361 = vmatpush1.msra.mxu0 0.0
        %2362 = vmatprep.subr.mxu0 0.0
        %2363 = vmatpush1.msra.mxu0 0.0
        %2364 = vmatprep.subr.mxu0 0.0
        %2365 = vmatpush1.msra.mxu0 0.0
        %2366 = vmatprep.subr.mxu0 0.0
        %2367 = vmatpush1.msra.mxu0 0.0
        %2368 = vmatprep.subr.mxu0 0.0
        %2369 = vmatpush1.msra.mxu0 0.0
        %2370 = vmatprep.subr.mxu0 0.0
        %2371 = vmatpush1.msra.mxu0 0.0
        %2372 = vmatprep.subr.mxu0 0.0
        %2373 = vmatpush1.msra.mxu0 0.0
        %2374 = vmatprep.subr.mxu0 0.0
        %2375 = vmatpush1.msra.mxu0 0.0
        %2376 = vmatprep.subr.mxu0 0.0
        %2377 = vmatpush1.msra.mxu0 0.0
        %2378 = vmatprep.subr.mxu0 0.0
        %2379 = vmatpush1.msra.mxu0 0.0
        %2380 = vmatprep.subr.mxu0 0.0
        %2381 = vmatpush1.msra.mxu0 0.0
        %2382 = vmatprep.subr.mxu0 %v2348
        %2383 = vmatpush1.msra.mxu0 %v2346
        %2384 = vmatprep.subr.mxu0 0.0
        %2385 = vmatpush2.msra.mxu0 0.0
        %2386 = vmatprep.subr.mxu0 0.0
        %2387 = vmatpush2.msra.mxu0 0.0
        %2388 = vmatprep.subr.mxu0 0.0
        %2389 = vmatpush2.msra.mxu0 0.0
        %2390 = vmatprep.subr.mxu0 0.0
        %2391 = vmatpush2.msra.mxu0 0.0
        %2392 = vmatprep.subr.mxu0 0.0
        %2393 = vmatpush2.msra.mxu0 0.0
        %2394 = vmatprep.subr.mxu0 0.0
        %2395 = vmatpush2.msra.mxu0 0.0
        %2396 = vmatprep.subr.mxu0 0.0
        %2397 = vmatpush2.msra.mxu0 0.0
        %2398 = vmatprep.subr.mxu0 0.0
        %2399 = vmatpush2.msra.mxu0 0.0
        %2400 = vmatprep.subr.mxu0 0.0
        %2401 = vmatpush2.msra.mxu0 0.0
        %2402 = vmatprep.subr.mxu0 0.0
        %2403 = vmatpush2.msra.mxu0 0.0
        %2404 = vmatprep.subr.mxu0 0.0
        %2405 = vmatpush2.msra.mxu0 0.0
        %2406 = vmatprep.subr.mxu0 0.0
        %2407 = vmatpush2.msra.mxu0 0.0
        %2408 = vmatprep.subr.mxu0 0.0
        %2409 = vmatpush2.msra.mxu0 0.0
        %2410 = vmatprep.subr.mxu0 0.0
        %2411 = vmatpush2.msra.mxu0 0.0
        %2412 = vmatprep.subr.mxu0 0.0
        %2413 = vmatpush2.msra.mxu0 0.0
        %2414 = vmatprep.subr.mxu0 0.0
        %2415 = vmatpush2.msra.mxu0 0.0
        %2416 = vmatprep.mubr.f32.mxu0 0.0
        %2417 = vmatmul.mubr.f32.gmra.mxu0 %v2344
        %v2418 = vpop.f32.mrf.mxu0
        %v2419 = vadd.f32 0.0, %v2418
        %v2420 = vpop.f32.mrf.mxu0
        %v2421 = vadd.f32 0.0, %v2420
        %2422 = vdwg.mxu0
        %2423 = vmatprep.subr.mxu0 0.0
        %2424 = vmatpush1.msra.mxu0 0.0
        %2425 = vmatprep.subr.mxu0 0.0
        %2426 = vmatpush1.msra.mxu0 0.0
        %2427 = vmatprep.subr.mxu0 0.0
        %2428 = vmatpush1.msra.mxu0 0.0
        %2429 = vmatprep.subr.mxu0 0.0
        %2430 = vmatpush1.msra.mxu0 0.0
        %2431 = vmatprep.subr.mxu0 0.0
        %2432 = vmatpush1.msra.mxu0 0.0
        %2433 = vmatprep.subr.mxu0 0.0
        %2434 = vmatpush1.msra.mxu0 0.0
        %2435 = vmatprep.subr.mxu0 0.0
        %2436 = vmatpush1.msra.mxu0 0.0
        %2437 = vmatprep.subr.mxu0 0.0
        %2438 = vmatpush1.msra.mxu0 0.0
        %2439 = vmatprep.subr.mxu0 0.0
        %2440 = vmatpush1.msra.mxu0 0.0
        %2441 = vmatprep.subr.mxu0 0.0
        %2442 = vmatpush1.msra.mxu0 0.0
        %2443 = vmatprep.subr.mxu0 0.0
        %2444 = vmatpush1.msra.mxu0 0.0
        %2445 = vmatprep.subr.mxu0 0.0
        %2446 = vmatpush1.msra.mxu0 0.0
        %2447 = vmatprep.subr.mxu0 0.0
        %2448 = vmatpush1.msra.mxu0 0.0
        %2449 = vmatprep.subr.mxu0 0.0
        %2450 = vmatpush1.msra.mxu0 0.0
        %2451 = vmatprep.subr.mxu0 0.0
        %2452 = vmatpush1.msra.mxu0 0.0
        %2453 = vmatprep.subr.mxu0 0.0
        %2454 = vmatpush1.msra.mxu0 %v2350
        %2455 = vmatprep.subr.mxu0 0.0
        %2456 = vmatpush2.msra.mxu0 0.0
        %2457 = vmatprep.subr.mxu0 0.0
        %2458 = vmatpush2.msra.mxu0 0.0
        %2459 = vmatprep.subr.mxu0 0.0
        %2460 = vmatpush2.msra.mxu0 0.0
        %2461 = vmatprep.subr.mxu0 0.0
        %2462 = vmatpush2.msra.mxu0 0.0
        %2463 = vmatprep.subr.mxu0 0.0
        %2464 = vmatpush2.msra.mxu0 0.0
        %2465 = vmatprep.subr.mxu0 0.0
        %2466 = vmatpush2.msra.mxu0 0.0
        %2467 = vmatprep.subr.mxu0 0.0
        %2468 = vmatpush2.msra.mxu0 0.0
        %2469 = vmatprep.subr.mxu0 0.0
        %2470 = vmatpush2.msra.mxu0 0.0
        %2471 = vmatprep.subr.mxu0 0.0
        %2472 = vmatpush2.msra.mxu0 0.0
        %2473 = vmatprep.subr.mxu0 0.0
        %2474 = vmatpush2.msra.mxu0 0.0
        %2475 = vmatprep.subr.mxu0 0.0
        %2476 = vmatpush2.msra.mxu0 0.0
        %2477 = vmatprep.subr.mxu0 0.0
        %2478 = vmatpush2.msra.mxu0 0.0
        %2479 = vmatprep.subr.mxu0 0.0
        %2480 = vmatpush2.msra.mxu0 0.0
        %2481 = vmatprep.subr.mxu0 0.0
        %2482 = vmatpush2.msra.mxu0 0.0
        %2483 = vmatprep.subr.mxu0 0.0
        %2484 = vmatpush2.msra.mxu0 0.0
        %2485 = vmatprep.subr.mxu0 0.0
        %2486 = vmatpush2.msra.mxu0 0.0
        %2487 = vmatprep.mubr.f32.mxu0 0.0
        %2488 = vmatmul.mubr.f32.gmra.mxu0 %v2344
        %v2489 = vpop.f32.mrf.mxu0
        %v2490 = vadd.f32 0.0, %v2489
        %v2491 = vpop.f32.mrf.mxu0
        %2492 = vdwg.mxu0
        %v2493 = vld [vmem:[#allocation2] sm:$0xff]
        %v2494 = vld [vmem:[#allocation2 + $0x8] sm:$0xf]
        %v2497 = vcombine.low %v2419, %v2421
        %v2499 = vadd.f32 %v2493, %v2497
        %v2500 = vadd.f32 %v2494, %v2490
        %2501 = vst [vmem:[#allocation2] sm:$0xff] %v2499
        %2502 = vst.msk [vmem:[#allocation2 + $0x8] sm:$0xf] %vm522, %v2500
        %v2503 = vld [vmem:[#allocation3] sm:$0xff]
        %v2504 = vld [vmem:[#allocation3 + $0x8] sm:$0xf]
        %s2505 = scalar_lea.vmem %s4, 12
        %v2506 = vld [vmem:[%s2505] sm:$0xf]
        %v2509 = vcombine.high %v2503, %v2503
        %2510 = vrot.lane.b32.xlu0 %v2503, 110
        %v2511 = vpop.permute.xlu0 %2510
        %2512 = vrot.lane.b32.xlu0 %v2509, 110
        %v2513 = vpop.permute.xlu0 %2512
        %2514 = vrot.lane.b32.xlu0 %v2504, 110
        %v2515 = vpop.permute.xlu0 %2514
        %v2516 = vsel %vm889, %v2511, %v2513
        %v2517 = vsel %vm889, %v2513, %v2515
        %v2519 = vsel %vm365, %v2506, 0
        %v2521 = vsel %vm369, %v2516, 0
        %v2523 = vsel %vm369, %v2517, 0
        %v2525 = vsel %vm369, %v2515, 0
        %2527 = vmatprep.subr.mxu0 0.0
        %2528 = vmatpush1.msra.mxu0 0.0
        %2529 = vmatprep.subr.mxu0 0.0
        %2530 = vmatpush1.msra.mxu0 0.0
        %2531 = vmatprep.subr.mxu0 0.0
        %2532 = vmatpush1.msra.mxu0 0.0
        %2533 = vmatprep.subr.mxu0 0.0
        %2534 = vmatpush1.msra.mxu0 0.0
        %2535 = vmatprep.subr.mxu0 0.0
        %2536 = vmatpush1.msra.mxu0 0.0
        %2537 = vmatprep.subr.mxu0 0.0
        %2538 = vmatpush1.msra.mxu0 0.0
        %2539 = vmatprep.subr.mxu0 0.0
        %2540 = vmatpush1.msra.mxu0 0.0
        %2541 = vmatprep.subr.mxu0 0.0
        %2542 = vmatpush1.msra.mxu0 0.0
        %2543 = vmatprep.subr.mxu0 0.0
        %2544 = vmatpush1.msra.mxu0 0.0
        %2545 = vmatprep.subr.mxu0 0.0
        %2546 = vmatpush1.msra.mxu0 0.0
        %2547 = vmatprep.subr.mxu0 0.0
        %2548 = vmatpush1.msra.mxu0 0.0
        %2549 = vmatprep.subr.mxu0 0.0
        %2550 = vmatpush1.msra.mxu0 0.0
        %2551 = vmatprep.subr.mxu0 0.0
        %2552 = vmatpush1.msra.mxu0 0.0
        %2553 = vmatprep.subr.mxu0 0.0
        %2554 = vmatpush1.msra.mxu0 0.0
        %2555 = vmatprep.subr.mxu0 0.0
        %2556 = vmatpush1.msra.mxu0 0.0
        %2557 = vmatprep.subr.mxu0 %v2523
        %2558 = vmatpush1.msra.mxu0 %v2521
        %2559 = vmatprep.subr.mxu0 0.0
        %2560 = vmatpush2.msra.mxu0 0.0
        %2561 = vmatprep.subr.mxu0 0.0
        %2562 = vmatpush2.msra.mxu0 0.0
        %2563 = vmatprep.subr.mxu0 0.0
        %2564 = vmatpush2.msra.mxu0 0.0
        %2565 = vmatprep.subr.mxu0 0.0
        %2566 = vmatpush2.msra.mxu0 0.0
        %2567 = vmatprep.subr.mxu0 0.0
        %2568 = vmatpush2.msra.mxu0 0.0
        %2569 = vmatprep.subr.mxu0 0.0
        %2570 = vmatpush2.msra.mxu0 0.0
        %2571 = vmatprep.subr.mxu0 0.0
        %2572 = vmatpush2.msra.mxu0 0.0
        %2573 = vmatprep.subr.mxu0 0.0
        %2574 = vmatpush2.msra.mxu0 0.0
        %2575 = vmatprep.subr.mxu0 0.0
        %2576 = vmatpush2.msra.mxu0 0.0
        %2577 = vmatprep.subr.mxu0 0.0
        %2578 = vmatpush2.msra.mxu0 0.0
        %2579 = vmatprep.subr.mxu0 0.0
        %2580 = vmatpush2.msra.mxu0 0.0
        %2581 = vmatprep.subr.mxu0 0.0
        %2582 = vmatpush2.msra.mxu0 0.0
        %2583 = vmatprep.subr.mxu0 0.0
        %2584 = vmatpush2.msra.mxu0 0.0
        %2585 = vmatprep.subr.mxu0 0.0
        %2586 = vmatpush2.msra.mxu0 0.0
        %2587 = vmatprep.subr.mxu0 0.0
        %2588 = vmatpush2.msra.mxu0 0.0
        %2589 = vmatprep.subr.mxu0 0.0
        %2590 = vmatpush2.msra.mxu0 0.0
        %2591 = vmatprep.mubr.f32.mxu0 0.0
        %2592 = vmatmul.mubr.f32.gmra.mxu0 %v2519
        %v2593 = vpop.f32.mrf.mxu0
        %v2594 = vadd.f32 0.0, %v2593
        %v2595 = vpop.f32.mrf.mxu0
        %v2596 = vadd.f32 0.0, %v2595
        %2597 = vdwg.mxu0
        %2598 = vmatprep.subr.mxu0 0.0
        %2599 = vmatpush1.msra.mxu0 0.0
        %2600 = vmatprep.subr.mxu0 0.0
        %2601 = vmatpush1.msra.mxu0 0.0
        %2602 = vmatprep.subr.mxu0 0.0
        %2603 = vmatpush1.msra.mxu0 0.0
        %2604 = vmatprep.subr.mxu0 0.0
        %2605 = vmatpush1.msra.mxu0 0.0
        %2606 = vmatprep.subr.mxu0 0.0
        %2607 = vmatpush1.msra.mxu0 0.0
        %2608 = vmatprep.subr.mxu0 0.0
        %2609 = vmatpush1.msra.mxu0 0.0
        %2610 = vmatprep.subr.mxu0 0.0
        %2611 = vmatpush1.msra.mxu0 0.0
        %2612 = vmatprep.subr.mxu0 0.0
        %2613 = vmatpush1.msra.mxu0 0.0
        %2614 = vmatprep.subr.mxu0 0.0
        %2615 = vmatpush1.msra.mxu0 0.0
        %2616 = vmatprep.subr.mxu0 0.0
        %2617 = vmatpush1.msra.mxu0 0.0
        %2618 = vmatprep.subr.mxu0 0.0
        %2619 = vmatpush1.msra.mxu0 0.0
        %2620 = vmatprep.subr.mxu0 0.0
        %2621 = vmatpush1.msra.mxu0 0.0
        %2622 = vmatprep.subr.mxu0 0.0
        %2623 = vmatpush1.msra.mxu0 0.0
        %2624 = vmatprep.subr.mxu0 0.0
        %2625 = vmatpush1.msra.mxu0 0.0
        %2626 = vmatprep.subr.mxu0 0.0
        %2627 = vmatpush1.msra.mxu0 0.0
        %2628 = vmatprep.subr.mxu0 0.0
        %2629 = vmatpush1.msra.mxu0 %v2525
        %2630 = vmatprep.subr.mxu0 0.0
        %2631 = vmatpush2.msra.mxu0 0.0
        %2632 = vmatprep.subr.mxu0 0.0
        %2633 = vmatpush2.msra.mxu0 0.0
        %2634 = vmatprep.subr.mxu0 0.0
        %2635 = vmatpush2.msra.mxu0 0.0
        %2636 = vmatprep.subr.mxu0 0.0
        %2637 = vmatpush2.msra.mxu0 0.0
        %2638 = vmatprep.subr.mxu0 0.0
        %2639 = vmatpush2.msra.mxu0 0.0
        %2640 = vmatprep.subr.mxu0 0.0
        %2641 = vmatpush2.msra.mxu0 0.0
        %2642 = vmatprep.subr.mxu0 0.0
        %2643 = vmatpush2.msra.mxu0 0.0
        %2644 = vmatprep.subr.mxu0 0.0
        %2645 = vmatpush2.msra.mxu0 0.0
        %2646 = vmatprep.subr.mxu0 0.0
        %2647 = vmatpush2.msra.mxu0 0.0
        %2648 = vmatprep.subr.mxu0 0.0
        %2649 = vmatpush2.msra.mxu0 0.0
        %2650 = vmatprep.subr.mxu0 0.0
        %2651 = vmatpush2.msra.mxu0 0.0
        %2652 = vmatprep.subr.mxu0 0.0
        %2653 = vmatpush2.msra.mxu0 0.0
        %2654 = vmatprep.subr.mxu0 0.0
        %2655 = vmatpush2.msra.mxu0 0.0
        %2656 = vmatprep.subr.mxu0 0.0
        %2657 = vmatpush2.msra.mxu0 0.0
        %2658 = vmatprep.subr.mxu0 0.0
        %2659 = vmatpush2.msra.mxu0 0.0
        %2660 = vmatprep.subr.mxu0 0.0
        %2661 = vmatpush2.msra.mxu0 0.0
        %2662 = vmatprep.mubr.f32.mxu0 0.0
        %2663 = vmatmul.mubr.f32.gmra.mxu0 %v2519
        %v2664 = vpop.f32.mrf.mxu0
        %v2665 = vadd.f32 0.0, %v2664
        %v2666 = vpop.f32.mrf.mxu0
        %2667 = vdwg.mxu0
        %v2668 = vld [vmem:[#allocation2] sm:$0xff]
        %v2669 = vld [vmem:[#allocation2 + $0x8] sm:$0xf]
        %v2672 = vcombine.low %v2594, %v2596
        %v2674 = vadd.f32 %v2668, %v2672
        %v2675 = vadd.f32 %v2669, %v2665
        %2676 = vst [vmem:[#allocation2] sm:$0xff] %v2674
        %2677 = vst.msk [vmem:[#allocation2 + $0x8] sm:$0xf] %vm522, %v2675
        %v2678 = vld [vmem:[#allocation3] sm:$0xff]
        %v2679 = vld [vmem:[#allocation3 + $0x8] sm:$0xf]
        %s2680 = scalar_lea.vmem %s4, 16
        %v2681 = vld [vmem:[%s2680] sm:$0xf]
        %v2684 = vcombine.high %v2678, %v2678
        %2685 = vrot.lane.b32.xlu0 %v2678, 109
        %v2686 = vpop.permute.xlu0 %2685
        %2687 = vrot.lane.b32.xlu0 %v2684, 109
        %v2688 = vpop.permute.xlu0 %2687
        %2689 = vrot.lane.b32.xlu0 %v2679, 109
        %v2690 = vpop.permute.xlu0 %2689
        %v2691 = vsel %vm1065, %v2686, %v2688
        %v2692 = vsel %vm1065, %v2688, %v2690
        %v2694 = vsel %vm365, %v2681, 0
        %v2696 = vsel %vm369, %v2691, 0
        %v2698 = vsel %vm369, %v2692, 0
        %v2700 = vsel %vm369, %v2690, 0
        %2702 = vmatprep.subr.mxu0 0.0
        %2703 = vmatpush1.msra.mxu0 0.0
        %2704 = vmatprep.subr.mxu0 0.0
        %2705 = vmatpush1.msra.mxu0 0.0
        %2706 = vmatprep.subr.mxu0 0.0
        %2707 = vmatpush1.msra.mxu0 0.0
        %2708 = vmatprep.subr.mxu0 0.0
        %2709 = vmatpush1.msra.mxu0 0.0
        %2710 = vmatprep.subr.mxu0 0.0
        %2711 = vmatpush1.msra.mxu0 0.0
        %2712 = vmatprep.subr.mxu0 0.0
        %2713 = vmatpush1.msra.mxu0 0.0
        %2714 = vmatprep.subr.mxu0 0.0
        %2715 = vmatpush1.msra.mxu0 0.0
        %2716 = vmatprep.subr.mxu0 0.0
        %2717 = vmatpush1.msra.mxu0 0.0
        %2718 = vmatprep.subr.mxu0 0.0
        %2719 = vmatpush1.msra.mxu0 0.0
        %2720 = vmatprep.subr.mxu0 0.0
        %2721 = vmatpush1.msra.mxu0 0.0
        %2722 = vmatprep.subr.mxu0 0.0
        %2723 = vmatpush1.msra.mxu0 0.0
        %2724 = vmatprep.subr.mxu0 0.0
        %2725 = vmatpush1.msra.mxu0 0.0
        %2726 = vmatprep.subr.mxu0 0.0
        %2727 = vmatpush1.msra.mxu0 0.0
        %2728 = vmatprep.subr.mxu0 0.0
        %2729 = vmatpush1.msra.mxu0 0.0
        %2730 = vmatprep.subr.mxu0 0.0
        %2731 = vmatpush1.msra.mxu0 0.0
        %2732 = vmatprep.subr.mxu0 %v2698
        %2733 = vmatpush1.msra.mxu0 %v2696
        %2734 = vmatprep.subr.mxu0 0.0
        %2735 = vmatpush2.msra.mxu0 0.0
        %2736 = vmatprep.subr.mxu0 0.0
        %2737 = vmatpush2.msra.mxu0 0.0
        %2738 = vmatprep.subr.mxu0 0.0
        %2739 = vmatpush2.msra.mxu0 0.0
        %2740 = vmatprep.subr.mxu0 0.0
        %2741 = vmatpush2.msra.mxu0 0.0
        %2742 = vmatprep.subr.mxu0 0.0
        %2743 = vmatpush2.msra.mxu0 0.0
        %2744 = vmatprep.subr.mxu0 0.0
        %2745 = vmatpush2.msra.mxu0 0.0
        %2746 = vmatprep.subr.mxu0 0.0
        %2747 = vmatpush2.msra.mxu0 0.0
        %2748 = vmatprep.subr.mxu0 0.0
        %2749 = vmatpush2.msra.mxu0 0.0
        %2750 = vmatprep.subr.mxu0 0.0
        %2751 = vmatpush2.msra.mxu0 0.0
        %2752 = vmatprep.subr.mxu0 0.0
        %2753 = vmatpush2.msra.mxu0 0.0
        %2754 = vmatprep.subr.mxu0 0.0
        %2755 = vmatpush2.msra.mxu0 0.0
        %2756 = vmatprep.subr.mxu0 0.0
        %2757 = vmatpush2.msra.mxu0 0.0
        %2758 = vmatprep.subr.mxu0 0.0
        %2759 = vmatpush2.msra.mxu0 0.0
        %2760 = vmatprep.subr.mxu0 0.0
        %2761 = vmatpush2.msra.mxu0 0.0
        %2762 = vmatprep.subr.mxu0 0.0
        %2763 = vmatpush2.msra.mxu0 0.0
        %2764 = vmatprep.subr.mxu0 0.0
        %2765 = vmatpush2.msra.mxu0 0.0
        %2766 = vmatprep.mubr.f32.mxu0 0.0
        %2767 = vmatmul.mubr.f32.gmra.mxu0 %v2694
        %v2768 = vpop.f32.mrf.mxu0
        %v2769 = vadd.f32 0.0, %v2768
        %v2770 = vpop.f32.mrf.mxu0
        %v2771 = vadd.f32 0.0, %v2770
        %2772 = vdwg.mxu0
        %2773 = vmatprep.subr.mxu0 0.0
        %2774 = vmatpush1.msra.mxu0 0.0
        %2775 = vmatprep.subr.mxu0 0.0
        %2776 = vmatpush1.msra.mxu0 0.0
        %2777 = vmatprep.subr.mxu0 0.0
        %2778 = vmatpush1.msra.mxu0 0.0
        %2779 = vmatprep.subr.mxu0 0.0
        %2780 = vmatpush1.msra.mxu0 0.0
        %2781 = vmatprep.subr.mxu0 0.0
        %2782 = vmatpush1.msra.mxu0 0.0
        %2783 = vmatprep.subr.mxu0 0.0
        %2784 = vmatpush1.msra.mxu0 0.0
        %2785 = vmatprep.subr.mxu0 0.0
        %2786 = vmatpush1.msra.mxu0 0.0
        %2787 = vmatprep.subr.mxu0 0.0
        %2788 = vmatpush1.msra.mxu0 0.0
        %2789 = vmatprep.subr.mxu0 0.0
        %2790 = vmatpush1.msra.mxu0 0.0
        %2791 = vmatprep.subr.mxu0 0.0
        %2792 = vmatpush1.msra.mxu0 0.0
        %2793 = vmatprep.subr.mxu0 0.0
        %2794 = vmatpush1.msra.mxu0 0.0
        %2795 = vmatprep.subr.mxu0 0.0
        %2796 = vmatpush1.msra.mxu0 0.0
        %2797 = vmatprep.subr.mxu0 0.0
        %2798 = vmatpush1.msra.mxu0 0.0
        %2799 = vmatprep.subr.mxu0 0.0
        %2800 = vmatpush1.msra.mxu0 0.0
        %2801 = vmatprep.subr.mxu0 0.0
        %2802 = vmatpush1.msra.mxu0 0.0
        %2803 = vmatprep.subr.mxu0 0.0
        %2804 = vmatpush1.msra.mxu0 %v2700
        %2805 = vmatprep.subr.mxu0 0.0
        %2806 = vmatpush2.msra.mxu0 0.0
        %2807 = vmatprep.subr.mxu0 0.0
        %2808 = vmatpush2.msra.mxu0 0.0
        %2809 = vmatprep.subr.mxu0 0.0
        %2810 = vmatpush2.msra.mxu0 0.0
        %2811 = vmatprep.subr.mxu0 0.0
        %2812 = vmatpush2.msra.mxu0 0.0
        %2813 = vmatprep.subr.mxu0 0.0
        %2814 = vmatpush2.msra.mxu0 0.0
        %2815 = vmatprep.subr.mxu0 0.0
        %2816 = vmatpush2.msra.mxu0 0.0
        %2817 = vmatprep.subr.mxu0 0.0
        %2818 = vmatpush2.msra.mxu0 0.0
        %2819 = vmatprep.subr.mxu0 0.0
        %2820 = vmatpush2.msra.mxu0 0.0
        %2821 = vmatprep.subr.mxu0 0.0
        %2822 = vmatpush2.msra.mxu0 0.0
        %2823 = vmatprep.subr.mxu0 0.0
        %2824 = vmatpush2.msra.mxu0 0.0
        %2825 = vmatprep.subr.mxu0 0.0
        %2826 = vmatpush2.msra.mxu0 0.0
        %2827 = vmatprep.subr.mxu0 0.0
        %2828 = vmatpush2.msra.mxu0 0.0
        %2829 = vmatprep.subr.mxu0 0.0
        %2830 = vmatpush2.msra.mxu0 0.0
        %2831 = vmatprep.subr.mxu0 0.0
        %2832 = vmatpush2.msra.mxu0 0.0
        %2833 = vmatprep.subr.mxu0 0.0
        %2834 = vmatpush2.msra.mxu0 0.0
        %2835 = vmatprep.subr.mxu0 0.0
        %2836 = vmatpush2.msra.mxu0 0.0
        %2837 = vmatprep.mubr.f32.mxu0 0.0
        %2838 = vmatmul.mubr.f32.gmra.mxu0 %v2694
        %v2839 = vpop.f32.mrf.mxu0
        %v2840 = vadd.f32 0.0, %v2839
        %v2841 = vpop.f32.mrf.mxu0
        %2842 = vdwg.mxu0
        %v2843 = vld [vmem:[#allocation2] sm:$0xff]
        %v2844 = vld [vmem:[#allocation2 + $0x8] sm:$0xf]
        %v2847 = vcombine.low %v2769, %v2771
        %v2849 = vadd.f32 %v2843, %v2847
        %v2850 = vadd.f32 %v2844, %v2840
        %2851 = vst [vmem:[#allocation2] sm:$0xff] %v2849
        %2852 = vst.msk [vmem:[#allocation2 + $0x8] sm:$0xf] %vm522, %v2850
        %v2853 = vld [vmem:[#allocation3] sm:$0xff]
        %v2854 = vld [vmem:[#allocation3 + $0x8] sm:$0xf]
        %s2855 = scalar_lea.vmem %s4, 20
        %v2856 = vld [vmem:[%s2855] sm:$0xf]
        %v2859 = vcombine.high %v2853, %v2853
        %2860 = vrot.lane.b32.xlu0 %v2853, 108
        %v2861 = vpop.permute.xlu0 %2860
        %2862 = vrot.lane.b32.xlu0 %v2859, 108
        %v2863 = vpop.permute.xlu0 %2862
        %2864 = vrot.lane.b32.xlu0 %v2854, 108
        %v2865 = vpop.permute.xlu0 %2864
        %v2866 = vsel %vm1241, %v2861, %v2863
        %v2867 = vsel %vm1241, %v2863, %v2865
        %v2869 = vsel %vm365, %v2856, 0
        %v2871 = vsel %vm369, %v2866, 0
        %v2873 = vsel %vm369, %v2867, 0
        %v2875 = vsel %vm369, %v2865, 0
        %2877 = vmatprep.subr.mxu0 0.0
        %2878 = vmatpush1.msra.mxu0 0.0
        %2879 = vmatprep.subr.mxu0 0.0
        %2880 = vmatpush1.msra.mxu0 0.0
        %2881 = vmatprep.subr.mxu0 0.0
        %2882 = vmatpush1.msra.mxu0 0.0
        %2883 = vmatprep.subr.mxu0 0.0
        %2884 = vmatpush1.msra.mxu0 0.0
        %2885 = vmatprep.subr.mxu0 0.0
        %2886 = vmatpush1.msra.mxu0 0.0
        %2887 = vmatprep.subr.mxu0 0.0
        %2888 = vmatpush1.msra.mxu0 0.0
        %2889 = vmatprep.subr.mxu0 0.0
        %2890 = vmatpush1.msra.mxu0 0.0
        %2891 = vmatprep.subr.mxu0 0.0
        %2892 = vmatpush1.msra.mxu0 0.0
        %2893 = vmatprep.subr.mxu0 0.0
        %2894 = vmatpush1.msra.mxu0 0.0
        %2895 = vmatprep.subr.mxu0 0.0
        %2896 = vmatpush1.msra.mxu0 0.0
        %2897 = vmatprep.subr.mxu0 0.0
        %2898 = vmatpush1.msra.mxu0 0.0
        %2899 = vmatprep.subr.mxu0 0.0
        %2900 = vmatpush1.msra.mxu0 0.0
        %2901 = vmatprep.subr.mxu0 0.0
        %2902 = vmatpush1.msra.mxu0 0.0
        %2903 = vmatprep.subr.mxu0 0.0
        %2904 = vmatpush1.msra.mxu0 0.0
        %2905 = vmatprep.subr.mxu0 0.0
        %2906 = vmatpush1.msra.mxu0 0.0
        %2907 = vmatprep.subr.mxu0 %v2873
        %2908 = vmatpush1.msra.mxu0 %v2871
        %2909 = vmatprep.subr.mxu0 0.0
        %2910 = vmatpush2.msra.mxu0 0.0
        %2911 = vmatprep.subr.mxu0 0.0
        %2912 = vmatpush2.msra.mxu0 0.0
        %2913 = vmatprep.subr.mxu0 0.0
        %2914 = vmatpush2.msra.mxu0 0.0
        %2915 = vmatprep.subr.mxu0 0.0
        %2916 = vmatpush2.msra.mxu0 0.0
        %2917 = vmatprep.subr.mxu0 0.0
        %2918 = vmatpush2.msra.mxu0 0.0
        %2919 = vmatprep.subr.mxu0 0.0
        %2920 = vmatpush2.msra.mxu0 0.0
        %2921 = vmatprep.subr.mxu0 0.0
        %2922 = vmatpush2.msra.mxu0 0.0
        %2923 = vmatprep.subr.mxu0 0.0
        %2924 = vmatpush2.msra.mxu0 0.0
        %2925 = vmatprep.subr.mxu0 0.0
        %2926 = vmatpush2.msra.mxu0 0.0
        %2927 = vmatprep.subr.mxu0 0.0
        %2928 = vmatpush2.msra.mxu0 0.0
        %2929 = vmatprep.subr.mxu0 0.0
        %2930 = vmatpush2.msra.mxu0 0.0
        %2931 = vmatprep.subr.mxu0 0.0
        %2932 = vmatpush2.msra.mxu0 0.0
        %2933 = vmatprep.subr.mxu0 0.0
        %2934 = vmatpush2.msra.mxu0 0.0
        %2935 = vmatprep.subr.mxu0 0.0
        %2936 = vmatpush2.msra.mxu0 0.0
        %2937 = vmatprep.subr.mxu0 0.0
        %2938 = vmatpush2.msra.mxu0 0.0
        %2939 = vmatprep.subr.mxu0 0.0
        %2940 = vmatpush2.msra.mxu0 0.0
        %2941 = vmatprep.mubr.f32.mxu0 0.0
        %2942 = vmatmul.mubr.f32.gmra.mxu0 %v2869
        %v2943 = vpop.f32.mrf.mxu0
        %v2944 = vadd.f32 0.0, %v2943
        %v2945 = vpop.f32.mrf.mxu0
        %v2946 = vadd.f32 0.0, %v2945
        %2947 = vdwg.mxu0
        %2948 = vmatprep.subr.mxu0 0.0
        %2949 = vmatpush1.msra.mxu0 0.0
        %2950 = vmatprep.subr.mxu0 0.0
        %2951 = vmatpush1.msra.mxu0 0.0
        %2952 = vmatprep.subr.mxu0 0.0
        %2953 = vmatpush1.msra.mxu0 0.0
        %2954 = vmatprep.subr.mxu0 0.0
        %2955 = vmatpush1.msra.mxu0 0.0
        %2956 = vmatprep.subr.mxu0 0.0
        %2957 = vmatpush1.msra.mxu0 0.0
        %2958 = vmatprep.subr.mxu0 0.0
        %2959 = vmatpush1.msra.mxu0 0.0
        %2960 = vmatprep.subr.mxu0 0.0
        %2961 = vmatpush1.msra.mxu0 0.0
        %2962 = vmatprep.subr.mxu0 0.0
        %2963 = vmatpush1.msra.mxu0 0.0
        %2964 = vmatprep.subr.mxu0 0.0
        %2965 = vmatpush1.msra.mxu0 0.0
        %2966 = vmatprep.subr.mxu0 0.0
        %2967 = vmatpush1.msra.mxu0 0.0
        %2968 = vmatprep.subr.mxu0 0.0
        %2969 = vmatpush1.msra.mxu0 0.0
        %2970 = vmatprep.subr.mxu0 0.0
        %2971 = vmatpush1.msra.mxu0 0.0
        %2972 = vmatprep.subr.mxu0 0.0
        %2973 = vmatpush1.msra.mxu0 0.0
        %2974 = vmatprep.subr.mxu0 0.0
        %2975 = vmatpush1.msra.mxu0 0.0
        %2976 = vmatprep.subr.mxu0 0.0
        %2977 = vmatpush1.msra.mxu0 0.0
        %2978 = vmatprep.subr.mxu0 0.0
        %2979 = vmatpush1.msra.mxu0 %v2875
        %2980 = vmatprep.subr.mxu0 0.0
        %2981 = vmatpush2.msra.mxu0 0.0
        %2982 = vmatprep.subr.mxu0 0.0
        %2983 = vmatpush2.msra.mxu0 0.0
        %2984 = vmatprep.subr.mxu0 0.0
        %2985 = vmatpush2.msra.mxu0 0.0
        %2986 = vmatprep.subr.mxu0 0.0
        %2987 = vmatpush2.msra.mxu0 0.0
        %2988 = vmatprep.subr.mxu0 0.0
        %2989 = vmatpush2.msra.mxu0 0.0
        %2990 = vmatprep.subr.mxu0 0.0
        %2991 = vmatpush2.msra.mxu0 0.0
        %2992 = vmatprep.subr.mxu0 0.0
        %2993 = vmatpush2.msra.mxu0 0.0
        %2994 = vmatprep.subr.mxu0 0.0
        %2995 = vmatpush2.msra.mxu0 0.0
        %2996 = vmatprep.subr.mxu0 0.0
        %2997 = vmatpush2.msra.mxu0 0.0
        %2998 = vmatprep.subr.mxu0 0.0
        %2999 = vmatpush2.msra.mxu0 0.0
        %3000 = vmatprep.subr.mxu0 0.0
        %3001 = vmatpush2.msra.mxu0 0.0
        %3002 = vmatprep.subr.mxu0 0.0
        %3003 = vmatpush2.msra.mxu0 0.0
        %3004 = vmatprep.subr.mxu0 0.0
        %3005 = vmatpush2.msra.mxu0 0.0
        %3006 = vmatprep.subr.mxu0 0.0
        %3007 = vmatpush2.msra.mxu0 0.0
        %3008 = vmatprep.subr.mxu0 0.0
        %3009 = vmatpush2.msra.mxu0 0.0
        %3010 = vmatprep.subr.mxu0 0.0
        %3011 = vmatpush2.msra.mxu0 0.0
        %3012 = vmatprep.mubr.f32.mxu0 0.0
        %3013 = vmatmul.mubr.f32.gmra.mxu0 %v2869
        %v3014 = vpop.f32.mrf.mxu0
        %v3015 = vadd.f32 0.0, %v3014
        %v3016 = vpop.f32.mrf.mxu0
        %3017 = vdwg.mxu0
        %v3018 = vld [vmem:[#allocation2] sm:$0xff]
        %v3019 = vld [vmem:[#allocation2 + $0x8] sm:$0xf]
        %v3022 = vcombine.low %v2944, %v2946
        %v3024 = vadd.f32 %v3018, %v3022
        %v3025 = vadd.f32 %v3019, %v3015
        %3026 = vst [vmem:[#allocation2] sm:$0xff] %v3024
        %3027 = vst.msk [vmem:[#allocation2 + $0x8] sm:$0xf] %vm522, %v3025
        %v3028 = vld [vmem:[#allocation3] sm:$0xff]
        %v3029 = vld [vmem:[#allocation3 + $0x8] sm:$0xf]
        %s3030 = scalar_lea.vmem %s4, 24
        %v3031 = vld [vmem:[%s3030] sm:$0xf]
        %v3034 = vcombine.high %v3028, %v3028
        %3035 = vrot.lane.b32.xlu0 %v3028, 92
        %v3036 = vpop.permute.xlu0 %3035
        %3037 = vrot.lane.b32.xlu0 %v3034, 92
        %v3038 = vpop.permute.xlu0 %3037
        %3039 = vrot.lane.b32.xlu0 %v3029, 92
        %v3040 = vpop.permute.xlu0 %3039
        %v3041 = vsel %vm1417, %v3036, %v3038
        %v3042 = vsel %vm1417, %v3038, %v3040
        %v3044 = vsel %vm365, %v3031, 0
        %v3046 = vsel %vm369, %v3041, 0
        %v3048 = vsel %vm369, %v3042, 0
        %v3050 = vsel %vm369, %v3040, 0
        %3052 = vmatprep.subr.mxu0 0.0
        %3053 = vmatpush1.msra.mxu0 0.0
        %3054 = vmatprep.subr.mxu0 0.0
        %3055 = vmatpush1.msra.mxu0 0.0
        %3056 = vmatprep.subr.mxu0 0.0
        %3057 = vmatpush1.msra.mxu0 0.0
        %3058 = vmatprep.subr.mxu0 0.0
        %3059 = vmatpush1.msra.mxu0 0.0
        %3060 = vmatprep.subr.mxu0 0.0
        %3061 = vmatpush1.msra.mxu0 0.0
        %3062 = vmatprep.subr.mxu0 0.0
        %3063 = vmatpush1.msra.mxu0 0.0
        %3064 = vmatprep.subr.mxu0 0.0
        %3065 = vmatpush1.msra.mxu0 0.0
        %3066 = vmatprep.subr.mxu0 0.0
        %3067 = vmatpush1.msra.mxu0 0.0
        %3068 = vmatprep.subr.mxu0 0.0
        %3069 = vmatpush1.msra.mxu0 0.0
        %3070 = vmatprep.subr.mxu0 0.0
        %3071 = vmatpush1.msra.mxu0 0.0
        %3072 = vmatprep.subr.mxu0 0.0
        %3073 = vmatpush1.msra.mxu0 0.0
        %3074 = vmatprep.subr.mxu0 0.0
        %3075 = vmatpush1.msra.mxu0 0.0
        %3076 = vmatprep.subr.mxu0 0.0
        %3077 = vmatpush1.msra.mxu0 0.0
        %3078 = vmatprep.subr.mxu0 0.0
        %3079 = vmatpush1.msra.mxu0 0.0
        %3080 = vmatprep.subr.mxu0 0.0
        %3081 = vmatpush1.msra.mxu0 0.0
        %3082 = vmatprep.subr.mxu0 %v3048
        %3083 = vmatpush1.msra.mxu0 %v3046
        %3084 = vmatprep.subr.mxu0 0.0
        %3085 = vmatpush2.msra.mxu0 0.0
        %3086 = vmatprep.subr.mxu0 0.0
        %3087 = vmatpush2.msra.mxu0 0.0
        %3088 = vmatprep.subr.mxu0 0.0
        %3089 = vmatpush2.msra.mxu0 0.0
        %3090 = vmatprep.subr.mxu0 0.0
        %3091 = vmatpush2.msra.mxu0 0.0
        %3092 = vmatprep.subr.mxu0 0.0
        %3093 = vmatpush2.msra.mxu0 0.0
        %3094 = vmatprep.subr.mxu0 0.0
        %3095 = vmatpush2.msra.mxu0 0.0
        %3096 = vmatprep.subr.mxu0 0.0
        %3097 = vmatpush2.msra.mxu0 0.0
        %3098 = vmatprep.subr.mxu0 0.0
        %3099 = vmatpush2.msra.mxu0 0.0
        %3100 = vmatprep.subr.mxu0 0.0
        %3101 = vmatpush2.msra.mxu0 0.0
        %3102 = vmatprep.subr.mxu0 0.0
        %3103 = vmatpush2.msra.mxu0 0.0
        %3104 = vmatprep.subr.mxu0 0.0
        %3105 = vmatpush2.msra.mxu0 0.0
        %3106 = vmatprep.subr.mxu0 0.0
        %3107 = vmatpush2.msra.mxu0 0.0
        %3108 = vmatprep.subr.mxu0 0.0
        %3109 = vmatpush2.msra.mxu0 0.0
        %3110 = vmatprep.subr.mxu0 0.0
        %3111 = vmatpush2.msra.mxu0 0.0
        %3112 = vmatprep.subr.mxu0 0.0
        %3113 = vmatpush2.msra.mxu0 0.0
        %3114 = vmatprep.subr.mxu0 0.0
        %3115 = vmatpush2.msra.mxu0 0.0
        %3116 = vmatprep.mubr.f32.mxu0 0.0
        %3117 = vmatmul.mubr.f32.gmra.mxu0 %v3044
        %v3118 = vpop.f32.mrf.mxu0
        %v3119 = vadd.f32 0.0, %v3118
        %v3120 = vpop.f32.mrf.mxu0
        %v3121 = vadd.f32 0.0, %v3120
        %3122 = vdwg.mxu0
        %3123 = vmatprep.subr.mxu0 0.0
        %3124 = vmatpush1.msra.mxu0 0.0
        %3125 = vmatprep.subr.mxu0 0.0
        %3126 = vmatpush1.msra.mxu0 0.0
        %3127 = vmatprep.subr.mxu0 0.0
        %3128 = vmatpush1.msra.mxu0 0.0
        %3129 = vmatprep.subr.mxu0 0.0
        %3130 = vmatpush1.msra.mxu0 0.0
        %3131 = vmatprep.subr.mxu0 0.0
        %3132 = vmatpush1.msra.mxu0 0.0
        %3133 = vmatprep.subr.mxu0 0.0
        %3134 = vmatpush1.msra.mxu0 0.0
        %3135 = vmatprep.subr.mxu0 0.0
        %3136 = vmatpush1.msra.mxu0 0.0
        %3137 = vmatprep.subr.mxu0 0.0
        %3138 = vmatpush1.msra.mxu0 0.0
        %3139 = vmatprep.subr.mxu0 0.0
        %3140 = vmatpush1.msra.mxu0 0.0
        %3141 = vmatprep.subr.mxu0 0.0
        %3142 = vmatpush1.msra.mxu0 0.0
        %3143 = vmatprep.subr.mxu0 0.0
        %3144 = vmatpush1.msra.mxu0 0.0
        %3145 = vmatprep.subr.mxu0 0.0
        %3146 = vmatpush1.msra.mxu0 0.0
        %3147 = vmatprep.subr.mxu0 0.0
        %3148 = vmatpush1.msra.mxu0 0.0
        %3149 = vmatprep.subr.mxu0 0.0
        %3150 = vmatpush1.msra.mxu0 0.0
        %3151 = vmatprep.subr.mxu0 0.0
        %3152 = vmatpush1.msra.mxu0 0.0
        %3153 = vmatprep.subr.mxu0 0.0
        %3154 = vmatpush1.msra.mxu0 %v3050
        %3155 = vmatprep.subr.mxu0 0.0
        %3156 = vmatpush2.msra.mxu0 0.0
        %3157 = vmatprep.subr.mxu0 0.0
        %3158 = vmatpush2.msra.mxu0 0.0
        %3159 = vmatprep.subr.mxu0 0.0
        %3160 = vmatpush2.msra.mxu0 0.0
        %3161 = vmatprep.subr.mxu0 0.0
        %3162 = vmatpush2.msra.mxu0 0.0
        %3163 = vmatprep.subr.mxu0 0.0
        %3164 = vmatpush2.msra.mxu0 0.0
        %3165 = vmatprep.subr.mxu0 0.0
        %3166 = vmatpush2.msra.mxu0 0.0
        %3167 = vmatprep.subr.mxu0 0.0
        %3168 = vmatpush2.msra.mxu0 0.0
        %3169 = vmatprep.subr.mxu0 0.0
        %3170 = vmatpush2.msra.mxu0 0.0
        %3171 = vmatprep.subr.mxu0 0.0
        %3172 = vmatpush2.msra.mxu0 0.0
        %3173 = vmatprep.subr.mxu0 0.0
        %3174 = vmatpush2.msra.mxu0 0.0
        %3175 = vmatprep.subr.mxu0 0.0
        %3176 = vmatpush2.msra.mxu0 0.0
        %3177 = vmatprep.subr.mxu0 0.0
        %3178 = vmatpush2.msra.mxu0 0.0
        %3179 = vmatprep.subr.mxu0 0.0
        %3180 = vmatpush2.msra.mxu0 0.0
        %3181 = vmatprep.subr.mxu0 0.0
        %3182 = vmatpush2.msra.mxu0 0.0
        %3183 = vmatprep.subr.mxu0 0.0
        %3184 = vmatpush2.msra.mxu0 0.0
        %3185 = vmatprep.subr.mxu0 0.0
        %3186 = vmatpush2.msra.mxu0 0.0
        %3187 = vmatprep.mubr.f32.mxu0 0.0
        %3188 = vmatmul.mubr.f32.gmra.mxu0 %v3044
        %v3189 = vpop.f32.mrf.mxu0
        %v3190 = vadd.f32 0.0, %v3189
        %v3191 = vpop.f32.mrf.mxu0
        %3192 = vdwg.mxu0
        %v3193 = vld [vmem:[#allocation2] sm:$0xff]
        %v3194 = vld [vmem:[#allocation2 + $0x8] sm:$0xf]
        %v3197 = vcombine.low %v3119, %v3121
        %v3199 = vadd.f32 %v3193, %v3197
        %v3200 = vadd.f32 %v3194, %v3190
        %3201 = vst [vmem:[#allocation2] sm:$0xff] %v3199
        %3202 = vst.msk [vmem:[#allocation2 + $0x8] sm:$0xf] %vm522, %v3200
        %v3203 = vld [vmem:[#allocation3] sm:$0xff]
        %v3204 = vld [vmem:[#allocation3 + $0x8] sm:$0xf]
        %s3205 = scalar_lea.vmem %s4, 28
        %v3206 = vld [vmem:[%s3205] sm:$0xf]
        %v3209 = vcombine.high %v3203, %v3203
        %3210 = vrot.lane.b32.xlu0 %v3203, 91
        %v3211 = vpop.permute.xlu0 %3210
        %3212 = vrot.lane.b32.xlu0 %v3209, 91
        %v3213 = vpop.permute.xlu0 %3212
        %3214 = vrot.lane.b32.xlu0 %v3204, 91
        %v3215 = vpop.permute.xlu0 %3214
        %v3216 = vsel %vm1593, %v3211, %v3213
        %v3217 = vsel %vm1593, %v3213, %v3215
        %v3219 = vsel %vm365, %v3206, 0
        %v3221 = vsel %vm369, %v3216, 0
        %v3223 = vsel %vm369, %v3217, 0
        %v3225 = vsel %vm369, %v3215, 0
        %3227 = vmatprep.subr.mxu0 0.0
        %3228 = vmatpush1.msra.mxu0 0.0
        %3229 = vmatprep.subr.mxu0 0.0
        %3230 = vmatpush1.msra.mxu0 0.0
        %3231 = vmatprep.subr.mxu0 0.0
        %3232 = vmatpush1.msra.mxu0 0.0
        %3233 = vmatprep.subr.mxu0 0.0
        %3234 = vmatpush1.msra.mxu0 0.0
        %3235 = vmatprep.subr.mxu0 0.0
        %3236 = vmatpush1.msra.mxu0 0.0
        %3237 = vmatprep.subr.mxu0 0.0
        %3238 = vmatpush1.msra.mxu0 0.0
        %3239 = vmatprep.subr.mxu0 0.0
        %3240 = vmatpush1.msra.mxu0 0.0
        %3241 = vmatprep.subr.mxu0 0.0
        %3242 = vmatpush1.msra.mxu0 0.0
        %3243 = vmatprep.subr.mxu0 0.0
        %3244 = vmatpush1.msra.mxu0 0.0
        %3245 = vmatprep.subr.mxu0 0.0
        %3246 = vmatpush1.msra.mxu0 0.0
        %3247 = vmatprep.subr.mxu0 0.0
        %3248 = vmatpush1.msra.mxu0 0.0
        %3249 = vmatprep.subr.mxu0 0.0
        %3250 = vmatpush1.msra.mxu0 0.0
        %3251 = vmatprep.subr.mxu0 0.0
        %3252 = vmatpush1.msra.mxu0 0.0
        %3253 = vmatprep.subr.mxu0 0.0
        %3254 = vmatpush1.msra.mxu0 0.0
        %3255 = vmatprep.subr.mxu0 0.0
        %3256 = vmatpush1.msra.mxu0 0.0
        %3257 = vmatprep.subr.mxu0 %v3223
        %3258 = vmatpush1.msra.mxu0 %v3221
        %3259 = vmatprep.subr.mxu0 0.0
        %3260 = vmatpush2.msra.mxu0 0.0
        %3261 = vmatprep.subr.mxu0 0.0
        %3262 = vmatpush2.msra.mxu0 0.0
        %3263 = vmatprep.subr.mxu0 0.0
        %3264 = vmatpush2.msra.mxu0 0.0
        %3265 = vmatprep.subr.mxu0 0.0
        %3266 = vmatpush2.msra.mxu0 0.0
        %3267 = vmatprep.subr.mxu0 0.0
        %3268 = vmatpush2.msra.mxu0 0.0
        %3269 = vmatprep.subr.mxu0 0.0
        %3270 = vmatpush2.msra.mxu0 0.0
        %3271 = vmatprep.subr.mxu0 0.0
        %3272 = vmatpush2.msra.mxu0 0.0
        %3273 = vmatprep.subr.mxu0 0.0
        %3274 = vmatpush2.msra.mxu0 0.0
        %3275 = vmatprep.subr.mxu0 0.0
        %3276 = vmatpush2.msra.mxu0 0.0
        %3277 = vmatprep.subr.mxu0 0.0
        %3278 = vmatpush2.msra.mxu0 0.0
        %3279 = vmatprep.subr.mxu0 0.0
        %3280 = vmatpush2.msra.mxu0 0.0
        %3281 = vmatprep.subr.mxu0 0.0
        %3282 = vmatpush2.msra.mxu0 0.0
        %3283 = vmatprep.subr.mxu0 0.0
        %3284 = vmatpush2.msra.mxu0 0.0
        %3285 = vmatprep.subr.mxu0 0.0
        %3286 = vmatpush2.msra.mxu0 0.0
        %3287 = vmatprep.subr.mxu0 0.0
        %3288 = vmatpush2.msra.mxu0 0.0
        %3289 = vmatprep.subr.mxu0 0.0
        %3290 = vmatpush2.msra.mxu0 0.0
        %3291 = vmatprep.mubr.f32.mxu0 0.0
        %3292 = vmatmul.mubr.f32.gmra.mxu0 %v3219
        %v3293 = vpop.f32.mrf.mxu0
        %v3294 = vadd.f32 0.0, %v3293
        %v3295 = vpop.f32.mrf.mxu0
        %v3296 = vadd.f32 0.0, %v3295
        %3297 = vdwg.mxu0
        %3298 = vmatprep.subr.mxu0 0.0
        %3299 = vmatpush1.msra.mxu0 0.0
        %3300 = vmatprep.subr.mxu0 0.0
        %3301 = vmatpush1.msra.mxu0 0.0
        %3302 = vmatprep.subr.mxu0 0.0
        %3303 = vmatpush1.msra.mxu0 0.0
        %3304 = vmatprep.subr.mxu0 0.0
        %3305 = vmatpush1.msra.mxu0 0.0
        %3306 = vmatprep.subr.mxu0 0.0
        %3307 = vmatpush1.msra.mxu0 0.0
        %3308 = vmatprep.subr.mxu0 0.0
        %3309 = vmatpush1.msra.mxu0 0.0
        %3310 = vmatprep.subr.mxu0 0.0
        %3311 = vmatpush1.msra.mxu0 0.0
        %3312 = vmatprep.subr.mxu0 0.0
        %3313 = vmatpush1.msra.mxu0 0.0
        %3314 = vmatprep.subr.mxu0 0.0
        %3315 = vmatpush1.msra.mxu0 0.0
        %3316 = vmatprep.subr.mxu0 0.0
        %3317 = vmatpush1.msra.mxu0 0.0
        %3318 = vmatprep.subr.mxu0 0.0
        %3319 = vmatpush1.msra.mxu0 0.0
        %3320 = vmatprep.subr.mxu0 0.0
        %3321 = vmatpush1.msra.mxu0 0.0
        %3322 = vmatprep.subr.mxu0 0.0
        %3323 = vmatpush1.msra.mxu0 0.0
        %3324 = vmatprep.subr.mxu0 0.0
        %3325 = vmatpush1.msra.mxu0 0.0
        %3326 = vmatprep.subr.mxu0 0.0
        %3327 = vmatpush1.msra.mxu0 0.0
        %3328 = vmatprep.subr.mxu0 0.0
        %3329 = vmatpush1.msra.mxu0 %v3225
        %3330 = vmatprep.subr.mxu0 0.0
        %3331 = vmatpush2.msra.mxu0 0.0
        %3332 = vmatprep.subr.mxu0 0.0
        %3333 = vmatpush2.msra.mxu0 0.0
        %3334 = vmatprep.subr.mxu0 0.0
        %3335 = vmatpush2.msra.mxu0 0.0
        %3336 = vmatprep.subr.mxu0 0.0
        %3337 = vmatpush2.msra.mxu0 0.0
        %3338 = vmatprep.subr.mxu0 0.0
        %3339 = vmatpush2.msra.mxu0 0.0
        %3340 = vmatprep.subr.mxu0 0.0
        %3341 = vmatpush2.msra.mxu0 0.0
        %3342 = vmatprep.subr.mxu0 0.0
        %3343 = vmatpush2.msra.mxu0 0.0
        %3344 = vmatprep.subr.mxu0 0.0
        %3345 = vmatpush2.msra.mxu0 0.0
        %3346 = vmatprep.subr.mxu0 0.0
        %3347 = vmatpush2.msra.mxu0 0.0
        %3348 = vmatprep.subr.mxu0 0.0
        %3349 = vmatpush2.msra.mxu0 0.0
        %3350 = vmatprep.subr.mxu0 0.0
        %3351 = vmatpush2.msra.mxu0 0.0
        %3352 = vmatprep.subr.mxu0 0.0
        %3353 = vmatpush2.msra.mxu0 0.0
        %3354 = vmatprep.subr.mxu0 0.0
        %3355 = vmatpush2.msra.mxu0 0.0
        %3356 = vmatprep.subr.mxu0 0.0
        %3357 = vmatpush2.msra.mxu0 0.0
        %3358 = vmatprep.subr.mxu0 0.0
        %3359 = vmatpush2.msra.mxu0 0.0
        %3360 = vmatprep.subr.mxu0 0.0
        %3361 = vmatpush2.msra.mxu0 0.0
        %3362 = vmatprep.mubr.f32.mxu0 0.0
        %3363 = vmatmul.mubr.f32.gmra.mxu0 %v3219
        %v3364 = vpop.f32.mrf.mxu0
        %v3365 = vadd.f32 0.0, %v3364
        %v3366 = vpop.f32.mrf.mxu0
        %3367 = vdwg.mxu0
        %v3368 = vld [vmem:[#allocation2] sm:$0xff]
        %v3369 = vld [vmem:[#allocation2 + $0x8] sm:$0xf]
        %v3372 = vcombine.low %v3294, %v3296
        %v3374 = vadd.f32 %v3368, %v3372
        %v3375 = vadd.f32 %v3369, %v3365
        %3376 = vst [vmem:[#allocation2] sm:$0xff] %v3374
        %3377 = vst.msk [vmem:[#allocation2 + $0x8] sm:$0xf] %vm522, %v3375
        %v3378 = vld [vmem:[#allocation3] sm:$0xff]
        %v3379 = vld [vmem:[#allocation3 + $0x8] sm:$0xf]
        %s3380 = scalar_lea.vmem %s4, 32
        %v3381 = vld [vmem:[%s3380] sm:$0xf]
        %v3384 = vcombine.high %v3378, %v3378
        %3385 = vrot.lane.b32.xlu0 %v3378, 90
        %v3386 = vpop.permute.xlu0 %3385
        %3387 = vrot.lane.b32.xlu0 %v3384, 90
        %v3388 = vpop.permute.xlu0 %3387
        %3389 = vrot.lane.b32.xlu0 %v3379, 90
        %v3390 = vpop.permute.xlu0 %3389
        %v3391 = vsel %vm1769, %v3386, %v3388
        %v3392 = vsel %vm1769, %v3388, %v3390
        %v3394 = vsel %vm365, %v3381, 0
        %v3396 = vsel %vm369, %v3391, 0
        %v3398 = vsel %vm369, %v3392, 0
        %v3400 = vsel %vm369, %v3390, 0
        %3402 = vmatprep.subr.mxu0 0.0
        %3403 = vmatpush1.msra.mxu0 0.0
        %3404 = vmatprep.subr.mxu0 0.0
        %3405 = vmatpush1.msra.mxu0 0.0
        %3406 = vmatprep.subr.mxu0 0.0
        %3407 = vmatpush1.msra.mxu0 0.0
        %3408 = vmatprep.subr.mxu0 0.0
        %3409 = vmatpush1.msra.mxu0 0.0
        %3410 = vmatprep.subr.mxu0 0.0
        %3411 = vmatpush1.msra.mxu0 0.0
        %3412 = vmatprep.subr.mxu0 0.0
        %3413 = vmatpush1.msra.mxu0 0.0
        %3414 = vmatprep.subr.mxu0 0.0
        %3415 = vmatpush1.msra.mxu0 0.0
        %3416 = vmatprep.subr.mxu0 0.0
        %3417 = vmatpush1.msra.mxu0 0.0
        %3418 = vmatprep.subr.mxu0 0.0
        %3419 = vmatpush1.msra.mxu0 0.0
        %3420 = vmatprep.subr.mxu0 0.0
        %3421 = vmatpush1.msra.mxu0 0.0
        %3422 = vmatprep.subr.mxu0 0.0
        %3423 = vmatpush1.msra.mxu0 0.0
        %3424 = vmatprep.subr.mxu0 0.0
        %3425 = vmatpush1.msra.mxu0 0.0
        %3426 = vmatprep.subr.mxu0 0.0
        %3427 = vmatpush1.msra.mxu0 0.0
        %3428 = vmatprep.subr.mxu0 0.0
        %3429 = vmatpush1.msra.mxu0 0.0
        %3430 = vmatprep.subr.mxu0 0.0
        %3431 = vmatpush1.msra.mxu0 0.0
        %3432 = vmatprep.subr.mxu0 %v3398
        %3433 = vmatpush1.msra.mxu0 %v3396
        %3434 = vmatprep.subr.mxu0 0.0
        %3435 = vmatpush2.msra.mxu0 0.0
        %3436 = vmatprep.subr.mxu0 0.0
        %3437 = vmatpush2.msra.mxu0 0.0
        %3438 = vmatprep.subr.mxu0 0.0
        %3439 = vmatpush2.msra.mxu0 0.0
        %3440 = vmatprep.subr.mxu0 0.0
        %3441 = vmatpush2.msra.mxu0 0.0
        %3442 = vmatprep.subr.mxu0 0.0
        %3443 = vmatpush2.msra.mxu0 0.0
        %3444 = vmatprep.subr.mxu0 0.0
        %3445 = vmatpush2.msra.mxu0 0.0
        %3446 = vmatprep.subr.mxu0 0.0
        %3447 = vmatpush2.msra.mxu0 0.0
        %3448 = vmatprep.subr.mxu0 0.0
        %3449 = vmatpush2.msra.mxu0 0.0
        %3450 = vmatprep.subr.mxu0 0.0
        %3451 = vmatpush2.msra.mxu0 0.0
        %3452 = vmatprep.subr.mxu0 0.0
        %3453 = vmatpush2.msra.mxu0 0.0
        %3454 = vmatprep.subr.mxu0 0.0
        %3455 = vmatpush2.msra.mxu0 0.0
        %3456 = vmatprep.subr.mxu0 0.0
        %3457 = vmatpush2.msra.mxu0 0.0
        %3458 = vmatprep.subr.mxu0 0.0
        %3459 = vmatpush2.msra.mxu0 0.0
        %3460 = vmatprep.subr.mxu0 0.0
        %3461 = vmatpush2.msra.mxu0 0.0
        %3462 = vmatprep.subr.mxu0 0.0
        %3463 = vmatpush2.msra.mxu0 0.0
        %3464 = vmatprep.subr.mxu0 0.0
        %3465 = vmatpush2.msra.mxu0 0.0
        %3466 = vmatprep.mubr.f32.mxu0 0.0
        %3467 = vmatmul.mubr.f32.gmra.mxu0 %v3394
        %v3468 = vpop.f32.mrf.mxu0
        %v3469 = vadd.f32 0.0, %v3468
        %v3470 = vpop.f32.mrf.mxu0
        %v3471 = vadd.f32 0.0, %v3470
        %3472 = vdwg.mxu0
        %3473 = vmatprep.subr.mxu0 0.0
        %3474 = vmatpush1.msra.mxu0 0.0
        %3475 = vmatprep.subr.mxu0 0.0
        %3476 = vmatpush1.msra.mxu0 0.0
        %3477 = vmatprep.subr.mxu0 0.0
        %3478 = vmatpush1.msra.mxu0 0.0
        %3479 = vmatprep.subr.mxu0 0.0
        %3480 = vmatpush1.msra.mxu0 0.0
        %3481 = vmatprep.subr.mxu0 0.0
        %3482 = vmatpush1.msra.mxu0 0.0
        %3483 = vmatprep.subr.mxu0 0.0
        %3484 = vmatpush1.msra.mxu0 0.0
        %3485 = vmatprep.subr.mxu0 0.0
        %3486 = vmatpush1.msra.mxu0 0.0
        %3487 = vmatprep.subr.mxu0 0.0
        %3488 = vmatpush1.msra.mxu0 0.0
        %3489 = vmatprep.subr.mxu0 0.0
        %3490 = vmatpush1.msra.mxu0 0.0
        %3491 = vmatprep.subr.mxu0 0.0
        %3492 = vmatpush1.msra.mxu0 0.0
        %3493 = vmatprep.subr.mxu0 0.0
        %3494 = vmatpush1.msra.mxu0 0.0
        %3495 = vmatprep.subr.mxu0 0.0
        %3496 = vmatpush1.msra.mxu0 0.0
        %3497 = vmatprep.subr.mxu0 0.0
        %3498 = vmatpush1.msra.mxu0 0.0
        %3499 = vmatprep.subr.mxu0 0.0
        %3500 = vmatpush1.msra.mxu0 0.0
        %3501 = vmatprep.subr.mxu0 0.0
        %3502 = vmatpush1.msra.mxu0 0.0
        %3503 = vmatprep.subr.mxu0 0.0
        %3504 = vmatpush1.msra.mxu0 %v3400
        %3505 = vmatprep.subr.mxu0 0.0
        %3506 = vmatpush2.msra.mxu0 0.0
        %3507 = vmatprep.subr.mxu0 0.0
        %3508 = vmatpush2.msra.mxu0 0.0
        %3509 = vmatprep.subr.mxu0 0.0
        %3510 = vmatpush2.msra.mxu0 0.0
        %3511 = vmatprep.subr.mxu0 0.0
        %3512 = vmatpush2.msra.mxu0 0.0
        %3513 = vmatprep.subr.mxu0 0.0
        %3514 = vmatpush2.msra.mxu0 0.0
        %3515 = vmatprep.subr.mxu0 0.0
        %3516 = vmatpush2.msra.mxu0 0.0
        %3517 = vmatprep.subr.mxu0 0.0
        %3518 = vmatpush2.msra.mxu0 0.0
        %3519 = vmatprep.subr.mxu0 0.0
        %3520 = vmatpush2.msra.mxu0 0.0
        %3521 = vmatprep.subr.mxu0 0.0
        %3522 = vmatpush2.msra.mxu0 0.0
        %3523 = vmatprep.subr.mxu0 0.0
        %3524 = vmatpush2.msra.mxu0 0.0
        %3525 = vmatprep.subr.mxu0 0.0
        %3526 = vmatpush2.msra.mxu0 0.0
        %3527 = vmatprep.subr.mxu0 0.0
        %3528 = vmatpush2.msra.mxu0 0.0
        %3529 = vmatprep.subr.mxu0 0.0
        %3530 = vmatpush2.msra.mxu0 0.0
        %3531 = vmatprep.subr.mxu0 0.0
        %3532 = vmatpush2.msra.mxu0 0.0
        %3533 = vmatprep.subr.mxu0 0.0
        %3534 = vmatpush2.msra.mxu0 0.0
        %3535 = vmatprep.subr.mxu0 0.0
        %3536 = vmatpush2.msra.mxu0 0.0
        %3537 = vmatprep.mubr.f32.mxu0 0.0
        %3538 = vmatmul.mubr.f32.gmra.mxu0 %v3394
        %v3539 = vpop.f32.mrf.mxu0
        %v3540 = vadd.f32 0.0, %v3539
        %v3541 = vpop.f32.mrf.mxu0
        %3542 = vdwg.mxu0
        %v3543 = vld [vmem:[#allocation2] sm:$0xff]
        %v3544 = vld [vmem:[#allocation2 + $0x8] sm:$0xf]
        %v3547 = vcombine.low %v3469, %v3471
        %v3549 = vadd.f32 %v3543, %v3547
        %v3550 = vadd.f32 %v3544, %v3540
        %3551 = vst [vmem:[#allocation2] sm:$0xff] %v3549
        %3552 = vst.msk [vmem:[#allocation2 + $0x8] sm:$0xf] %vm522, %v3550
        %v3553 = vld [vmem:[#allocation2] sm:$0xff]
        %v3554 = vld [vmem:[#allocation2 + $0x8] sm:$0xf]
        %v3555 = vld [vmem:[%s5] sm:$0xf]
        %3557 = vset.pattern.permute.xlu0 0
        %3558 = vperm.xlu0 %3557, %v3555
        %v3559 = vpop.permute.xlu0 %3558
        %v3561 = vunpack.c.l.s4 839922192
        %v3562 = vunpack.c.0.s8 %v3561
        %v3563 = vlaneseq
        %v3564 = vshrl.u32 %v3563, 7
        %v3565 = vsub.s32 %v3562, %v3564
        %v3566 = vrot.slane %v3559, %v3565
        %v3568 = vadd.f32 %v3553, %v3566
        %v3569 = vadd.f32 %v3554, %v3566
        %v3570 = vmul.f32 %v3568, %v1969
        %v3571 = vmul.f32 %v3569, %v1967
        %v3573 = vcombine.high %v3570, %v3570
        %v3575 = vsel %vm369, %v3570, 0.0
        %v3576 = vsel %vm369, %v3573, 0.0
        %v3577 = vadd.f32 %v3575, %v3576
        %v3578 = vsel %vm522, %v3571, 0.0
        %v3579 = vadd.f32 %v3577, %v3578
        %3580 = vadd.xlane.f32.xlu0 %v3579
        %v3581 = vpop.xlane.xlu0 %3580
        %v3582 = vrcp.pop 256.0
        %v3583 = vmul.f32 %v3581, %v3582
        %v3584 = vld [vmem:[%s6] sm:$0x3]
        %v3585 = vld [vmem:[%s7] sm:$0x3]
        %v3587 = vsel %vm365, %v3584, 0
        %v3590 = vsel %vm369, %v3583, 0
        %3592 = vmatprep.subr.mxu0 0.0
        %3593 = vmatpush1.msra.mxu0 0.0
        %3594 = vmatprep.subr.mxu0 0.0
        %3595 = vmatpush1.msra.mxu0 0.0
        %3596 = vmatprep.subr.mxu0 0.0
        %3597 = vmatpush1.msra.mxu0 0.0
        %3598 = vmatprep.subr.mxu0 0.0
        %3599 = vmatpush1.msra.mxu0 0.0
        %3600 = vmatprep.subr.mxu0 0.0
        %3601 = vmatpush1.msra.mxu0 0.0
        %3602 = vmatprep.subr.mxu0 0.0
        %3603 = vmatpush1.msra.mxu0 0.0
        %3604 = vmatprep.subr.mxu0 0.0
        %3605 = vmatpush1.msra.mxu0 0.0
        %3606 = vmatprep.subr.mxu0 0.0
        %3607 = vmatpush1.msra.mxu0 0.0
        %3608 = vmatprep.subr.mxu0 0.0
        %3609 = vmatpush1.msra.mxu0 0.0
        %3610 = vmatprep.subr.mxu0 0.0
        %3611 = vmatpush1.msra.mxu0 0.0
        %3612 = vmatprep.subr.mxu0 0.0
        %3613 = vmatpush1.msra.mxu0 0.0
        %3614 = vmatprep.subr.mxu0 0.0
        %3615 = vmatpush1.msra.mxu0 0.0
        %3616 = vmatprep.subr.mxu0 0.0
        %3617 = vmatpush1.msra.mxu0 0.0
        %3618 = vmatprep.subr.mxu0 0.0
        %3619 = vmatpush1.msra.mxu0 0.0
        %3620 = vmatprep.subr.mxu0 0.0
        %3621 = vmatpush1.msra.mxu0 0.0
        %3622 = vmatprep.subr.mxu0 0.0
        %3623 = vmatpush1.msra.mxu0 %v3590
        %3624 = vmatprep.subr.mxu0 0.0
        %3625 = vmatpush2.msra.mxu0 0.0
        %3626 = vmatprep.subr.mxu0 0.0
        %3627 = vmatpush2.msra.mxu0 0.0
        %3628 = vmatprep.subr.mxu0 0.0
        %3629 = vmatpush2.msra.mxu0 0.0
        %3630 = vmatprep.subr.mxu0 0.0
        %3631 = vmatpush2.msra.mxu0 0.0
        %3632 = vmatprep.subr.mxu0 0.0
        %3633 = vmatpush2.msra.mxu0 0.0
        %3634 = vmatprep.subr.mxu0 0.0
        %3635 = vmatpush2.msra.mxu0 0.0
        %3636 = vmatprep.subr.mxu0 0.0
        %3637 = vmatpush2.msra.mxu0 0.0
        %3638 = vmatprep.subr.mxu0 0.0
        %3639 = vmatpush2.msra.mxu0 0.0
        %3640 = vmatprep.subr.mxu0 0.0
        %3641 = vmatpush2.msra.mxu0 0.0
        %3642 = vmatprep.subr.mxu0 0.0
        %3643 = vmatpush2.msra.mxu0 0.0
        %3644 = vmatprep.subr.mxu0 0.0
        %3645 = vmatpush2.msra.mxu0 0.0
        %3646 = vmatprep.subr.mxu0 0.0
        %3647 = vmatpush2.msra.mxu0 0.0
        %3648 = vmatprep.subr.mxu0 0.0
        %3649 = vmatpush2.msra.mxu0 0.0
        %3650 = vmatprep.subr.mxu0 0.0
        %3651 = vmatpush2.msra.mxu0 0.0
        %3652 = vmatprep.subr.mxu0 0.0
        %3653 = vmatpush2.msra.mxu0 0.0
        %3654 = vmatprep.subr.mxu0 0.0
        %3655 = vmatpush2.msra.mxu0 0.0
        %3656 = vmatprep.mubr.f32.mxu0 0.0
        %3657 = vmatmul.mubr.f32.gmra.mxu0 %v3587
        %v3658 = vpop.f32.mrf.mxu0
        %v3659 = vadd.f32 %v3585, %v3658
        %v3660 = vpop.f32.mrf.mxu0
        %3661 = vdwg.mxu0
        %v3662 = vmax.f32 %v3659, 0.0
        %v3663 = vld [vmem:[%s8] sm:$0xf]
        %v3664 = vld [vmem:[%s9] sm:$0xf]
        %vm3665 = vcmask 15360
        %v3667 = vsel %vm3665, %v3663, 0
        %vm3669 = vcmask 1041408
        %v3671 = vsel %vm3669, %v3662, 0
        %3673 = vmatprep.subr.mxu0 0.0
        %3674 = vmatpush1.msra.mxu0 0.0
        %3675 = vmatprep.subr.mxu0 0.0
        %3676 = vmatpush1.msra.mxu0 0.0
        %3677 = vmatprep.subr.mxu0 0.0
        %3678 = vmatpush1.msra.mxu0 0.0
        %3679 = vmatprep.subr.mxu0 0.0
        %3680 = vmatpush1.msra.mxu0 0.0
        %3681 = vmatprep.subr.mxu0 0.0
        %3682 = vmatpush1.msra.mxu0 0.0
        %3683 = vmatprep.subr.mxu0 0.0
        %3684 = vmatpush1.msra.mxu0 0.0
        %3685 = vmatprep.subr.mxu0 0.0
        %3686 = vmatpush1.msra.mxu0 0.0
        %3687 = vmatprep.subr.mxu0 0.0
        %3688 = vmatpush1.msra.mxu0 0.0
        %3689 = vmatprep.subr.mxu0 0.0
        %3690 = vmatpush1.msra.mxu0 0.0
        %3691 = vmatprep.subr.mxu0 0.0
        %3692 = vmatpush1.msra.mxu0 0.0
        %3693 = vmatprep.subr.mxu0 0.0
        %3694 = vmatpush1.msra.mxu0 0.0
        %3695 = vmatprep.subr.mxu0 0.0
        %3696 = vmatpush1.msra.mxu0 0.0
        %3697 = vmatprep.subr.mxu0 0.0
        %3698 = vmatpush1.msra.mxu0 0.0
        %3699 = vmatprep.subr.mxu0 0.0
        %3700 = vmatpush1.msra.mxu0 0.0
        %3701 = vmatprep.subr.mxu0 0.0
        %3702 = vmatpush1.msra.mxu0 0.0
        %3703 = vmatprep.subr.mxu0 0.0
        %3704 = vmatpush1.msra.mxu0 %v3671
        %3705 = vmatprep.subr.mxu0 0.0
        %3706 = vmatpush2.msra.mxu0 0.0
        %3707 = vmatprep.subr.mxu0 0.0
        %3708 = vmatpush2.msra.mxu0 0.0
        %3709 = vmatprep.subr.mxu0 0.0
        %3710 = vmatpush2.msra.mxu0 0.0
        %3711 = vmatprep.subr.mxu0 0.0
        %3712 = vmatpush2.msra.mxu0 0.0
        %3713 = vmatprep.subr.mxu0 0.0
        %3714 = vmatpush2.msra.mxu0 0.0
        %3715 = vmatprep.subr.mxu0 0.0
        %3716 = vmatpush2.msra.mxu0 0.0
        %3717 = vmatprep.subr.mxu0 0.0
        %3718 = vmatpush2.msra.mxu0 0.0
        %3719 = vmatprep.subr.mxu0 0.0
        %3720 = vmatpush2.msra.mxu0 0.0
        %3721 = vmatprep.subr.mxu0 0.0
        %3722 = vmatpush2.msra.mxu0 0.0
        %3723 = vmatprep.subr.mxu0 0.0
        %3724 = vmatpush2.msra.mxu0 0.0
        %3725 = vmatprep.subr.mxu0 0.0
        %3726 = vmatpush2.msra.mxu0 0.0
        %3727 = vmatprep.subr.mxu0 0.0
        %3728 = vmatpush2.msra.mxu0 0.0
        %3729 = vmatprep.subr.mxu0 0.0
        %3730 = vmatpush2.msra.mxu0 0.0
        %3731 = vmatprep.subr.mxu0 0.0
        %3732 = vmatpush2.msra.mxu0 0.0
        %3733 = vmatprep.subr.mxu0 0.0
        %3734 = vmatpush2.msra.mxu0 0.0
        %3735 = vmatprep.subr.mxu0 0.0
        %3736 = vmatpush2.msra.mxu0 0.0
        %3737 = vmatprep.mubr.f32.mxu0 0.0
        %3738 = vmatmul.mubr.f32.gmra.mxu0 %v3667
        %v3739 = vpop.f32.mrf.mxu0
        %v3740 = vadd.f32 %v3664, %v3739
        %v3741 = vpop.f32.mrf.mxu0
        %3742 = vdwg.mxu0
        %v3743 = vxor.u32 %v3740, 2147483648
        %v3744 = vmul.f32 %v3743, 1.442695
        %v3745 = vpow.pop %v3744
        %v3746 = vadd.f32 %v3745, 1.0
        %v3747 = vrcp.pop %v3746
        %v3748 = vmul.f32 1.0, %v3747
        %v3749 = vld [vmem:[%s357] sm:$0xff]
        %v3750 = vld [vmem:[%s357 + $0x8] sm:$0xf]
        %3752 = vset.pattern.permute.xlu0 0
        %3753 = vperm.xlu0 %3752, %v3748
        %v3754 = vpop.permute.xlu0 %3753
        %v3756 = vunpack.c.l.s4 839922192
        %v3757 = vunpack.c.0.s8 %v3756
        %v3758 = vlaneseq
        %v3759 = vshrl.u32 %v3758, 7
        %v3760 = vsub.s32 %v3757, %v3759
        %v3761 = vrot.slane %v3754, %v3760
        %v3763 = vmul.f32 %v3568, %v3761
        %v3764 = vmul.f32 %v3569, %v3761
        %3767 = vrot.lane.b32.xlu0 %v3749, 109
        %v3768 = vpop.permute.xlu0 %3767
        %3769 = vrot.lane.b32.xlu0 %v3750, 109
        %v3770 = vpop.permute.xlu0 %3769
        %v3771 = vrot.slane %v3768, 4
        %v3772 = vrot.slane %v3770, 4
        %v3773 = vsel %vm369, %v3771, %v3772
        %v3774 = vsel %vm1065, %v3768, %v3773
        %v3777 = vadd.f32 %v3763, %v3774
        %v3778 = vadd.f32 %v3764, %v3770
        %3779 = vst [vmem:[%s352] sm:$0xff] %v3777
        %3780 = vst.msk [vmem:[%s352 + $0x8] sm:$0xf] %vm522, %v3778
        %s3781 = sand.u32 %s247, 1
        %s3782 = scalar_lea.sflag [#allocation5], %s3781
        %s3783 = sand.u32 %s247, 1
        %s3784 = smul.addr %s3783, 12
        %s3785 = scalar_lea.vmem [#allocation4], %s3784
        // Predicated region
        $region61: #{tpu_custom_call.1} parent=59 // pred_check
          %p3786 = pneg %p257
        $region62: #{tpu_custom_call.1} parent=59 // pred_check_branch
          %3788 = sbr.rel (%p3786) target = $region64
        $region63: #{tpu_custom_call.1} parent=59 // pred_region
          %s3790 = ssub.s32 192, 192
          %3791 = vsyncadd %s3782, %s3790
          %s3792 = smul.addr %s24, 3
          %s3793 = smul.addr %s3792, 64
          %s3794 = scalar_lea.hbm %s10, %s3793
          %s3796 = sshll.u32 %s3785, 4
          %s3797 = int_to_ptr.vmem [resolvable:$true] %s3796
          %3799 = dma.vmem_to_hbm [thread:$0]  %s3797, 192, %s3794, %s3782
        $region64: #{tpu_custom_call.1} parent=59 // pred_fallthru
          _
      $region60: #{tpu_custom_call.1} parent=5 // pred_fallthru
        _
      %p3800 = scmp.le.s32.totalorder 2, %s19
      // Predicated region
      $region65: #{tpu_custom_call.1} parent=5 // pred_check
        %p3801 = pneg %p3800
      $region66: #{tpu_custom_call.1} parent=5 // pred_check_branch
        %3803 = sbr.rel (%p3801) target = $region68
      $region67: #{tpu_custom_call.1} parent=5 // pred_region
        %s3804 = ssub.s32 %s19, 2
        // Predicated region
        $region69: #{tpu_custom_call.1} parent=67 // pred_check
          %p3805 = pneg %p263
        $region70: #{tpu_custom_call.1} parent=67 // pred_check_branch
          %3807 = sbr.rel (%p3805) target = $region72
        $region71: #{tpu_custom_call.1} parent=67 // pred_region
          %s3808 = sand.u32 %s248, 1
          %s3809 = scalar_lea.sflag [#allocation5], %s3808
          %s3810 = sand.u32 %s248, 1
          %s3811 = smul.addr %s3810, 12
          %s3812 = scalar_lea.vmem [#allocation4], %s3811
          %3813 = dma.done %s3809, 192
        $region72: #{tpu_custom_call.1} parent=67 // pred_fallthru
          _
      $region68: #{tpu_custom_call.1} parent=5 // pred_fallthru
        _
    $region6: #{tpu_custom_call.1} parent=1 // loop_footer
      %s23 = sadd.s32 1, %s19
    $region7: #{tpu_custom_call.1} parent=1 // loop_footer_branch
      %18 = sbr.rel target = $region3
    $region8: #{tpu_custom_call.1} parent=1 // loop_exit
      _
    %3814 = vsyncpa [#allocation5], 1
    %s3815 = scalar_lea.sflag [#allocation5], 1
    %3816 = vsyncpa %s3815, 1

</llo_original>
